<compile_context>
chip_gen: v6e
topology: v6e:2x2x1
jax: 0.10.0
libtpu: 0.0.40
codegen_flags: <defaults>
</compile_context>

<pallas_src>
import functools

import jax
import jax.numpy as jnp
import numpy as np
from jax.experimental import pallas as pl
from jax.experimental.pallas import tpu as pltpu

_TAIL = 128  # zero-lane tail so conv-tap / pool shifts never read out of range


# --------------------------------------------------------------------------
# Fused forward kernel
# Activation layout: (C, N) with N = batch_block * (H+2) * (W+2) + _TAIL;
# per-image padded block of (H+2)*(W+2) lanes, data at (y+1)*(W+2) + (x+1).
# --------------------------------------------------------------------------
def _fused_forward_kernel(x_ref, w1_ref, b1_ref, w2_ref, b2_ref, w3_ref, b3_ref,
                          w4_ref, b4_ref, wcls_ref, bcls_ref, m1_ref, m2_ref,
                          s1_ref, o_ref, *, Bc, Ch, H1, W1, H2, W2, O):
    Wp1 = W1 + 2
    Wp2 = W2 + 2
    P1 = (H1 + 2) * Wp1            # padded flat block per image, stage 1
    P2 = (H2 + 2) * Wp2            # padded flat block per image, stage 2
    M1 = Bc * P1
    M2 = Bc * P2
    N1 = M1 + _TAIL
    N2 = M2 + _TAIL

    def conv3x3_relu(acts, w_ref_, b_ref_, Wp, M):
        # acts: (Cin, N) zero-padded flat layout.  im2col: 9 shifted lane
        # slices stacked on sublanes -> one (Ch, 9*Cin) @ (9*Cin, M) matmul.
        taps = [acts[:, dy * Wp + dx: dy * Wp + dx + M]
                for dy in range(3) for dx in range(3)]
        col = jnp.concatenate(taps, axis=0)
        y = jnp.dot(w_ref_[...], col, preferred_element_type=jnp.float32)
        return jnp.maximum(y + b_ref_[...], 0.0)           # (Ch, M)

    def pool2x2_max(y, Wp, M):
        # v[:, n] = max of the 2x2 window anchored at flat position n.
        ye = jnp.concatenate([y, jnp.zeros((Ch, Wp + 2), jnp.float32)], axis=1)
        h = jnp.maximum(ye[:, 0:M + Wp], ye[:, 1:M + Wp + 1])
        return jnp.maximum(h[:, 0:M], h[:, Wp:M + Wp])      # (Ch, M)

    # ---------------- conv block 1 (stage 1: H1 x W1) ----------------
    a1 = conv3x3_relu(x_ref[...], w1_ref, b1_ref, Wp1, M1)
    # Re-pad for conv2: zero the garbage pad rows/cols (mask) and shift by
    # Wp1+1 so data lands at padded coordinates (y+1, x+1) of each block.
    a1p = jnp.concatenate(
        [jnp.zeros((Ch, Wp1 + 1), jnp.float32),
         a1 * m1_ref[...],
         jnp.zeros((Ch, N1 - M1 - (Wp1 + 1)), jnp.float32)], axis=1)
    a2 = conv3x3_relu(a1p, w2_ref, b2_ref, Wp1, M1)
    v1 = pool2x2_max(a2, Wp1, M1)
    # Stride-2 subsample + re-pad into the stage-2 layout: one constant 0/1
    # selection matmul per image (destination lane slices are P2-aligned).
    s1 = s1_ref[...]
    blocks = [jnp.dot(v1[:, b * P1:(b + 1) * P1], s1,
                      preferred_element_type=jnp.float32) for b in range(Bc)]
    a2p = jnp.concatenate(blocks + [jnp.zeros((Ch, _TAIL), jnp.float32)], axis=1)

    # ---------------- conv block 2 (stage 2: H2 x W2) ----------------
    a3 = conv3x3_relu(a2p, w3_ref, b3_ref, Wp2, M2)
    a3p = jnp.concatenate(
        [jnp.zeros((Ch, Wp2 + 1), jnp.float32),
         a3 * m2_ref[...],
         jnp.zeros((Ch, N2 - M2 - (Wp2 + 1)), jnp.float32)], axis=1)
    a4 = conv3x3_relu(a3p, w4_ref, b4_ref, Wp2, M2)
    v2 = pool2x2_max(a4, Wp2, M2)

    # ------------- classifier (Flatten + Linear), fused -------------
    # wcls_ref[c] is (P2, O) with the torch-Flatten (channel-major) weights
    # pre-scattered onto the pooled 2x2-window anchors of the flat layout.
    rows = []
    for b in range(Bc):
        acc = bcls_ref[...]                                 # (1, O)
        for c in range(Ch):
            acc = acc + jnp.dot(v2[c:c + 1, b * P2:(b + 1) * P2], wcls_ref[c],
                                preferred_element_type=jnp.float32)
        rows.append(acc)
    o_ref[...] = jnp.concatenate(rows, axis=0)              # (Bc, O)


# --------------------------------------------------------------------------
# Host-side, one-time weight packing (hoisted out of the forward path)
# --------------------------------------------------------------------------
def prepare_params(params, *, image_hw=(28, 28), batch_block=1):
    H1, W1 = image_hw
    assert H1 % 4 == 0 and W1 % 4 == 0, "two 2x2 max-pools need H,W % 4 == 0"
    H2, W2 = H1 // 2, W1 // 2
    Ho, Wo = H2 // 2, W2 // 2
    Wp1, Wp2 = W1 + 2, W2 + 2
    assert _TAIL >= 2 * Wp1 + 2
    P1, P2 = (H1 + 2) * Wp1, (H2 + 2) * Wp2
    Cin, Ch = params["w1_1"].shape[2], params["w1_1"].shape[3]
    O = params["w_fc"].shape[0]
    assert params["w_fc"].shape[1] == Ch * Ho * Wo

    def conv_mat(w):  # HWIO (3,3,Ci,Co) -> (Co, 9*Ci), row index = t*Ci + ci
        co = w.shape[3]
        return jnp.transpose(w, (3, 0, 1, 2)).reshape(co, -1).astype(jnp.float32)

    def col_bias(b):
        return b.reshape(-1, 1).astype(jnp.float32)

    def valid_mask(bc, P, Wp, Hv, Wv):  # zero the pad rows/cols of each block
        n = np.arange(bc * P)
        loc = n % P
        ok = ((loc // Wp) < Hv) & ((loc % Wp) < Wv)
        return jnp.asarray(ok.astype(np.float32)[None, :])

    # pool-1 selection: stage-1 anchor (2y',2x') -> padded stage-2 slot (y'+1,x'+1)
    s1 = np.zeros((P1, P2), np.float32)
    for yp in range(H2):
        for xp in range(W2):
            s1[2 * yp * Wp1 + 2 * xp, (yp + 1) * Wp2 + (xp + 1)] = 1.0

    # Classifier weight scattered onto the stage-2 pooled anchors, channel-major
    # (matches torch.nn.Flatten on NCHW: feature index = c*Ho*Wo + y'*Wo + x').
    dest = np.array([2 * yp * Wp2 + 2 * xp for yp in range(Ho) for xp in range(Wo)],
                    np.int32)
    wfc_t = jnp.transpose(params["w_fc"].reshape(O, Ch, Ho, Wo), (1, 2, 3, 0))
    wcls = jnp.zeros((Ch, P2, O), jnp.float32).at[:, dest, :].set(
        wfc_t.reshape(Ch, Ho * Wo, O).astype(jnp.float32))

    return {
        "dims": dict(H1=H1, W1=W1, H2=H2, W2=W2, Cin=int(Cin), Ch=int(Ch),
                     O=int(O), batch_block=int(batch_block)),
        "w1": conv_mat(params["w1_1"]), "b1": col_bias(params["b1_1"]),
        "w2": conv_mat(params["w1_2"]), "b2": col_bias(params["b1_2"]),
        "w3": conv_mat(params["w2_1"]), "b3": col_bias(params["b2_1"]),
        "w4": conv_mat(params["w2_2"]), "b4": col_bias(params["b2_2"]),
        "wcls": wcls,
        "bcls": params["b_fc"].reshape(1, O).astype(jnp.float32),
        "mask1": valid_mask(batch_block, P1, Wp1, H1, W1),
        "mask2": valid_mask(batch_block, P2, Wp2, H2, W2),
        "s1": jnp.asarray(s1),
    }


# --------------------------------------------------------------------------
# Forward pass: single fused pallas_call
# --------------------------------------------------------------------------
def fashion_mnist_model_v2(x_nchw, prepped):
    d = prepped["dims"]
    H1, W1, H2, W2 = d["H1"], d["W1"], d["H2"], d["W2"]
    Cin, Ch, O, Bc = d["Cin"], d["Ch"], d["O"], d["batch_block"]
    Wp1, Wp2 = W1 + 2, W2 + 2
    P1, P2 = (H1 + 2) * Wp1, (H2 + 2) * Wp2
    B = x_nchw.shape[0]
    nchunks = -(-B // Bc)
    Bpad = nchunks * Bc
    M1, N1 = Bc * P1, Bc * P1 + _TAIL
    M2 = Bc * P2

    # Pack the input once into the kernel's (chunk, Cin, padded-flat) layout.
    x = x_nchw.astype(jnp.float32)
    xp = jnp.pad(x, ((0, Bpad - B), (0, 0), (1, 1), (1, 1)))
    xp = xp.reshape(nchunks, Bc, Cin, H1 + 2, Wp1)
    xp = jnp.transpose(xp, (0, 2, 1, 3, 4)).reshape(nchunks, Cin, M1)
    x_flat = jnp.pad(xp, ((0, 0), (0, 0), (0, _TAIL)))

    kernel = functools.partial(_fused_forward_kernel, Bc=Bc, Ch=Ch,
                               H1=H1, W1=W1, H2=H2, W2=W2, O=O)
    rep2 = lambda i: (0, 0)
    rep3 = lambda i: (0, 0, 0)
    out = pl.pallas_call(
        kernel,
        out_shape=jax.ShapeDtypeStruct((nchunks, Bc, O), jnp.float32),
        grid=(nchunks,),
        in_specs=[
            pl.BlockSpec((None, Cin, N1), lambda i: (i, 0, 0)),
            pl.BlockSpec((Ch, 9 * Cin), rep2), pl.BlockSpec((Ch, 1), rep2),
            pl.BlockSpec((Ch, 9 * Ch), rep2), pl.BlockSpec((Ch, 1), rep2),
            pl.BlockSpec((Ch, 9 * Ch), rep2), pl.BlockSpec((Ch, 1), rep2),
            pl.BlockSpec((Ch, 9 * Ch), rep2), pl.BlockSpec((Ch, 1), rep2),
            pl.BlockSpec((Ch, P2, O), rep3),
            pl.BlockSpec((1, O), rep2),
            pl.BlockSpec((1, M1), rep2),
            pl.BlockSpec((1, M2), rep2),
            pl.BlockSpec((P1, P2), rep2),
        ],
        out_specs=pl.BlockSpec((None, Bc, O), lambda i: (i, 0, 0)),
        compiler_params=pltpu.CompilerParams(
            dimension_semantics=("parallel",)),
    )(x_flat, prepped["w1"], prepped["b1"], prepped["w2"], prepped["b2"],
      prepped["w3"], prepped["b3"], prepped["w4"], prepped["b4"],
      prepped["wcls"], prepped["bcls"], prepped["mask1"], prepped["mask2"],
      prepped["s1"])
    return out.reshape(Bpad, O)[:B]


# --------------------------------------------------------------------------
# Params / pure-JAX reference
# --------------------------------------------------------------------------
def init_params(key, in_ch, hidden, out_dim):
    ks = jax.random.split(key, 10)

    def conv_w(k, cin, cout):
        return jax.random.normal(k, (3, 3, cin, cout), jnp.float32) / jnp.sqrt(9.0 * cin)

    def vec(k, n, fan_in):
        return jax.random.normal(k, (n,), jnp.float32) / jnp.sqrt(float(fan_in))

    feat = hidden * 7 * 7
    return {
        "w1_1": conv_w(ks[0], in_ch, hidden),  "b1_1": vec(ks[1], hidden, 9 * in_ch),
        "w1_2": conv_w(ks[2], hidden, hidden), "b1_2": vec(ks[3], hidden, 9 * hidden),
        "w2_1": conv_w(ks[4], hidden, hidden), "b2_1": vec(ks[5], hidden, 9 * hidden),
        "w2_2": conv_w(ks[6], hidden, hidden), "b2_2": vec(ks[7], hidden, 9 * hidden),
        "w_fc": jax.random.normal(ks[8], (out_dim, feat), jnp.float32) / jnp.sqrt(float(feat)),
        "b_fc": vec(ks[9], out_dim, feat),
    }


def ref_forward(x_nchw, p):
    x = jnp.transpose(x_nchw, (0, 2, 3, 1)).astype(jnp.float32)

    def conv(x, w, b):
        y = jax.lax.conv_general_dilated(
            x, w, window_strides=(1, 1), padding="SAME",
            dimension_numbers=("NHWC", "HWIO", "NHWC"))
        return jax.nn.relu(y + b)

    def pool(x):
        B, H, W, C = x.shape
        return x.reshape(B, H // 2, 2, W // 2, 2, C).max(axis=(2, 4))

    x = conv(x, p["w1_1"], p["b1_1"]); x = conv(x, p["w1_2"], p["b1_2"]); x = pool(x)
    x = conv(x, p["w2_1"], p["b2_1"]); x = conv(x, p["w2_2"], p["b2_2"]); x = pool(x)
    B = x.shape[0]
    x = jnp.transpose(x, (0, 3, 1, 2)).reshape(B, -1)
    return x @ p["w_fc"].T + p["b_fc"]


if __name__ == "__main__":
    # Classifier hardcodes in_features = hidden_units * 49 => 28x28 input.
    B, IN_CH, H, W = 2, 1, 28, 28
    HIDDEN, OUT = 8, 10

    key = jax.random.PRNGKey(0)
    k_in, k_par = jax.random.split(key)
    x = jax.random.normal(k_in, (B, IN_CH, H, W), jnp.float32)
    params = init_params(k_par, IN_CH, HIDDEN, OUT)

    # >=2 grid steps when B>=2 (so both v7x TensorCores get work), capped to
    # keep the per-step im2col well under the default scoped-VMEM limit.
    bb = max(1, min(8, (B + 1) // 2))
    prepped = prepare_params(params, image_hw=(H, W), batch_block=bb)
    fwd = jax.jit(lambda inp: fashion_mnist_model_v2(inp, prepped))

    out = jax.block_until_ready(fwd(x))
    assert out.shape == (B, OUT), out.shape

    ref = ref_forward(x, params)
    err = float(jnp.max(jnp.abs(out - ref)))
    assert jnp.allclose(out, ref, atol=2e-3, rtol=2e-3), err

    print("KERNEL_OK")
</pallas_src>

<mosaic_0001>
module attributes {stable_mosaic.version = 11 : i64} {
  func.func @_fused_forward_kernel(%arg0: i32, %arg1: memref<1x1x1028xf32, #tpu.memory_space<vmem>>, %arg2: memref<8x9xf32, #tpu.memory_space<vmem>>, %arg3: memref<8x1xf32, #tpu.memory_space<vmem>>, %arg4: memref<8x72xf32, #tpu.memory_space<vmem>>, %arg5: memref<8x1xf32, #tpu.memory_space<vmem>>, %arg6: memref<8x72xf32, #tpu.memory_space<vmem>>, %arg7: memref<8x1xf32, #tpu.memory_space<vmem>>, %arg8: memref<8x72xf32, #tpu.memory_space<vmem>>, %arg9: memref<8x1xf32, #tpu.memory_space<vmem>>, %arg10: memref<8x256x10xf32, #tpu.memory_space<vmem>>, %arg11: memref<1x10xf32, #tpu.memory_space<vmem>>, %arg12: memref<1x900xf32, #tpu.memory_space<vmem>>, %arg13: memref<1x256xf32, #tpu.memory_space<vmem>>, %arg14: memref<900x256xf32, #tpu.memory_space<vmem>>, %arg15: memref<1x1x10xf32, #tpu.memory_space<vmem>>) attributes {dimension_semantics = [#tpu.dimension_semantics<parallel>], iteration_bounds = array<i64: 2>, scalar_prefetch = 0 : i64, scratch_operands = 0 : i64, tpu.core_type = #tpu.core_type<tc>, window_params = [{transform_indices = @transform_0, window_bounds = array<i64: 1, 1, 1028>}, {pipeline_mode = #tpu.pipeline_mode<synchronous>, transform_indices = @transform_1, window_bounds = array<i64: 8, 9>}, {pipeline_mode = #tpu.pipeline_mode<synchronous>, transform_indices = @transform_2, window_bounds = array<i64: 8, 1>}, {pipeline_mode = #tpu.pipeline_mode<synchronous>, transform_indices = @transform_3, window_bounds = array<i64: 8, 72>}, {pipeline_mode = #tpu.pipeline_mode<synchronous>, transform_indices = @transform_4, window_bounds = array<i64: 8, 1>}, {pipeline_mode = #tpu.pipeline_mode<synchronous>, transform_indices = @transform_5, window_bounds = array<i64: 8, 72>}, {pipeline_mode = #tpu.pipeline_mode<synchronous>, transform_indices = @transform_6, window_bounds = array<i64: 8, 1>}, {pipeline_mode = #tpu.pipeline_mode<synchronous>, transform_indices = @transform_7, window_bounds = array<i64: 8, 72>}, {pipeline_mode = #tpu.pipeline_mode<synchronous>, transform_indices = @transform_8, window_bounds = array<i64: 8, 1>}, {pipeline_mode = #tpu.pipeline_mode<synchronous>, transform_indices = @transform_9, window_bounds = array<i64: 8, 256, 10>}, {pipeline_mode = #tpu.pipeline_mode<synchronous>, transform_indices = @transform_10, window_bounds = array<i64: 1, 10>}, {pipeline_mode = #tpu.pipeline_mode<synchronous>, transform_indices = @transform_11, window_bounds = array<i64: 1, 900>}, {pipeline_mode = #tpu.pipeline_mode<synchronous>, transform_indices = @transform_12, window_bounds = array<i64: 1, 256>}, {pipeline_mode = #tpu.pipeline_mode<synchronous>, transform_indices = @transform_13, window_bounds = array<i64: 900, 256>}, {transform_indices = @transform_14, window_bounds = array<i64: 1, 1, 10>}]} {
    %c0 = arith.constant 0 : index
    %c0_0 = arith.constant 0 : index
    %c0_1 = arith.constant 0 : index
    %0 = vector.load %arg1[%c0, %c0_0, %c0_1] : memref<1x1x1028xf32, #tpu.memory_space<vmem>>, vector<1x1x1028xf32>
    %1 = vector.shape_cast %0 : vector<1x1x1028xf32> to vector<1x1028xf32>
    %2 = vector.extract_strided_slice %1 {offsets = [0, 0], sizes = [1, 900], strides = [1, 1]} : vector<1x1028xf32> to vector<1x900xf32>
    %3 = vector.extract_strided_slice %1 {offsets = [0, 1], sizes = [1, 900], strides = [1, 1]} : vector<1x1028xf32> to vector<1x900xf32>
    %4 = vector.extract_strided_slice %1 {offsets = [0, 2], sizes = [1, 900], strides = [1, 1]} : vector<1x1028xf32> to vector<1x900xf32>
    %5 = vector.extract_strided_slice %1 {offsets = [0, 30], sizes = [1, 900], strides = [1, 1]} : vector<1x1028xf32> to vector<1x900xf32>
    %6 = vector.extract_strided_slice %1 {offsets = [0, 31], sizes = [1, 900], strides = [1, 1]} : vector<1x1028xf32> to vector<1x900xf32>
    %7 = vector.extract_strided_slice %1 {offsets = [0, 32], sizes = [1, 900], strides = [1, 1]} : vector<1x1028xf32> to vector<1x900xf32>
    %8 = vector.extract_strided_slice %1 {offsets = [0, 60], sizes = [1, 900], strides = [1, 1]} : vector<1x1028xf32> to vector<1x900xf32>
    %9 = vector.extract_strided_slice %1 {offsets = [0, 61], sizes = [1, 900], strides = [1, 1]} : vector<1x1028xf32> to vector<1x900xf32>
    %10 = vector.extract_strided_slice %1 {offsets = [0, 62], sizes = [1, 900], strides = [1, 1]} : vector<1x1028xf32> to vector<1x900xf32>
    %11 = tpu.concatenate %2, %3, %4, %5, %6, %7, %8, %9, %10 in 0 : vector<1x900xf32>, vector<1x900xf32>, vector<1x900xf32>, vector<1x900xf32>, vector<1x900xf32>, vector<1x900xf32>, vector<1x900xf32>, vector<1x900xf32>, vector<1x900xf32> -> vector<9x900xf32>
    %c0_2 = arith.constant 0 : index
    %c0_3 = arith.constant 0 : index
    %12 = vector.load %arg2[%c0_2, %c0_3] : memref<8x9xf32, #tpu.memory_space<vmem>>, vector<8x9xf32>
    %cst = arith.constant dense<0.000000e+00> : vector<8x900xf32>
    %13 = tpu.matmul %12, %11, %cst {dimension_numbers = #tpu.dot_dimension_numbers<[1], [0], [0], [1], [0, 0, 1, 1], [], []>} : vector<8x9xf32>, vector<9x900xf32>, vector<8x900xf32> -> vector<8x900xf32>
    %c0_4 = arith.constant 0 : index
    %c0_5 = arith.constant 0 : index
    %14 = vector.load %arg3[%c0_4, %c0_5] : memref<8x1xf32, #tpu.memory_space<vmem>>, vector<8x1xf32>
    %15 = vector.broadcast %14 : vector<8x1xf32> to vector<8x900xf32>
    %16 = arith.addf %13, %15 : vector<8x900xf32>
    %cst_6 = arith.constant 0.000000e+00 : f32
    %17 = vector.broadcast %cst_6 : f32 to vector<8x900xf32>
    %18 = arith.maximumf %16, %17 : vector<8x900xf32>
    %cst_7 = arith.constant 0.000000e+00 : f32
    %19 = vector.broadcast %cst_7 : f32 to vector<8x31xf32>
    %c0_8 = arith.constant 0 : index
    %c0_9 = arith.constant 0 : index
    %20 = vector.load %arg12[%c0_8, %c0_9] : memref<1x900xf32, #tpu.memory_space<vmem>>, vector<1x900xf32>
    %21 = vector.broadcast %20 : vector<1x900xf32> to vector<8x900xf32>
    %22 = arith.mulf %18, %21 : vector<8x900xf32>
    %cst_10 = arith.constant 0.000000e+00 : f32
    %23 = vector.broadcast %cst_10 : f32 to vector<8x97xf32>
    %24 = tpu.concatenate %19, %22, %23 in 1 : vector<8x31xf32>, vector<8x900xf32>, vector<8x97xf32> -> vector<8x1028xf32>
    %25 = vector.extract_strided_slice %24 {offsets = [0, 0], sizes = [8, 900], strides = [1, 1]} : vector<8x1028xf32> to vector<8x900xf32>
    %26 = vector.extract_strided_slice %24 {offsets = [0, 1], sizes = [8, 900], strides = [1, 1]} : vector<8x1028xf32> to vector<8x900xf32>
    %27 = vector.extract_strided_slice %24 {offsets = [0, 2], sizes = [8, 900], strides = [1, 1]} : vector<8x1028xf32> to vector<8x900xf32>
    %28 = vector.extract_strided_slice %24 {offsets = [0, 30], sizes = [8, 900], strides = [1, 1]} : vector<8x1028xf32> to vector<8x900xf32>
    %29 = vector.extract_strided_slice %24 {offsets = [0, 31], sizes = [8, 900], strides = [1, 1]} : vector<8x1028xf32> to vector<8x900xf32>
    %30 = vector.extract_strided_slice %24 {offsets = [0, 32], sizes = [8, 900], strides = [1, 1]} : vector<8x1028xf32> to vector<8x900xf32>
    %31 = vector.extract_strided_slice %24 {offsets = [0, 60], sizes = [8, 900], strides = [1, 1]} : vector<8x1028xf32> to vector<8x900xf32>
    %32 = vector.extract_strided_slice %24 {offsets = [0, 61], sizes = [8, 900], strides = [1, 1]} : vector<8x1028xf32> to vector<8x900xf32>
    %33 = vector.extract_strided_slice %24 {offsets = [0, 62], sizes = [8, 900], strides = [1, 1]} : vector<8x1028xf32> to vector<8x900xf32>
    %34 = tpu.concatenate %25, %26, %27, %28, %29, %30, %31, %32, %33 in 0 : vector<8x900xf32>, vector<8x900xf32>, vector<8x900xf32>, vector<8x900xf32>, vector<8x900xf32>, vector<8x900xf32>, vector<8x900xf32>, vector<8x900xf32>, vector<8x900xf32> -> vector<72x900xf32>
    %c0_11 = arith.constant 0 : index
    %c0_12 = arith.constant 0 : index
    %35 = vector.load %arg4[%c0_11, %c0_12] : memref<8x72xf32, #tpu.memory_space<vmem>>, vector<8x72xf32>
    %cst_13 = arith.constant dense<0.000000e+00> : vector<8x900xf32>
    %36 = tpu.matmul %35, %34, %cst_13 {dimension_numbers = #tpu.dot_dimension_numbers<[1], [0], [0], [1], [0, 0, 1, 1], [], []>} : vector<8x72xf32>, vector<72x900xf32>, vector<8x900xf32> -> vector<8x900xf32>
    %c0_14 = arith.constant 0 : index
    %c0_15 = arith.constant 0 : index
    %37 = vector.load %arg5[%c0_14, %c0_15] : memref<8x1xf32, #tpu.memory_space<vmem>>, vector<8x1xf32>
    %38 = vector.broadcast %37 : vector<8x1xf32> to vector<8x900xf32>
    %39 = arith.addf %36, %38 : vector<8x900xf32>
    %cst_16 = arith.constant 0.000000e+00 : f32
    %40 = vector.broadcast %cst_16 : f32 to vector<8x900xf32>
    %41 = arith.maximumf %39, %40 : vector<8x900xf32>
    %cst_17 = arith.constant 0.000000e+00 : f32
    %42 = vector.broadcast %cst_17 : f32 to vector<8x32xf32>
    %43 = tpu.concatenate %41, %42 in 1 : vector<8x900xf32>, vector<8x32xf32> -> vector<8x932xf32>
    %44 = vector.extract_strided_slice %43 {offsets = [0, 0], sizes = [8, 930], strides = [1, 1]} : vector<8x932xf32> to vector<8x930xf32>
    %45 = vector.extract_strided_slice %43 {offsets = [0, 1], sizes = [8, 930], strides = [1, 1]} : vector<8x932xf32> to vector<8x930xf32>
    %46 = arith.maximumf %44, %45 : vector<8x930xf32>
    %47 = vector.extract_strided_slice %46 {offsets = [0, 0], sizes = [8, 900], strides = [1, 1]} : vector<8x930xf32> to vector<8x900xf32>
    %48 = vector.extract_strided_slice %46 {offsets = [0, 30], sizes = [8, 900], strides = [1, 1]} : vector<8x930xf32> to vector<8x900xf32>
    %49 = arith.maximumf %47, %48 : vector<8x900xf32>
    %c0_18 = arith.constant 0 : index
    %c0_19 = arith.constant 0 : index
    %50 = vector.load %arg14[%c0_18, %c0_19] : memref<900x256xf32, #tpu.memory_space<vmem>>, vector<900x256xf32>
    %cst_20 = arith.constant dense<0.000000e+00> : vector<8x256xf32>
    %51 = tpu.matmul %49, %50, %cst_20 {dimension_numbers = #tpu.dot_dimension_numbers<[1], [0], [0], [1], [0, 0, 1, 1], [], []>} : vector<8x900xf32>, vector<900x256xf32>, vector<8x256xf32> -> vector<8x256xf32>
    %cst_21 = arith.constant 0.000000e+00 : f32
    %52 = vector.broadcast %cst_21 : f32 to vector<8x128xf32>
    %53 = tpu.concatenate %51, %52 in 1 : vector<8x256xf32>, vector<8x128xf32> -> vector<8x384xf32>
    %54 = vector.extract_strided_slice %53 {offsets = [0, 0], sizes = [8, 256], strides = [1, 1]} : vector<8x384xf32> to vector<8x256xf32>
    %55 = vector.extract_strided_slice %53 {offsets = [0, 1], sizes = [8, 256], strides = [1, 1]} : vector<8x384xf32> to vector<8x256xf32>
    %56 = vector.extract_strided_slice %53 {offsets = [0, 2], sizes = [8, 256], strides = [1, 1]} : vector<8x384xf32> to vector<8x256xf32>
    %57 = vector.extract_strided_slice %53 {offsets = [0, 16], sizes = [8, 256], strides = [1, 1]} : vector<8x384xf32> to vector<8x256xf32>
    %58 = vector.extract_strided_slice %53 {offsets = [0, 17], sizes = [8, 256], strides = [1, 1]} : vector<8x384xf32> to vector<8x256xf32>
    %59 = vector.extract_strided_slice %53 {offsets = [0, 18], sizes = [8, 256], strides = [1, 1]} : vector<8x384xf32> to vector<8x256xf32>
    %60 = vector.extract_strided_slice %53 {offsets = [0, 32], sizes = [8, 256], strides = [1, 1]} : vector<8x384xf32> to vector<8x256xf32>
    %61 = vector.extract_strided_slice %53 {offsets = [0, 33], sizes = [8, 256], strides = [1, 1]} : vector<8x384xf32> to vector<8x256xf32>
    %62 = vector.extract_strided_slice %53 {offsets = [0, 34], sizes = [8, 256], strides = [1, 1]} : vector<8x384xf32> to vector<8x256xf32>
    %63 = tpu.concatenate %54, %55, %56, %57, %58, %59, %60, %61, %62 in 0 : vector<8x256xf32>, vector<8x256xf32>, vector<8x256xf32>, vector<8x256xf32>, vector<8x256xf32>, vector<8x256xf32>, vector<8x256xf32>, vector<8x256xf32>, vector<8x256xf32> -> vector<72x256xf32>
    %c0_22 = arith.constant 0 : index
    %c0_23 = arith.constant 0 : index
    %64 = vector.load %arg6[%c0_22, %c0_23] : memref<8x72xf32, #tpu.memory_space<vmem>>, vector<8x72xf32>
    %cst_24 = arith.constant dense<0.000000e+00> : vector<8x256xf32>
    %65 = tpu.matmul %64, %63, %cst_24 {dimension_numbers = #tpu.dot_dimension_numbers<[1], [0], [0], [1], [0, 0, 1, 1], [], []>} : vector<8x72xf32>, vector<72x256xf32>, vector<8x256xf32> -> vector<8x256xf32>
    %c0_25 = arith.constant 0 : index
    %c0_26 = arith.constant 0 : index
    %66 = vector.load %arg7[%c0_25, %c0_26] : memref<8x1xf32, #tpu.memory_space<vmem>>, vector<8x1xf32>
    %67 = vector.broadcast %66 : vector<8x1xf32> to vector<8x256xf32>
    %68 = arith.addf %65, %67 : vector<8x256xf32>
    %cst_27 = arith.constant 0.000000e+00 : f32
    %69 = vector.broadcast %cst_27 : f32 to vector<8x256xf32>
    %70 = arith.maximumf %68, %69 : vector<8x256xf32>
    %cst_28 = arith.constant 0.000000e+00 : f32
    %71 = vector.broadcast %cst_28 : f32 to vector<8x17xf32>
    %c0_29 = arith.constant 0 : index
    %c0_30 = arith.constant 0 : index
    %72 = vector.load %arg13[%c0_29, %c0_30] : memref<1x256xf32, #tpu.memory_space<vmem>>, vector<1x256xf32>
    %73 = vector.broadcast %72 : vector<1x256xf32> to vector<8x256xf32>
    %74 = arith.mulf %70, %73 : vector<8x256xf32>
    %cst_31 = arith.constant 0.000000e+00 : f32
    %75 = vector.broadcast %cst_31 : f32 to vector<8x111xf32>
    %76 = tpu.concatenate %71, %74, %75 in 1 : vector<8x17xf32>, vector<8x256xf32>, vector<8x111xf32> -> vector<8x384xf32>
    %77 = vector.extract_strided_slice %76 {offsets = [0, 0], sizes = [8, 256], strides = [1, 1]} : vector<8x384xf32> to vector<8x256xf32>
    %78 = vector.extract_strided_slice %76 {offsets = [0, 1], sizes = [8, 256], strides = [1, 1]} : vector<8x384xf32> to vector<8x256xf32>
    %79 = vector.extract_strided_slice %76 {offsets = [0, 2], sizes = [8, 256], strides = [1, 1]} : vector<8x384xf32> to vector<8x256xf32>
    %80 = vector.extract_strided_slice %76 {offsets = [0, 16], sizes = [8, 256], strides = [1, 1]} : vector<8x384xf32> to vector<8x256xf32>
    %81 = vector.extract_strided_slice %76 {offsets = [0, 17], sizes = [8, 256], strides = [1, 1]} : vector<8x384xf32> to vector<8x256xf32>
    %82 = vector.extract_strided_slice %76 {offsets = [0, 18], sizes = [8, 256], strides = [1, 1]} : vector<8x384xf32> to vector<8x256xf32>
    %83 = vector.extract_strided_slice %76 {offsets = [0, 32], sizes = [8, 256], strides = [1, 1]} : vector<8x384xf32> to vector<8x256xf32>
    %84 = vector.extract_strided_slice %76 {offsets = [0, 33], sizes = [8, 256], strides = [1, 1]} : vector<8x384xf32> to vector<8x256xf32>
    %85 = vector.extract_strided_slice %76 {offsets = [0, 34], sizes = [8, 256], strides = [1, 1]} : vector<8x384xf32> to vector<8x256xf32>
    %86 = tpu.concatenate %77, %78, %79, %80, %81, %82, %83, %84, %85 in 0 : vector<8x256xf32>, vector<8x256xf32>, vector<8x256xf32>, vector<8x256xf32>, vector<8x256xf32>, vector<8x256xf32>, vector<8x256xf32>, vector<8x256xf32>, vector<8x256xf32> -> vector<72x256xf32>
    %c0_32 = arith.constant 0 : index
    %c0_33 = arith.constant 0 : index
    %87 = vector.load %arg8[%c0_32, %c0_33] : memref<8x72xf32, #tpu.memory_space<vmem>>, vector<8x72xf32>
    %cst_34 = arith.constant dense<0.000000e+00> : vector<8x256xf32>
    %88 = tpu.matmul %87, %86, %cst_34 {dimension_numbers = #tpu.dot_dimension_numbers<[1], [0], [0], [1], [0, 0, 1, 1], [], []>} : vector<8x72xf32>, vector<72x256xf32>, vector<8x256xf32> -> vector<8x256xf32>
    %c0_35 = arith.constant 0 : index
    %c0_36 = arith.constant 0 : index
    %89 = vector.load %arg9[%c0_35, %c0_36] : memref<8x1xf32, #tpu.memory_space<vmem>>, vector<8x1xf32>
    %90 = vector.broadcast %89 : vector<8x1xf32> to vector<8x256xf32>
    %91 = arith.addf %88, %90 : vector<8x256xf32>
    %cst_37 = arith.constant 0.000000e+00 : f32
    %92 = vector.broadcast %cst_37 : f32 to vector<8x256xf32>
    %93 = arith.maximumf %91, %92 : vector<8x256xf32>
    %cst_38 = arith.constant 0.000000e+00 : f32
    %94 = vector.broadcast %cst_38 : f32 to vector<8x18xf32>
    %95 = tpu.concatenate %93, %94 in 1 : vector<8x256xf32>, vector<8x18xf32> -> vector<8x274xf32>
    %96 = vector.extract_strided_slice %95 {offsets = [0, 0], sizes = [8, 272], strides = [1, 1]} : vector<8x274xf32> to vector<8x272xf32>
    %97 = vector.extract_strided_slice %95 {offsets = [0, 1], sizes = [8, 272], strides = [1, 1]} : vector<8x274xf32> to vector<8x272xf32>
    %98 = arith.maximumf %96, %97 : vector<8x272xf32>
    %99 = vector.extract_strided_slice %98 {offsets = [0, 0], sizes = [8, 256], strides = [1, 1]} : vector<8x272xf32> to vector<8x256xf32>
    %100 = vector.extract_strided_slice %98 {offsets = [0, 16], sizes = [8, 256], strides = [1, 1]} : vector<8x272xf32> to vector<8x256xf32>
    %101 = arith.maximumf %99, %100 : vector<8x256xf32>
    %c0_39 = arith.constant 0 : index
    %c0_40 = arith.constant 0 : index
    %102 = vector.load %arg11[%c0_39, %c0_40] : memref<1x10xf32, #tpu.memory_space<vmem>>, vector<1x10xf32>
    %103 = vector.extract_strided_slice %101 {offsets = [0, 0], sizes = [1, 256], strides = [1, 1]} : vector<8x256xf32> to vector<1x256xf32>
    %c0_41 = arith.constant 0 : index
    %c0_42 = arith.constant 0 : index
    %c0_43 = arith.constant 0 : index
    %104 = vector.load %arg10[%c0_41, %c0_42, %c0_43] : memref<8x256x10xf32, #tpu.memory_space<vmem>>, vector<1x256x10xf32>
    %105 = vector.shape_cast %104 : vector<1x256x10xf32> to vector<256x10xf32>
    %cst_44 = arith.constant dense<0.000000e+00> : vector<1x10xf32>
    %106 = tpu.matmul %103, %105, %cst_44 {dimension_numbers = #tpu.dot_dimension_numbers<[1], [0], [0], [1], [0, 0, 1, 1], [], []>} : vector<1x256xf32>, vector<256x10xf32>, vector<1x10xf32> -> vector<1x10xf32>
    %107 = arith.addf %102, %106 : vector<1x10xf32>
    %108 = vector.extract_strided_slice %101 {offsets = [1, 0], sizes = [1, 256], strides = [1, 1]} : vector<8x256xf32> to vector<1x256xf32>
    %c1 = arith.constant 1 : index
    %c0_45 = arith.constant 0 : index
    %c0_46 = arith.constant 0 : index
    %109 = vector.load %arg10[%c1, %c0_45, %c0_46] : memref<8x256x10xf32, #tpu.memory_space<vmem>>, vector<1x256x10xf32>
    %110 = vector.shape_cast %109 : vector<1x256x10xf32> to vector<256x10xf32>
    %cst_47 = arith.constant dense<0.000000e+00> : vector<1x10xf32>
    %111 = tpu.matmul %108, %110, %cst_47 {dimension_numbers = #tpu.dot_dimension_numbers<[1], [0], [0], [1], [0, 0, 1, 1], [], []>} : vector<1x256xf32>, vector<256x10xf32>, vector<1x10xf32> -> vector<1x10xf32>
    %112 = arith.addf %107, %111 : vector<1x10xf32>
    %113 = vector.extract_strided_slice %101 {offsets = [2, 0], sizes = [1, 256], strides = [1, 1]} : vector<8x256xf32> to vector<1x256xf32>
    %c2 = arith.constant 2 : index
    %c0_48 = arith.constant 0 : index
    %c0_49 = arith.constant 0 : index
    %114 = vector.load %arg10[%c2, %c0_48, %c0_49] : memref<8x256x10xf32, #tpu.memory_space<vmem>>, vector<1x256x10xf32>
    %115 = vector.shape_cast %114 : vector<1x256x10xf32> to vector<256x10xf32>
    %cst_50 = arith.constant dense<0.000000e+00> : vector<1x10xf32>
    %116 = tpu.matmul %113, %115, %cst_50 {dimension_numbers = #tpu.dot_dimension_numbers<[1], [0], [0], [1], [0, 0, 1, 1], [], []>} : vector<1x256xf32>, vector<256x10xf32>, vector<1x10xf32> -> vector<1x10xf32>
    %117 = arith.addf %112, %116 : vector<1x10xf32>
    %118 = vector.extract_strided_slice %101 {offsets = [3, 0], sizes = [1, 256], strides = [1, 1]} : vector<8x256xf32> to vector<1x256xf32>
    %c3 = arith.constant 3 : index
    %c0_51 = arith.constant 0 : index
    %c0_52 = arith.constant 0 : index
    %119 = vector.load %arg10[%c3, %c0_51, %c0_52] : memref<8x256x10xf32, #tpu.memory_space<vmem>>, vector<1x256x10xf32>
    %120 = vector.shape_cast %119 : vector<1x256x10xf32> to vector<256x10xf32>
    %cst_53 = arith.constant dense<0.000000e+00> : vector<1x10xf32>
    %121 = tpu.matmul %118, %120, %cst_53 {dimension_numbers = #tpu.dot_dimension_numbers<[1], [0], [0], [1], [0, 0, 1, 1], [], []>} : vector<1x256xf32>, vector<256x10xf32>, vector<1x10xf32> -> vector<1x10xf32>
    %122 = arith.addf %117, %121 : vector<1x10xf32>
    %123 = vector.extract_strided_slice %101 {offsets = [4, 0], sizes = [1, 256], strides = [1, 1]} : vector<8x256xf32> to vector<1x256xf32>
    %c4 = arith.constant 4 : index
    %c0_54 = arith.constant 0 : index
    %c0_55 = arith.constant 0 : index
    %124 = vector.load %arg10[%c4, %c0_54, %c0_55] : memref<8x256x10xf32, #tpu.memory_space<vmem>>, vector<1x256x10xf32>
    %125 = vector.shape_cast %124 : vector<1x256x10xf32> to vector<256x10xf32>
    %cst_56 = arith.constant dense<0.000000e+00> : vector<1x10xf32>
    %126 = tpu.matmul %123, %125, %cst_56 {dimension_numbers = #tpu.dot_dimension_numbers<[1], [0], [0], [1], [0, 0, 1, 1], [], []>} : vector<1x256xf32>, vector<256x10xf32>, vector<1x10xf32> -> vector<1x10xf32>
    %127 = arith.addf %122, %126 : vector<1x10xf32>
    %128 = vector.extract_strided_slice %101 {offsets = [5, 0], sizes = [1, 256], strides = [1, 1]} : vector<8x256xf32> to vector<1x256xf32>
    %c5 = arith.constant 5 : index
    %c0_57 = arith.constant 0 : index
    %c0_58 = arith.constant 0 : index
    %129 = vector.load %arg10[%c5, %c0_57, %c0_58] : memref<8x256x10xf32, #tpu.memory_space<vmem>>, vector<1x256x10xf32>
    %130 = vector.shape_cast %129 : vector<1x256x10xf32> to vector<256x10xf32>
    %cst_59 = arith.constant dense<0.000000e+00> : vector<1x10xf32>
    %131 = tpu.matmul %128, %130, %cst_59 {dimension_numbers = #tpu.dot_dimension_numbers<[1], [0], [0], [1], [0, 0, 1, 1], [], []>} : vector<1x256xf32>, vector<256x10xf32>, vector<1x10xf32> -> vector<1x10xf32>
    %132 = arith.addf %127, %131 : vector<1x10xf32>
    %133 = vector.extract_strided_slice %101 {offsets = [6, 0], sizes = [1, 256], strides = [1, 1]} : vector<8x256xf32> to vector<1x256xf32>
    %c6 = arith.constant 6 : index
    %c0_60 = arith.constant 0 : index
    %c0_61 = arith.constant 0 : index
    %134 = vector.load %arg10[%c6, %c0_60, %c0_61] : memref<8x256x10xf32, #tpu.memory_space<vmem>>, vector<1x256x10xf32>
    %135 = vector.shape_cast %134 : vector<1x256x10xf32> to vector<256x10xf32>
    %cst_62 = arith.constant dense<0.000000e+00> : vector<1x10xf32>
    %136 = tpu.matmul %133, %135, %cst_62 {dimension_numbers = #tpu.dot_dimension_numbers<[1], [0], [0], [1], [0, 0, 1, 1], [], []>} : vector<1x256xf32>, vector<256x10xf32>, vector<1x10xf32> -> vector<1x10xf32>
    %137 = arith.addf %132, %136 : vector<1x10xf32>
    %138 = vector.extract_strided_slice %101 {offsets = [7, 0], sizes = [1, 256], strides = [1, 1]} : vector<8x256xf32> to vector<1x256xf32>
    %c7 = arith.constant 7 : index
    %c0_63 = arith.constant 0 : index
    %c0_64 = arith.constant 0 : index
    %139 = vector.load %arg10[%c7, %c0_63, %c0_64] : memref<8x256x10xf32, #tpu.memory_space<vmem>>, vector<1x256x10xf32>
    %140 = vector.shape_cast %139 : vector<1x256x10xf32> to vector<256x10xf32>
    %cst_65 = arith.constant dense<0.000000e+00> : vector<1x10xf32>
    %141 = tpu.matmul %138, %140, %cst_65 {dimension_numbers = #tpu.dot_dimension_numbers<[1], [0], [0], [1], [0, 0, 1, 1], [], []>} : vector<1x256xf32>, vector<256x10xf32>, vector<1x10xf32> -> vector<1x10xf32>
    %142 = arith.addf %137, %141 : vector<1x10xf32>
    %c0_66 = arith.constant 0 : index
    %c0_67 = arith.constant 0 : index
    %c0_68 = arith.constant 0 : index
    %143 = vector.load %arg15[%c0_66, %c0_67, %c0_68] : memref<1x1x10xf32, #tpu.memory_space<vmem>>, vector<1x1x10xf32>
    %144 = vector.shape_cast %143 : vector<1x1x10xf32> to vector<1x10xf32>
    %145 = vector.shape_cast %142 : vector<1x10xf32> to vector<1x1x10xf32>
    tpu.vector_store %arg15[%c0_66, %c0_67, %c0_68], %145 {strides = array<i32>} : memref<1x1x10xf32, #tpu.memory_space<vmem>>, vector<1x1x10xf32>,
    return
  }
  func.func @transform_0(%arg0: i32) -> (i32, i32, i32) {
    %c0_i32 = arith.constant 0 : i32
    %c0_i32_0 = arith.constant 0 : i32
    %c0_i32_1 = arith.constant 0 : i32
    return %arg0, %c0_i32, %c0_i32_0 : i32, i32, i32
  }
  func.func @transform_1(%arg0: i32) -> (i32, i32) {
    %c0_i32 = arith.constant 0 : i32
    %c0_i32_0 = arith.constant 0 : i32
    %c0_i32_1 = arith.constant 0 : i32
    return %c0_i32, %c0_i32_0 : i32, i32
  }
  func.func @transform_2(%arg0: i32) -> (i32, i32) {
    %c0_i32 = arith.constant 0 : i32
    %c0_i32_0 = arith.constant 0 : i32
    %c0_i32_1 = arith.constant 0 : i32
    return %c0_i32, %c0_i32_0 : i32, i32
  }
  func.func @transform_3(%arg0: i32) -> (i32, i32) {
    %c0_i32 = arith.constant 0 : i32
    %c0_i32_0 = arith.constant 0 : i32
    %c0_i32_1 = arith.constant 0 : i32
    return %c0_i32, %c0_i32_0 : i32, i32
  }
  func.func @transform_4(%arg0: i32) -> (i32, i32) {
    %c0_i32 = arith.constant 0 : i32
    %c0_i32_0 = arith.constant 0 : i32
    %c0_i32_1 = arith.constant 0 : i32
    return %c0_i32, %c0_i32_0 : i32, i32
  }
  func.func @transform_5(%arg0: i32) -> (i32, i32) {
    %c0_i32 = arith.constant 0 : i32
    %c0_i32_0 = arith.constant 0 : i32
    %c0_i32_1 = arith.constant 0 : i32
    return %c0_i32, %c0_i32_0 : i32, i32
  }
  func.func @transform_6(%arg0: i32) -> (i32, i32) {
    %c0_i32 = arith.constant 0 : i32
    %c0_i32_0 = arith.constant 0 : i32
    %c0_i32_1 = arith.constant 0 : i32
    return %c0_i32, %c0_i32_0 : i32, i32
  }
  func.func @transform_7(%arg0: i32) -> (i32, i32) {
    %c0_i32 = arith.constant 0 : i32
    %c0_i32_0 = arith.constant 0 : i32
    %c0_i32_1 = arith.constant 0 : i32
    return %c0_i32, %c0_i32_0 : i32, i32
  }
  func.func @transform_8(%arg0: i32) -> (i32, i32) {
    %c0_i32 = arith.constant 0 : i32
    %c0_i32_0 = arith.constant 0 : i32
    %c0_i32_1 = arith.constant 0 : i32
    return %c0_i32, %c0_i32_0 : i32, i32
  }
  func.func @transform_9(%arg0: i32) -> (i32, i32, i32) {
    %c0_i32 = arith.constant 0 : i32
    %c0_i32_0 = arith.constant 0 : i32
    %c0_i32_1 = arith.constant 0 : i32
    %c0_i32_2 = arith.constant 0 : i32
    return %c0_i32, %c0_i32_0, %c0_i32_1 : i32, i32, i32
  }
  func.func @transform_10(%arg0: i32) -> (i32, i32) {
    %c0_i32 = arith.constant 0 : i32
    %c0_i32_0 = arith.constant 0 : i32
    %c0_i32_1 = arith.constant 0 : i32
    return %c0_i32, %c0_i32_0 : i32, i32
  }
  func.func @transform_11(%arg0: i32) -> (i32, i32) {
    %c0_i32 = arith.constant 0 : i32
    %c0_i32_0 = arith.constant 0 : i32
    %c0_i32_1 = arith.constant 0 : i32
    return %c0_i32, %c0_i32_0 : i32, i32
  }
  func.func @transform_12(%arg0: i32) -> (i32, i32) {
    %c0_i32 = arith.constant 0 : i32
    %c0_i32_0 = arith.constant 0 : i32
    %c0_i32_1 = arith.constant 0 : i32
    return %c0_i32, %c0_i32_0 : i32, i32
  }
  func.func @transform_13(%arg0: i32) -> (i32, i32) {
    %c0_i32 = arith.constant 0 : i32
    %c0_i32_0 = arith.constant 0 : i32
    %c0_i32_1 = arith.constant 0 : i32
    return %c0_i32, %c0_i32_0 : i32, i32
  }
  func.func @transform_14(%arg0: i32) -> (i32, i32, i32) {
    %c0_i32 = arith.constant 0 : i32
    %c0_i32_0 = arith.constant 0 : i32
    %c0_i32_1 = arith.constant 0 : i32
    return %arg0, %c0_i32, %c0_i32_0 : i32, i32, i32
  }
}

</mosaic_0001>

<llo_original>
// kernel: _lambda_.1
$region0: #{_lambda_.1}
  #allocation0 [shape = 'u32[]', space=smem, size = 0x4, offset = 0x4, fixed_abs, tag = 'smem constant byte address 0x4 - core index']
  #allocation1 [shape = 'u32[144,128]{1,0:T(1,128)}', space=vmem, size = 0x12000, scoped, tag = 'internal scratch']
  %s0 = inlined_call_operand.vmem [shape: f32[2,1,1028], index: 0, kind: input, shape index: {}]
  %s1 = inlined_call_operand.vmem [shape: f32[8,9], index: 1, kind: input, shape index: {}]
  %s2 = inlined_call_operand.vmem [shape: f32[8,1], index: 2, kind: input, shape index: {}]
  %s3 = inlined_call_operand.vmem [shape: f32[8,72], index: 3, kind: input, shape index: {}]
  %s4 = inlined_call_operand.vmem [shape: f32[8,1], index: 4, kind: input, shape index: {}]
  %s5 = inlined_call_operand.vmem [shape: f32[8,72], index: 5, kind: input, shape index: {}]
  %s6 = inlined_call_operand.vmem [shape: f32[8,1], index: 6, kind: input, shape index: {}]
  %s7 = inlined_call_operand.vmem [shape: f32[8,72], index: 7, kind: input, shape index: {}]
  %s8 = inlined_call_operand.vmem [shape: f32[8,1], index: 8, kind: input, shape index: {}]
  %s9 = inlined_call_operand.hbm [shape: f32[8,256,10], index: 9, kind: input, shape index: {}]
  %s10 = inlined_call_operand.vmem [shape: f32[1,10], index: 10, kind: input, shape index: {}]
  %s11 = inlined_call_operand.vmem [shape: f32[1,900], index: 11, kind: input, shape index: {}]
  %s12 = inlined_call_operand.vmem [shape: f32[1,256], index: 12, kind: input, shape index: {}]
  %s13 = inlined_call_operand.hbm [shape: f32[900,256], index: 13, kind: input, shape index: {}]
  %s14 = inlined_call_operand.hbm [shape: f32[2,1,10], index: 14, kind: output, shape index: {}]
  %s15 = sld [smem:[#allocation0]]
  $region97: #{_lambda_.1} parent=0
    _
  %s17 = ssub.s32 1, %s15
  %s18 = scalar_select 0, %s17, %s15
  $region1: #{_lambda_.1} parent=0
    #allocation2 [shape = 'u8[1048576]{0}', space=vmem, size = 0x100000, scoped, tag = 'input window, operand 9, single buffered']
    #allocation3 [shape = 's32[2]{0}', space=sflag, size = 0x8, scoped, tag = 'scoped memory for _lambda_.1']
    #allocation4 [shape = 's32[2]{0}', space=sflag, size = 0x8, scoped, tag = 'scoped memory for _lambda_.1']
    #allocation5 [shape = 'u8[925696]{0}', space=vmem, size = 0xe2000, scoped, tag = 'input window, operand 13, single buffered']
    #allocation6 [shape = 's32[1]{0}', space=sflag, size = 0x4, scoped, tag = 'scoped memory for _lambda_.1']
    #allocation7 [shape = 'u8[1024]{0}', space=vmem, size = 0x400, scoped, tag = 'output window, operand 0']
    %19 = vsyncpa [#allocation3], 0
    %20 = vsyncpa [#allocation6], 0
    %21 = vsyncpa [#allocation4], 0
    %s22 = scalar_lea.sflag [#allocation4], 1
    %23 = vsyncpa %s22, 0
    loop: start=0, step=1, limit=4
    $region2: #{_lambda_.1} parent=1 // loop_pre_header
      _
    $region3: #{_lambda_.1} parent=1 // loop_header
      %s25 = sphi 0, %s29
      %p26 = scmp.ge.s32.totalorder %s25, 4
      %s35 = sphi 0, %s37
      %s38 = sphi 0, %s35
      %s39 = sphi 0, %s38
      %s55 = sphi 0, %s39
      %s59 = sphi 0, %s59
      %s61 = sphi 0, %s59
      %s62 = sphi 0, %s61
      %s76 = sphi 0, %s62
      %s80 = sphi 0, %s80
      %s82 = sphi 0, %s80
      %s83 = sphi 0, %s82
      %s97 = sphi 0, %s83
      %s101 = sphi 0, %s101
      %s103 = sphi 0, %s101
      %s104 = sphi 0, %s103
      %s118 = sphi 0, %s104
      %s122 = sphi 0, %s122
      %s124 = sphi 0, %s122
      %s125 = sphi 0, %s124
      %s139 = sphi 0, %s125
      %s143 = sphi 0, %s143
      %s145 = sphi 0, %s143
      %s146 = sphi 0, %s145
      %s160 = sphi 0, %s146
      %s164 = sphi 0, %s164
      %s166 = sphi 0, %s164
      %s167 = sphi 0, %s166
      %s181 = sphi 0, %s167
      %s185 = sphi 0, %s185
      %s187 = sphi 0, %s185
      %s188 = sphi 0, %s187
      %s202 = sphi 0, %s188
      %s206 = sphi 0, %s206
      %s208 = sphi 0, %s206
      %s209 = sphi 0, %s208
      %s223 = sphi 0, %s209
      %s227 = sphi 0, %s227
      %s229 = sphi 0, %s227
      %s230 = sphi 0, %s229
      %s244 = sphi 0, %s230
      %s248 = sphi 0, %s248
      %s250 = sphi 0, %s248
      %s251 = sphi 0, %s250
      %s265 = sphi 0, %s251
      %s269 = sphi 0, %s269
      %s271 = sphi 0, %s269
      %s272 = sphi 0, %s271
      %s286 = sphi 0, %s272
      %s290 = sphi 0, %s290
      %s292 = sphi 0, %s290
      %s293 = sphi 0, %s292
      %s307 = sphi 0, %s293
      %s311 = sphi 0, %s311
      %s313 = sphi 0, %s311
      %s314 = sphi 0, %s313
      %s328 = sphi 0, %s314
      %s334 = sphi 0, %s336
      %s337 = sphi 0, %s334
      %s338 = sphi 0, %s337
      %s354 = sphi 0, %s338
    $region4: #{_lambda_.1} parent=1 // loop_header_branch
      %28 = sbr.rel (%p26) target = $region8
    $region5: #{_lambda_.1} parent=1 // loop_body
      %s30 = ssub.s32 %s25, 1
      %s31 = ssub.s32 %s25, 2
      %s32 = sadd.s32 %s25, 1
      %s33 = ssub.s32 %s25, %s32
      %p34 = scmp.eq.s32.totalorder %s33, 0
      %s36 = sadd.s32 %s35, 1
      %s37 = scalar_select %p34, %s35, %s36
      %p40 = pneg %p34
      %p41 = scmp.eq.s32.totalorder %s25, 1
      %p42 = por %p40, %p41
      %p43 = scmp.ne.s32.totalorder %s35, %s38
      %p44 = scmp.eq.s32.totalorder %s25, 0
      %p45 = por %p43, %p44
      %p46 = scmp.ne.s32.totalorder %s35, %s38
      %p47 = scmp.eq.s32.totalorder %s30, 1
      %p48 = por %p46, %p47
      %p49 = scmp.ne.s32.totalorder %s38, %s39
      %p50 = scmp.eq.s32.totalorder %s30, 0
      %p51 = por %p49, %p50
      %p52 = scmp.ne.s32.totalorder %s38, %s39
      %p53 = scmp.eq.s32.totalorder %s31, 1
      %p54 = por %p52, %p53
      %p56 = scmp.ne.s32.totalorder %s39, %s55
      %p57 = scmp.eq.s32.totalorder %s31, 0
      %p58 = por %p56, %p57
      %s60 = sadd.s32 %s59, 1
      %p63 = scmp.eq.s32.totalorder %s25, 1
      %p64 = scmp.ne.s32.totalorder %s59, %s61
      %p65 = scmp.eq.s32.totalorder %s25, 0
      %p66 = por %p64, %p65
      %p67 = scmp.ne.s32.totalorder %s59, %s61
      %p68 = scmp.eq.s32.totalorder %s30, 1
      %p69 = por %p67, %p68
      %p70 = scmp.ne.s32.totalorder %s61, %s62
      %p71 = scmp.eq.s32.totalorder %s30, 0
      %p72 = por %p70, %p71
      %p73 = scmp.ne.s32.totalorder %s61, %s62
      %p74 = scmp.eq.s32.totalorder %s31, 1
      %p75 = por %p73, %p74
      %p77 = scmp.ne.s32.totalorder %s62, %s76
      %p78 = scmp.eq.s32.totalorder %s31, 0
      %p79 = por %p77, %p78
      %s81 = sadd.s32 %s80, 1
      %p84 = scmp.eq.s32.totalorder %s25, 1
      %p85 = scmp.ne.s32.totalorder %s80, %s82
      %p86 = scmp.eq.s32.totalorder %s25, 0
      %p87 = por %p85, %p86
      %p88 = scmp.ne.s32.totalorder %s80, %s82
      %p89 = scmp.eq.s32.totalorder %s30, 1
      %p90 = por %p88, %p89
      %p91 = scmp.ne.s32.totalorder %s82, %s83
      %p92 = scmp.eq.s32.totalorder %s30, 0
      %p93 = por %p91, %p92
      %p94 = scmp.ne.s32.totalorder %s82, %s83
      %p95 = scmp.eq.s32.totalorder %s31, 1
      %p96 = por %p94, %p95
      %p98 = scmp.ne.s32.totalorder %s83, %s97
      %p99 = scmp.eq.s32.totalorder %s31, 0
      %p100 = por %p98, %p99
      %s102 = sadd.s32 %s101, 1
      %p105 = scmp.eq.s32.totalorder %s25, 1
      %p106 = scmp.ne.s32.totalorder %s101, %s103
      %p107 = scmp.eq.s32.totalorder %s25, 0
      %p108 = por %p106, %p107
      %p109 = scmp.ne.s32.totalorder %s101, %s103
      %p110 = scmp.eq.s32.totalorder %s30, 1
      %p111 = por %p109, %p110
      %p112 = scmp.ne.s32.totalorder %s103, %s104
      %p113 = scmp.eq.s32.totalorder %s30, 0
      %p114 = por %p112, %p113
      %p115 = scmp.ne.s32.totalorder %s103, %s104
      %p116 = scmp.eq.s32.totalorder %s31, 1
      %p117 = por %p115, %p116
      %p119 = scmp.ne.s32.totalorder %s104, %s118
      %p120 = scmp.eq.s32.totalorder %s31, 0
      %p121 = por %p119, %p120
      %s123 = sadd.s32 %s122, 1
      %p126 = scmp.eq.s32.totalorder %s25, 1
      %p127 = scmp.ne.s32.totalorder %s122, %s124
      %p128 = scmp.eq.s32.totalorder %s25, 0
      %p129 = por %p127, %p128
      %p130 = scmp.ne.s32.totalorder %s122, %s124
      %p131 = scmp.eq.s32.totalorder %s30, 1
      %p132 = por %p130, %p131
      %p133 = scmp.ne.s32.totalorder %s124, %s125
      %p134 = scmp.eq.s32.totalorder %s30, 0
      %p135 = por %p133, %p134
      %p136 = scmp.ne.s32.totalorder %s124, %s125
      %p137 = scmp.eq.s32.totalorder %s31, 1
      %p138 = por %p136, %p137
      %p140 = scmp.ne.s32.totalorder %s125, %s139
      %p141 = scmp.eq.s32.totalorder %s31, 0
      %p142 = por %p140, %p141
      %s144 = sadd.s32 %s143, 1
      %p147 = scmp.eq.s32.totalorder %s25, 1
      %p148 = scmp.ne.s32.totalorder %s143, %s145
      %p149 = scmp.eq.s32.totalorder %s25, 0
      %p150 = por %p148, %p149
      %p151 = scmp.ne.s32.totalorder %s143, %s145
      %p152 = scmp.eq.s32.totalorder %s30, 1
      %p153 = por %p151, %p152
      %p154 = scmp.ne.s32.totalorder %s145, %s146
      %p155 = scmp.eq.s32.totalorder %s30, 0
      %p156 = por %p154, %p155
      %p157 = scmp.ne.s32.totalorder %s145, %s146
      %p158 = scmp.eq.s32.totalorder %s31, 1
      %p159 = por %p157, %p158
      %p161 = scmp.ne.s32.totalorder %s146, %s160
      %p162 = scmp.eq.s32.totalorder %s31, 0
      %p163 = por %p161, %p162
      %s165 = sadd.s32 %s164, 1
      %p168 = scmp.eq.s32.totalorder %s25, 1
      %p169 = scmp.ne.s32.totalorder %s164, %s166
      %p170 = scmp.eq.s32.totalorder %s25, 0
      %p171 = por %p169, %p170
      %p172 = scmp.ne.s32.totalorder %s164, %s166
      %p173 = scmp.eq.s32.totalorder %s30, 1
      %p174 = por %p172, %p173
      %p175 = scmp.ne.s32.totalorder %s166, %s167
      %p176 = scmp.eq.s32.totalorder %s30, 0
      %p177 = por %p175, %p176
      %p178 = scmp.ne.s32.totalorder %s166, %s167
      %p179 = scmp.eq.s32.totalorder %s31, 1
      %p180 = por %p178, %p179
      %p182 = scmp.ne.s32.totalorder %s167, %s181
      %p183 = scmp.eq.s32.totalorder %s31, 0
      %p184 = por %p182, %p183
      %s186 = sadd.s32 %s185, 1
      %p189 = scmp.eq.s32.totalorder %s25, 1
      %p190 = scmp.ne.s32.totalorder %s185, %s187
      %p191 = scmp.eq.s32.totalorder %s25, 0
      %p192 = por %p190, %p191
      %p193 = scmp.ne.s32.totalorder %s185, %s187
      %p194 = scmp.eq.s32.totalorder %s30, 1
      %p195 = por %p193, %p194
      %p196 = scmp.ne.s32.totalorder %s187, %s188
      %p197 = scmp.eq.s32.totalorder %s30, 0
      %p198 = por %p196, %p197
      %p199 = scmp.ne.s32.totalorder %s187, %s188
      %p200 = scmp.eq.s32.totalorder %s31, 1
      %p201 = por %p199, %p200
      %p203 = scmp.ne.s32.totalorder %s188, %s202
      %p204 = scmp.eq.s32.totalorder %s31, 0
      %p205 = por %p203, %p204
      %s207 = sadd.s32 %s206, 1
      %p210 = scmp.eq.s32.totalorder %s25, 1
      %p211 = scmp.ne.s32.totalorder %s206, %s208
      %p212 = scmp.eq.s32.totalorder %s25, 0
      %p213 = por %p211, %p212
      %p214 = scmp.ne.s32.totalorder %s206, %s208
      %p215 = scmp.eq.s32.totalorder %s30, 1
      %p216 = por %p214, %p215
      %p217 = scmp.ne.s32.totalorder %s208, %s209
      %p218 = scmp.eq.s32.totalorder %s30, 0
      %p219 = por %p217, %p218
      %p220 = scmp.ne.s32.totalorder %s208, %s209
      %p221 = scmp.eq.s32.totalorder %s31, 1
      %p222 = por %p220, %p221
      %p224 = scmp.ne.s32.totalorder %s209, %s223
      %p225 = scmp.eq.s32.totalorder %s31, 0
      %p226 = por %p224, %p225
      %s228 = sadd.s32 %s227, 1
      %p231 = scmp.eq.s32.totalorder %s25, 1
      %p232 = scmp.ne.s32.totalorder %s227, %s229
      %p233 = scmp.eq.s32.totalorder %s25, 0
      %p234 = por %p232, %p233
      %p235 = scmp.ne.s32.totalorder %s227, %s229
      %p236 = scmp.eq.s32.totalorder %s30, 1
      %p237 = por %p235, %p236
      %p238 = scmp.ne.s32.totalorder %s229, %s230
      %p239 = scmp.eq.s32.totalorder %s30, 0
      %p240 = por %p238, %p239
      %p241 = scmp.ne.s32.totalorder %s229, %s230
      %p242 = scmp.eq.s32.totalorder %s31, 1
      %p243 = por %p241, %p242
      %p245 = scmp.ne.s32.totalorder %s230, %s244
      %p246 = scmp.eq.s32.totalorder %s31, 0
      %p247 = por %p245, %p246
      %s249 = sadd.s32 %s248, 1
      %p252 = scmp.eq.s32.totalorder %s25, 1
      %p253 = scmp.ne.s32.totalorder %s248, %s250
      %p254 = scmp.eq.s32.totalorder %s25, 0
      %p255 = por %p253, %p254
      %p256 = scmp.ne.s32.totalorder %s248, %s250
      %p257 = scmp.eq.s32.totalorder %s30, 1
      %p258 = por %p256, %p257
      %p259 = scmp.ne.s32.totalorder %s250, %s251
      %p260 = scmp.eq.s32.totalorder %s30, 0
      %p261 = por %p259, %p260
      %p262 = scmp.ne.s32.totalorder %s250, %s251
      %p263 = scmp.eq.s32.totalorder %s31, 1
      %p264 = por %p262, %p263
      %p266 = scmp.ne.s32.totalorder %s251, %s265
      %p267 = scmp.eq.s32.totalorder %s31, 0
      %p268 = por %p266, %p267
      %s270 = sadd.s32 %s269, 1
      %p273 = scmp.eq.s32.totalorder %s25, 1
      %p274 = scmp.ne.s32.totalorder %s269, %s271
      %p275 = scmp.eq.s32.totalorder %s25, 0
      %p276 = por %p274, %p275
      %p277 = scmp.ne.s32.totalorder %s269, %s271
      %p278 = scmp.eq.s32.totalorder %s30, 1
      %p279 = por %p277, %p278
      %p280 = scmp.ne.s32.totalorder %s271, %s272
      %p281 = scmp.eq.s32.totalorder %s30, 0
      %p282 = por %p280, %p281
      %p283 = scmp.ne.s32.totalorder %s271, %s272
      %p284 = scmp.eq.s32.totalorder %s31, 1
      %p285 = por %p283, %p284
      %p287 = scmp.ne.s32.totalorder %s272, %s286
      %p288 = scmp.eq.s32.totalorder %s31, 0
      %p289 = por %p287, %p288
      %s291 = sadd.s32 %s290, 1
      %p294 = scmp.eq.s32.totalorder %s25, 1
      %p295 = scmp.ne.s32.totalorder %s290, %s292
      %p296 = scmp.eq.s32.totalorder %s25, 0
      %p297 = por %p295, %p296
      %p298 = scmp.ne.s32.totalorder %s290, %s292
      %p299 = scmp.eq.s32.totalorder %s30, 1
      %p300 = por %p298, %p299
      %p301 = scmp.ne.s32.totalorder %s292, %s293
      %p302 = scmp.eq.s32.totalorder %s30, 0
      %p303 = por %p301, %p302
      %p304 = scmp.ne.s32.totalorder %s292, %s293
      %p305 = scmp.eq.s32.totalorder %s31, 1
      %p306 = por %p304, %p305
      %p308 = scmp.ne.s32.totalorder %s293, %s307
      %p309 = scmp.eq.s32.totalorder %s31, 0
      %p310 = por %p308, %p309
      %s312 = sadd.s32 %s311, 1
      %p315 = scmp.eq.s32.totalorder %s25, 1
      %p316 = scmp.ne.s32.totalorder %s311, %s313
      %p317 = scmp.eq.s32.totalorder %s25, 0
      %p318 = por %p316, %p317
      %p319 = scmp.ne.s32.totalorder %s311, %s313
      %p320 = scmp.eq.s32.totalorder %s30, 1
      %p321 = por %p319, %p320
      %p322 = scmp.ne.s32.totalorder %s313, %s314
      %p323 = scmp.eq.s32.totalorder %s30, 0
      %p324 = por %p322, %p323
      %p325 = scmp.ne.s32.totalorder %s313, %s314
      %p326 = scmp.eq.s32.totalorder %s31, 1
      %p327 = por %p325, %p326
      %p329 = scmp.ne.s32.totalorder %s314, %s328
      %p330 = scmp.eq.s32.totalorder %s31, 0
      %p331 = por %p329, %p330
      %s332 = ssub.s32 %s25, %s32
      %p333 = scmp.eq.s32.totalorder %s332, 0
      %s335 = sadd.s32 %s334, 1
      %s336 = scalar_select %p333, %s334, %s335
      %p339 = pneg %p333
      %p340 = scmp.eq.s32.totalorder %s25, 1
      %p341 = por %p339, %p340
      %p342 = scmp.ne.s32.totalorder %s334, %s337
      %p343 = scmp.eq.s32.totalorder %s25, 0
      %p344 = por %p342, %p343
      %p345 = scmp.ne.s32.totalorder %s334, %s337
      %p346 = scmp.eq.s32.totalorder %s30, 1
      %p347 = por %p345, %p346
      %p348 = scmp.ne.s32.totalorder %s337, %s338
      %p349 = scmp.eq.s32.totalorder %s30, 0
      %p350 = por %p348, %p349
      %p351 = scmp.ne.s32.totalorder %s337, %s338
      %p352 = scmp.eq.s32.totalorder %s31, 1
      %p353 = por %p351, %p352
      %p355 = scmp.ne.s32.totalorder %s338, %s354
      %p356 = scmp.eq.s32.totalorder %s31, 0
      %p357 = por %p355, %p356
      %p358 = scmp.le.s32.totalorder 1, %s25
      %p359 = scmp.lt.s32.totalorder %s25, 3
      %p360 = pnand %p358, %p359
      %p361 = pneg %p360
      // Predicated region
      $region9: #{_lambda_.1} parent=5 // pred_check
        _
      $region10: #{_lambda_.1} parent=5 // pred_check_branch
        %363 = sbr.rel (%p360) target = $region12
      $region11: #{_lambda_.1} parent=5 // pred_region
        %s364 = ssub.s32 %s25, 1
        // Predicated region
        $region13: #{_lambda_.1} parent=11 // pred_check
          %p365 = pneg %p72
        $region14: #{_lambda_.1} parent=11 // pred_check_branch
          %367 = sbr.rel (%p365) target = $region16
        $region15: #{_lambda_.1} parent=11 // pred_region
          _
        $region16: #{_lambda_.1} parent=11 // pred_fallthru
          _
        // Predicated region
        $region17: #{_lambda_.1} parent=11 // pred_check
          %p368 = pneg %p93
        $region18: #{_lambda_.1} parent=11 // pred_check_branch
          %370 = sbr.rel (%p368) target = $region20
        $region19: #{_lambda_.1} parent=11 // pred_region
          _
        $region20: #{_lambda_.1} parent=11 // pred_fallthru
          _
        // Predicated region
        $region21: #{_lambda_.1} parent=11 // pred_check
          %p371 = pneg %p114
        $region22: #{_lambda_.1} parent=11 // pred_check_branch
          %373 = sbr.rel (%p371) target = $region24
        $region23: #{_lambda_.1} parent=11 // pred_region
          _
        $region24: #{_lambda_.1} parent=11 // pred_fallthru
          _
        // Predicated region
        $region25: #{_lambda_.1} parent=11 // pred_check
          %p374 = pneg %p135
        $region26: #{_lambda_.1} parent=11 // pred_check_branch
          %376 = sbr.rel (%p374) target = $region28
        $region27: #{_lambda_.1} parent=11 // pred_region
          _
        $region28: #{_lambda_.1} parent=11 // pred_fallthru
          _
        // Predicated region
        $region29: #{_lambda_.1} parent=11 // pred_check
          %p377 = pneg %p156
        $region30: #{_lambda_.1} parent=11 // pred_check_branch
          %379 = sbr.rel (%p377) target = $region32
        $region31: #{_lambda_.1} parent=11 // pred_region
          _
        $region32: #{_lambda_.1} parent=11 // pred_fallthru
          _
        // Predicated region
        $region33: #{_lambda_.1} parent=11 // pred_check
          %p380 = pneg %p177
        $region34: #{_lambda_.1} parent=11 // pred_check_branch
          %382 = sbr.rel (%p380) target = $region36
        $region35: #{_lambda_.1} parent=11 // pred_region
          _
        $region36: #{_lambda_.1} parent=11 // pred_fallthru
          _
        // Predicated region
        $region37: #{_lambda_.1} parent=11 // pred_check
          %p383 = pneg %p198
        $region38: #{_lambda_.1} parent=11 // pred_check_branch
          %385 = sbr.rel (%p383) target = $region40
        $region39: #{_lambda_.1} parent=11 // pred_region
          _
        $region40: #{_lambda_.1} parent=11 // pred_fallthru
          _
        // Predicated region
        $region41: #{_lambda_.1} parent=11 // pred_check
          %p386 = pneg %p219
        $region42: #{_lambda_.1} parent=11 // pred_check_branch
          %388 = sbr.rel (%p386) target = $region44
        $region43: #{_lambda_.1} parent=11 // pred_region
          _
        $region44: #{_lambda_.1} parent=11 // pred_fallthru
          _
        // Predicated region
        $region45: #{_lambda_.1} parent=11 // pred_check
          %p389 = pneg %p240
        $region46: #{_lambda_.1} parent=11 // pred_check_branch
          %391 = sbr.rel (%p389) target = $region48
        $region47: #{_lambda_.1} parent=11 // pred_region
          %s393 = ssub.s32 32768, 32768
          %394 = vsyncadd [#allocation3], %s393
          %s395 = sshll.u32 [#allocation2], 4
          %s396 = int_to_ptr.vmem [resolvable:$true] %s395
          %401 = dma.hbm_to_vmem [thread:$0]  %s9, 32768, %s396, [#allocation3], 128, 128, 8
        $region48: #{_lambda_.1} parent=11 // pred_fallthru
          _
        // Predicated region
        $region49: #{_lambda_.1} parent=11 // pred_check
          %p402 = pneg %p261
        $region50: #{_lambda_.1} parent=11 // pred_check_branch
          %404 = sbr.rel (%p402) target = $region52
        $region51: #{_lambda_.1} parent=11 // pred_region
          _
        $region52: #{_lambda_.1} parent=11 // pred_fallthru
          _
        // Predicated region
        $region53: #{_lambda_.1} parent=11 // pred_check
          %p405 = pneg %p282
        $region54: #{_lambda_.1} parent=11 // pred_check_branch
          %407 = sbr.rel (%p405) target = $region56
        $region55: #{_lambda_.1} parent=11 // pred_region
          _
        $region56: #{_lambda_.1} parent=11 // pred_fallthru
          _
        // Predicated region
        $region57: #{_lambda_.1} parent=11 // pred_check
          %p408 = pneg %p303
        $region58: #{_lambda_.1} parent=11 // pred_check_branch
          %410 = sbr.rel (%p408) target = $region60
        $region59: #{_lambda_.1} parent=11 // pred_region
          _
        $region60: #{_lambda_.1} parent=11 // pred_fallthru
          _
        // Predicated region
        $region61: #{_lambda_.1} parent=11 // pred_check
          %p411 = pneg %p324
        $region62: #{_lambda_.1} parent=11 // pred_check_branch
          %413 = sbr.rel (%p411) target = $region64
        $region63: #{_lambda_.1} parent=11 // pred_region
          %s415 = ssub.s32 28928, 28928
          %416 = vsyncadd [#allocation6], %s415
          %s417 = sshll.u32 [#allocation5], 4
          %s418 = int_to_ptr.vmem [resolvable:$true] %s417
          %423 = dma.hbm_to_vmem [thread:$0]  %s13, 28928, %s418, [#allocation6], 256, 256, 16
        $region64: #{_lambda_.1} parent=11 // pred_fallthru
          _
      $region12: #{_lambda_.1} parent=5 // pred_fallthru
        _
      %p424 = scmp.lt.s32.totalorder %s25, 2
      // Predicated region
      $region65: #{_lambda_.1} parent=5 // pred_check
        %p425 = pneg %p424
      $region66: #{_lambda_.1} parent=5 // pred_check_branch
        %427 = sbr.rel (%p425) target = $region68
      $region67: #{_lambda_.1} parent=5 // pred_region
        // Predicated region
        $region69: #{_lambda_.1} parent=67 // pred_check
          %p428 = pneg %p45
        $region70: #{_lambda_.1} parent=67 // pred_check_branch
          %430 = sbr.rel (%p428) target = $region72
        $region71: #{_lambda_.1} parent=67 // pred_region
          %p431 = scmp.lt.s32.totalorder %s25, 1
          %s432 = scalar_select %p431, %s25, 1
          %s433 = smul.addr %s432, 9
          %s434 = scalar_lea.vmem %s0, %s433
        $region72: #{_lambda_.1} parent=67 // pred_fallthru
          _
      $region68: #{_lambda_.1} parent=5 // pred_fallthru
        _
      %p435 = scmp.le.s32.totalorder 1, %s25
      %p436 = scmp.lt.s32.totalorder %s25, 3
      %p437 = pnand %p435, %p436
      %p438 = pneg %p437
      // Predicated region
      $region73: #{_lambda_.1} parent=5 // pred_check
        _
      $region74: #{_lambda_.1} parent=5 // pred_check_branch
        %440 = sbr.rel (%p437) target = $region76
      $region75: #{_lambda_.1} parent=5 // pred_region
        %s441 = ssub.s32 %s25, 1
        // Predicated region
        $region77: #{_lambda_.1} parent=75 // pred_check
          %p442 = pneg %p240
        $region78: #{_lambda_.1} parent=75 // pred_check_branch
          %444 = sbr.rel (%p442) target = $region80
        $region79: #{_lambda_.1} parent=75 // pred_region
          %445 = dma.done [#allocation3], 32768
        $region80: #{_lambda_.1} parent=75 // pred_fallthru
          _
        // Predicated region
        $region81: #{_lambda_.1} parent=75 // pred_check
          %p446 = pneg %p324
        $region82: #{_lambda_.1} parent=75 // pred_check_branch
          %448 = sbr.rel (%p446) target = $region84
        $region83: #{_lambda_.1} parent=75 // pred_region
          %449 = dma.done [#allocation6], 28928
        $region84: #{_lambda_.1} parent=75 // pred_fallthru
          _
        %p450 = scmp.lt.s32.totalorder %s30, 1
        %s451 = scalar_select %p450, %s30, 1
        %s452 = smul.addr %s451, 9
        %s453 = scalar_lea.vmem %s0, %s452
        %p454 = pneg %p51
        %p455 = pneg %p48
        %p456 = pneg %p72
        %p457 = pneg %p69
        %p458 = pneg %p93
        %p459 = pneg %p90
        %p460 = pneg %p114
        %p461 = pneg %p111
        %p462 = pneg %p135
        %p463 = pneg %p132
        %p464 = pneg %p156
        %p465 = pneg %p153
        %p466 = pneg %p177
        %p467 = pneg %p174
        %p468 = pneg %p198
        %p469 = pneg %p195
        %p470 = pneg %p219
        %p471 = pneg %p216
        %p472 = pneg %p240
        %p473 = pneg %p237
        %p474 = pneg %p261
        %p475 = pneg %p258
        %p476 = pneg %p282
        %p477 = pneg %p279
        %p478 = pneg %p303
        %p479 = pneg %p300
        %p480 = pneg %p324
        %p481 = pneg %p321
        %p482 = pneg %p350
        %p483 = pneg %p347
        %s484 = sand.u32 %s337, 1
        %s485 = scalar_lea.sflag [#allocation4], %s484
        %s486 = sand.u32 %s337, 1
        %s487 = scalar_lea.vmem [#allocation7], %s486
        %p488 = scmp.lt.s32.totalorder %s30, 1
        %s489 = scalar_select %p488, %s30, 1
        %s490 = smul.addr %s489, 9
        %s491 = scalar_lea.vmem %s0, %s490
        %v492 = vld [vmem:[%s491] sm:$0xff]
        %v494 = vlaneseq
        %v495 = vshrl.u32 %v494, 7
        %v496 = vsub.s32 0, %v495
        %v497 = vrot.slane %v492, %v496
        %v498 = vlaneseq
        %v499 = vshrl.u32 %v498, 7
        %v500 = vsub.s32 1, %v499
        %v501 = vrot.slane %v492, %v500
        %v502 = vlaneseq
        %v503 = vshrl.u32 %v502, 7
        %v504 = vsub.s32 2, %v503
        %v505 = vrot.slane %v492, %v504
        %v506 = vlaneseq
        %v507 = vshrl.u32 %v506, 7
        %v508 = vsub.s32 3, %v507
        %v509 = vrot.slane %v492, %v508
        %v510 = vlaneseq
        %v511 = vshrl.u32 %v510, 7
        %v512 = vsub.s32 4, %v511
        %v513 = vrot.slane %v492, %v512
        %v514 = vlaneseq
        %v515 = vshrl.u32 %v514, 7
        %v516 = vsub.s32 5, %v515
        %v517 = vrot.slane %v492, %v516
        %v518 = vlaneseq
        %v519 = vshrl.u32 %v518, 7
        %v520 = vsub.s32 6, %v519
        %v521 = vrot.slane %v492, %v520
        %v522 = vlaneseq
        %v523 = vshrl.u32 %v522, 7
        %v524 = vsub.s32 7, %v523
        %v525 = vrot.slane %v492, %v524
        %534 = vrot.lane.b32.xlu0 %v497, 127
        %v535 = vpop.permute.xlu0 %534
        %536 = vrot.lane.b32.xlu0 %v501, 127
        %v537 = vpop.permute.xlu0 %536
        %538 = vrot.lane.b32.xlu0 %v505, 127
        %v539 = vpop.permute.xlu0 %538
        %540 = vrot.lane.b32.xlu0 %v509, 127
        %v541 = vpop.permute.xlu0 %540
        %542 = vrot.lane.b32.xlu0 %v513, 127
        %v543 = vpop.permute.xlu0 %542
        %544 = vrot.lane.b32.xlu0 %v517, 127
        %v545 = vpop.permute.xlu0 %544
        %546 = vrot.lane.b32.xlu0 %v521, 127
        %v547 = vpop.permute.xlu0 %546
        %548 = vrot.lane.b32.xlu0 %v525, 127
        %v549 = vpop.permute.xlu0 %548
        %vm550 = vcmask 1039360
        %v551 = vsel %vm550, %v535, %v537
        %v552 = vsel %vm550, %v537, %v539
        %v553 = vsel %vm550, %v539, %v541
        %v554 = vsel %vm550, %v541, %v543
        %v555 = vsel %vm550, %v543, %v545
        %v556 = vsel %vm550, %v545, %v547
        %v557 = vsel %vm550, %v547, %v549
        %566 = vrot.lane.b32.xlu0 %v497, 126
        %v567 = vpop.permute.xlu0 %566
        %568 = vrot.lane.b32.xlu0 %v501, 126
        %v569 = vpop.permute.xlu0 %568
        %570 = vrot.lane.b32.xlu0 %v505, 126
        %v571 = vpop.permute.xlu0 %570
        %572 = vrot.lane.b32.xlu0 %v509, 126
        %v573 = vpop.permute.xlu0 %572
        %574 = vrot.lane.b32.xlu0 %v513, 126
        %v575 = vpop.permute.xlu0 %574
        %576 = vrot.lane.b32.xlu0 %v517, 126
        %v577 = vpop.permute.xlu0 %576
        %578 = vrot.lane.b32.xlu0 %v521, 126
        %v579 = vpop.permute.xlu0 %578
        %580 = vrot.lane.b32.xlu0 %v525, 126
        %v581 = vpop.permute.xlu0 %580
        %vm582 = vcmask 1031168
        %v583 = vsel %vm582, %v567, %v569
        %v584 = vsel %vm582, %v569, %v571
        %v585 = vsel %vm582, %v571, %v573
        %v586 = vsel %vm582, %v573, %v575
        %v587 = vsel %vm582, %v575, %v577
        %v588 = vsel %vm582, %v577, %v579
        %v589 = vsel %vm582, %v579, %v581
        %598 = vrot.lane.b32.xlu0 %v497, 98
        %v599 = vpop.permute.xlu0 %598
        %600 = vrot.lane.b32.xlu0 %v501, 98
        %v601 = vpop.permute.xlu0 %600
        %602 = vrot.lane.b32.xlu0 %v505, 98
        %v603 = vpop.permute.xlu0 %602
        %604 = vrot.lane.b32.xlu0 %v509, 98
        %v605 = vpop.permute.xlu0 %604
        %606 = vrot.lane.b32.xlu0 %v513, 98
        %v607 = vpop.permute.xlu0 %606
        %608 = vrot.lane.b32.xlu0 %v517, 98
        %v609 = vpop.permute.xlu0 %608
        %610 = vrot.lane.b32.xlu0 %v521, 98
        %v611 = vpop.permute.xlu0 %610
        %612 = vrot.lane.b32.xlu0 %v525, 98
        %v613 = vpop.permute.xlu0 %612
        %vm614 = vcmask 801792
        %v615 = vsel %vm614, %v599, %v601
        %v616 = vsel %vm614, %v601, %v603
        %v617 = vsel %vm614, %v603, %v605
        %v618 = vsel %vm614, %v605, %v607
        %v619 = vsel %vm614, %v607, %v609
        %v620 = vsel %vm614, %v609, %v611
        %v621 = vsel %vm614, %v611, %v613
        %630 = vrot.lane.b32.xlu0 %v497, 97
        %v631 = vpop.permute.xlu0 %630
        %632 = vrot.lane.b32.xlu0 %v501, 97
        %v633 = vpop.permute.xlu0 %632
        %634 = vrot.lane.b32.xlu0 %v505, 97
        %v635 = vpop.permute.xlu0 %634
        %636 = vrot.lane.b32.xlu0 %v509, 97
        %v637 = vpop.permute.xlu0 %636
        %638 = vrot.lane.b32.xlu0 %v513, 97
        %v639 = vpop.permute.xlu0 %638
        %640 = vrot.lane.b32.xlu0 %v517, 97
        %v641 = vpop.permute.xlu0 %640
        %642 = vrot.lane.b32.xlu0 %v521, 97
        %v643 = vpop.permute.xlu0 %642
        %644 = vrot.lane.b32.xlu0 %v525, 97
        %v645 = vpop.permute.xlu0 %644
        %vm646 = vcmask 793600
        %v647 = vsel %vm646, %v631, %v633
        %v648 = vsel %vm646, %v633, %v635
        %v649 = vsel %vm646, %v635, %v637
        %v650 = vsel %vm646, %v637, %v639
        %v651 = vsel %vm646, %v639, %v641
        %v652 = vsel %vm646, %v641, %v643
        %v653 = vsel %vm646, %v643, %v645
        %662 = vrot.lane.b32.xlu0 %v497, 96
        %v663 = vpop.permute.xlu0 %662
        %664 = vrot.lane.b32.xlu0 %v501, 96
        %v665 = vpop.permute.xlu0 %664
        %666 = vrot.lane.b32.xlu0 %v505, 96
        %v667 = vpop.permute.xlu0 %666
        %668 = vrot.lane.b32.xlu0 %v509, 96
        %v669 = vpop.permute.xlu0 %668
        %670 = vrot.lane.b32.xlu0 %v513, 96
        %v671 = vpop.permute.xlu0 %670
        %672 = vrot.lane.b32.xlu0 %v517, 96
        %v673 = vpop.permute.xlu0 %672
        %674 = vrot.lane.b32.xlu0 %v521, 96
        %v675 = vpop.permute.xlu0 %674
        %676 = vrot.lane.b32.xlu0 %v525, 96
        %v677 = vpop.permute.xlu0 %676
        %vm678 = vcmask 785408
        %v679 = vsel %vm678, %v663, %v665
        %v680 = vsel %vm678, %v665, %v667
        %v681 = vsel %vm678, %v667, %v669
        %v682 = vsel %vm678, %v669, %v671
        %v683 = vsel %vm678, %v671, %v673
        %v684 = vsel %vm678, %v673, %v675
        %v685 = vsel %vm678, %v675, %v677
        %694 = vrot.lane.b32.xlu0 %v497, 68
        %v695 = vpop.permute.xlu0 %694
        %696 = vrot.lane.b32.xlu0 %v501, 68
        %v697 = vpop.permute.xlu0 %696
        %698 = vrot.lane.b32.xlu0 %v505, 68
        %v699 = vpop.permute.xlu0 %698
        %700 = vrot.lane.b32.xlu0 %v509, 68
        %v701 = vpop.permute.xlu0 %700
        %702 = vrot.lane.b32.xlu0 %v513, 68
        %v703 = vpop.permute.xlu0 %702
        %704 = vrot.lane.b32.xlu0 %v517, 68
        %v705 = vpop.permute.xlu0 %704
        %706 = vrot.lane.b32.xlu0 %v521, 68
        %v707 = vpop.permute.xlu0 %706
        %708 = vrot.lane.b32.xlu0 %v525, 68
        %v709 = vpop.permute.xlu0 %708
        %vm710 = vcmask 556032
        %v711 = vsel %vm710, %v695, %v697
        %v712 = vsel %vm710, %v697, %v699
        %v713 = vsel %vm710, %v699, %v701
        %v714 = vsel %vm710, %v701, %v703
        %v715 = vsel %vm710, %v703, %v705
        %v716 = vsel %vm710, %v705, %v707
        %v717 = vsel %vm710, %v707, %v709
        %726 = vrot.lane.b32.xlu0 %v497, 67
        %v727 = vpop.permute.xlu0 %726
        %728 = vrot.lane.b32.xlu0 %v501, 67
        %v729 = vpop.permute.xlu0 %728
        %730 = vrot.lane.b32.xlu0 %v505, 67
        %v731 = vpop.permute.xlu0 %730
        %732 = vrot.lane.b32.xlu0 %v509, 67
        %v733 = vpop.permute.xlu0 %732
        %734 = vrot.lane.b32.xlu0 %v513, 67
        %v735 = vpop.permute.xlu0 %734
        %736 = vrot.lane.b32.xlu0 %v517, 67
        %v737 = vpop.permute.xlu0 %736
        %738 = vrot.lane.b32.xlu0 %v521, 67
        %v739 = vpop.permute.xlu0 %738
        %740 = vrot.lane.b32.xlu0 %v525, 67
        %v741 = vpop.permute.xlu0 %740
        %vm742 = vcmask 547840
        %v743 = vsel %vm742, %v727, %v729
        %v744 = vsel %vm742, %v729, %v731
        %v745 = vsel %vm742, %v731, %v733
        %v746 = vsel %vm742, %v733, %v735
        %v747 = vsel %vm742, %v735, %v737
        %v748 = vsel %vm742, %v737, %v739
        %v749 = vsel %vm742, %v739, %v741
        %758 = vrot.lane.b32.xlu0 %v497, 66
        %v759 = vpop.permute.xlu0 %758
        %760 = vrot.lane.b32.xlu0 %v501, 66
        %v761 = vpop.permute.xlu0 %760
        %762 = vrot.lane.b32.xlu0 %v505, 66
        %v763 = vpop.permute.xlu0 %762
        %764 = vrot.lane.b32.xlu0 %v509, 66
        %v765 = vpop.permute.xlu0 %764
        %766 = vrot.lane.b32.xlu0 %v513, 66
        %v767 = vpop.permute.xlu0 %766
        %768 = vrot.lane.b32.xlu0 %v517, 66
        %v769 = vpop.permute.xlu0 %768
        %770 = vrot.lane.b32.xlu0 %v521, 66
        %v771 = vpop.permute.xlu0 %770
        %772 = vrot.lane.b32.xlu0 %v525, 66
        %v773 = vpop.permute.xlu0 %772
        %vm774 = vcmask 539648
        %v775 = vsel %vm774, %v759, %v761
        %v776 = vsel %vm774, %v761, %v763
        %v777 = vsel %vm774, %v763, %v765
        %v778 = vsel %vm774, %v765, %v767
        %v779 = vsel %vm774, %v767, %v769
        %v780 = vsel %vm774, %v769, %v771
        %v781 = vsel %vm774, %v771, %v773
        %vm782 = vcmask 1040384
        %v783 = vsel %vm782, %v497, %v551
        %v784 = vsel %vm782, %v501, %v552
        %v785 = vsel %vm782, %v505, %v553
        %v786 = vsel %vm782, %v509, %v554
        %v787 = vsel %vm782, %v513, %v555
        %v788 = vsel %vm782, %v517, %v556
        %v789 = vsel %vm782, %v521, %v557
        %v790 = vsel %vm782, %v525, %v549
        %vm791 = vcmask 1041408
        %v792 = vsel %vm791, %v783, %v583
        %v793 = vsel %vm791, %v784, %v584
        %v794 = vsel %vm791, %v785, %v585
        %v795 = vsel %vm791, %v786, %v586
        %v796 = vsel %vm791, %v787, %v587
        %v797 = vsel %vm791, %v788, %v588
        %v798 = vsel %vm791, %v789, %v589
        %v799 = vsel %vm791, %v790, %v581
        %vm800 = vcmask 1042432
        %v801 = vsel %vm800, %v792, %v615
        %v802 = vsel %vm800, %v793, %v616
        %v803 = vsel %vm800, %v794, %v617
        %v804 = vsel %vm800, %v795, %v618
        %v805 = vsel %vm800, %v796, %v619
        %v806 = vsel %vm800, %v797, %v620
        %v807 = vsel %vm800, %v798, %v621
        %v808 = vsel %vm800, %v799, %v613
        %vm809 = vcmask 1043456
        %v810 = vsel %vm809, %v801, %v647
        %v811 = vsel %vm809, %v802, %v648
        %v812 = vsel %vm809, %v803, %v649
        %v813 = vsel %vm809, %v804, %v650
        %v814 = vsel %vm809, %v805, %v651
        %v815 = vsel %vm809, %v806, %v652
        %v816 = vsel %vm809, %v807, %v653
        %v817 = vsel %vm809, %v808, %v645
        %vm818 = vcmask 1044480
        %v819 = vsel %vm818, %v810, %v679
        %v820 = vsel %vm818, %v811, %v680
        %v821 = vsel %vm818, %v812, %v681
        %v822 = vsel %vm818, %v813, %v682
        %v823 = vsel %vm818, %v814, %v683
        %v824 = vsel %vm818, %v815, %v684
        %v825 = vsel %vm818, %v816, %v685
        %v826 = vsel %vm818, %v817, %v677
        %vm827 = vcmask 1045504
        %v828 = vsel %vm827, %v819, %v711
        %v829 = vsel %vm827, %v820, %v712
        %v830 = vsel %vm827, %v821, %v713
        %v831 = vsel %vm827, %v822, %v714
        %v832 = vsel %vm827, %v823, %v715
        %v833 = vsel %vm827, %v824, %v716
        %v834 = vsel %vm827, %v825, %v717
        %v835 = vsel %vm827, %v826, %v709
        %vm836 = vcmask 1046528
        %v837 = vsel %vm836, %v828, %v743
        %v838 = vsel %vm836, %v829, %v744
        %v839 = vsel %vm836, %v830, %v745
        %v840 = vsel %vm836, %v831, %v746
        %v841 = vsel %vm836, %v832, %v747
        %v842 = vsel %vm836, %v833, %v748
        %v843 = vsel %vm836, %v834, %v749
        %v844 = vsel %vm836, %v835, %v741
        %v845 = vld [vmem:[%s1] sm:$0xff]
        %v846 = vld [vmem:[%s2] sm:$0xff]
        %848 = vset.pattern.permute.xlu0 0
        %849 = vperm.xlu0 %848, %v846
        %v850 = vpop.permute.xlu0 %849
        %vm852 = vcmask 72704
        %v854 = vsel %vm852, %v845, 0
        %v856 = vsel %vm782, %v775, 0
        %v858 = vsel %vm782, %v776, 0
        %v860 = vsel %vm782, %v777, 0
        %v862 = vsel %vm782, %v778, 0
        %v864 = vsel %vm782, %v779, 0
        %v866 = vsel %vm782, %v780, 0
        %v868 = vsel %vm782, %v781, 0
        %v870 = vsel %vm782, %v773, 0
        %872 = vmatprep.subr.mxu0 0.0
        %873 = vmatpush1.msra.mxu0 0.0
        %874 = vmatprep.subr.mxu0 0.0
        %875 = vmatpush1.msra.mxu0 0.0
        %876 = vmatprep.subr.mxu0 0.0
        %877 = vmatpush1.msra.mxu0 0.0
        %878 = vmatprep.subr.mxu0 0.0
        %879 = vmatpush1.msra.mxu0 0.0
        %880 = vmatprep.subr.mxu0 0.0
        %881 = vmatpush1.msra.mxu0 0.0
        %882 = vmatprep.subr.mxu0 0.0
        %883 = vmatpush1.msra.mxu0 0.0
        %884 = vmatprep.subr.mxu0 0.0
        %885 = vmatpush1.msra.mxu0 0.0
        %886 = vmatprep.subr.mxu0 0.0
        %887 = vmatpush1.msra.mxu0 0.0
        %888 = vmatprep.subr.mxu0 0.0
        %889 = vmatpush1.msra.mxu0 0.0
        %890 = vmatprep.subr.mxu0 0.0
        %891 = vmatpush1.msra.mxu0 0.0
        %892 = vmatprep.subr.mxu0 0.0
        %893 = vmatpush1.msra.mxu0 0.0
        %894 = vmatprep.subr.mxu0 0.0
        %895 = vmatpush1.msra.mxu0 0.0
        %896 = vmatprep.subr.mxu0 0.0
        %897 = vmatpush1.msra.mxu0 0.0
        %898 = vmatprep.subr.mxu0 0.0
        %899 = vmatpush1.msra.mxu0 0.0
        %900 = vmatprep.subr.mxu0 %v858
        %901 = vmatpush1.msra.mxu0 %v856
        %902 = vmatprep.subr.mxu0 %v838
        %903 = vmatpush1.msra.mxu0 %v837
        %904 = vmatprep.subr.mxu0 0.0
        %905 = vmatpush2.msra.mxu0 0.0
        %906 = vmatprep.subr.mxu0 0.0
        %907 = vmatpush2.msra.mxu0 0.0
        %908 = vmatprep.subr.mxu0 0.0
        %909 = vmatpush2.msra.mxu0 0.0
        %910 = vmatprep.subr.mxu0 0.0
        %911 = vmatpush2.msra.mxu0 0.0
        %912 = vmatprep.subr.mxu0 0.0
        %913 = vmatpush2.msra.mxu0 0.0
        %914 = vmatprep.subr.mxu0 0.0
        %915 = vmatpush2.msra.mxu0 0.0
        %916 = vmatprep.subr.mxu0 0.0
        %917 = vmatpush2.msra.mxu0 0.0
        %918 = vmatprep.subr.mxu0 0.0
        %919 = vmatpush2.msra.mxu0 0.0
        %920 = vmatprep.subr.mxu0 0.0
        %921 = vmatpush2.msra.mxu0 0.0
        %922 = vmatprep.subr.mxu0 0.0
        %923 = vmatpush2.msra.mxu0 0.0
        %924 = vmatprep.subr.mxu0 0.0
        %925 = vmatpush2.msra.mxu0 0.0
        %926 = vmatprep.subr.mxu0 0.0
        %927 = vmatpush2.msra.mxu0 0.0
        %928 = vmatprep.subr.mxu0 0.0
        %929 = vmatpush2.msra.mxu0 0.0
        %930 = vmatprep.subr.mxu0 0.0
        %931 = vmatpush2.msra.mxu0 0.0
        %932 = vmatprep.subr.mxu0 0.0
        %933 = vmatpush2.msra.mxu0 0.0
        %934 = vmatprep.subr.mxu0 0.0
        %935 = vmatpush2.msra.mxu0 0.0
        %936 = vmatprep.mubr.f32.mxu0 0.0
        %937 = vmatmul.mubr.f32.gmra.mxu0 %v854
        %v938 = vpop.f32.mrf.mxu0
        %v939 = vadd.f32 %v850, %v938
        %v940 = vpop.f32.mrf.mxu0
        %v941 = vadd.f32 %v850, %v940
        %942 = vdwg.mxu0
        %943 = vmatprep.subr.mxu0 0.0
        %944 = vmatpush1.msra.mxu0 0.0
        %945 = vmatprep.subr.mxu0 0.0
        %946 = vmatpush1.msra.mxu0 0.0
        %947 = vmatprep.subr.mxu0 0.0
        %948 = vmatpush1.msra.mxu0 0.0
        %949 = vmatprep.subr.mxu0 0.0
        %950 = vmatpush1.msra.mxu0 0.0
        %951 = vmatprep.subr.mxu0 0.0
        %952 = vmatpush1.msra.mxu0 0.0
        %953 = vmatprep.subr.mxu0 0.0
        %954 = vmatpush1.msra.mxu0 0.0
        %955 = vmatprep.subr.mxu0 0.0
        %956 = vmatpush1.msra.mxu0 0.0
        %957 = vmatprep.subr.mxu0 0.0
        %958 = vmatpush1.msra.mxu0 0.0
        %959 = vmatprep.subr.mxu0 0.0
        %960 = vmatpush1.msra.mxu0 0.0
        %961 = vmatprep.subr.mxu0 0.0
        %962 = vmatpush1.msra.mxu0 0.0
        %963 = vmatprep.subr.mxu0 0.0
        %964 = vmatpush1.msra.mxu0 0.0
        %965 = vmatprep.subr.mxu0 0.0
        %966 = vmatpush1.msra.mxu0 0.0
        %967 = vmatprep.subr.mxu0 0.0
        %968 = vmatpush1.msra.mxu0 0.0
        %969 = vmatprep.subr.mxu0 0.0
        %970 = vmatpush1.msra.mxu0 0.0
        %971 = vmatprep.subr.mxu0 %v862
        %972 = vmatpush1.msra.mxu0 %v860
        %973 = vmatprep.subr.mxu0 %v840
        %974 = vmatpush1.msra.mxu0 %v839
        %975 = vmatprep.subr.mxu0 0.0
        %976 = vmatpush2.msra.mxu0 0.0
        %977 = vmatprep.subr.mxu0 0.0
        %978 = vmatpush2.msra.mxu0 0.0
        %979 = vmatprep.subr.mxu0 0.0
        %980 = vmatpush2.msra.mxu0 0.0
        %981 = vmatprep.subr.mxu0 0.0
        %982 = vmatpush2.msra.mxu0 0.0
        %983 = vmatprep.subr.mxu0 0.0
        %984 = vmatpush2.msra.mxu0 0.0
        %985 = vmatprep.subr.mxu0 0.0
        %986 = vmatpush2.msra.mxu0 0.0
        %987 = vmatprep.subr.mxu0 0.0
        %988 = vmatpush2.msra.mxu0 0.0
        %989 = vmatprep.subr.mxu0 0.0
        %990 = vmatpush2.msra.mxu0 0.0
        %991 = vmatprep.subr.mxu0 0.0
        %992 = vmatpush2.msra.mxu0 0.0
        %993 = vmatprep.subr.mxu0 0.0
        %994 = vmatpush2.msra.mxu0 0.0
        %995 = vmatprep.subr.mxu0 0.0
        %996 = vmatpush2.msra.mxu0 0.0
        %997 = vmatprep.subr.mxu0 0.0
        %998 = vmatpush2.msra.mxu0 0.0
        %999 = vmatprep.subr.mxu0 0.0
        %1000 = vmatpush2.msra.mxu0 0.0
        %1001 = vmatprep.subr.mxu0 0.0
        %1002 = vmatpush2.msra.mxu0 0.0
        %1003 = vmatprep.subr.mxu0 0.0
        %1004 = vmatpush2.msra.mxu0 0.0
        %1005 = vmatprep.subr.mxu0 0.0
        %1006 = vmatpush2.msra.mxu0 0.0
        %1007 = vmatprep.mubr.f32.mxu0 0.0
        %1008 = vmatmul.mubr.f32.gmra.mxu0 %v854
        %v1009 = vpop.f32.mrf.mxu0
        %v1010 = vadd.f32 %v850, %v1009
        %v1011 = vpop.f32.mrf.mxu0
        %v1012 = vadd.f32 %v850, %v1011
        %1013 = vdwg.mxu0
        %1014 = vmatprep.subr.mxu0 0.0
        %1015 = vmatpush1.msra.mxu0 0.0
        %1016 = vmatprep.subr.mxu0 0.0
        %1017 = vmatpush1.msra.mxu0 0.0
        %1018 = vmatprep.subr.mxu0 0.0
        %1019 = vmatpush1.msra.mxu0 0.0
        %1020 = vmatprep.subr.mxu0 0.0
        %1021 = vmatpush1.msra.mxu0 0.0
        %1022 = vmatprep.subr.mxu0 0.0
        %1023 = vmatpush1.msra.mxu0 0.0
        %1024 = vmatprep.subr.mxu0 0.0
        %1025 = vmatpush1.msra.mxu0 0.0
        %1026 = vmatprep.subr.mxu0 0.0
        %1027 = vmatpush1.msra.mxu0 0.0
        %1028 = vmatprep.subr.mxu0 0.0
        %1029 = vmatpush1.msra.mxu0 0.0
        %1030 = vmatprep.subr.mxu0 0.0
        %1031 = vmatpush1.msra.mxu0 0.0
        %1032 = vmatprep.subr.mxu0 0.0
        %1033 = vmatpush1.msra.mxu0 0.0
        %1034 = vmatprep.subr.mxu0 0.0
        %1035 = vmatpush1.msra.mxu0 0.0
        %1036 = vmatprep.subr.mxu0 0.0
        %1037 = vmatpush1.msra.mxu0 0.0
        %1038 = vmatprep.subr.mxu0 0.0
        %1039 = vmatpush1.msra.mxu0 0.0
        %1040 = vmatprep.subr.mxu0 0.0
        %1041 = vmatpush1.msra.mxu0 0.0
        %1042 = vmatprep.subr.mxu0 %v866
        %1043 = vmatpush1.msra.mxu0 %v864
        %1044 = vmatprep.subr.mxu0 %v842
        %1045 = vmatpush1.msra.mxu0 %v841
        %1046 = vmatprep.subr.mxu0 0.0
        %1047 = vmatpush2.msra.mxu0 0.0
        %1048 = vmatprep.subr.mxu0 0.0
        %1049 = vmatpush2.msra.mxu0 0.0
        %1050 = vmatprep.subr.mxu0 0.0
        %1051 = vmatpush2.msra.mxu0 0.0
        %1052 = vmatprep.subr.mxu0 0.0
        %1053 = vmatpush2.msra.mxu0 0.0
        %1054 = vmatprep.subr.mxu0 0.0
        %1055 = vmatpush2.msra.mxu0 0.0
        %1056 = vmatprep.subr.mxu0 0.0
        %1057 = vmatpush2.msra.mxu0 0.0
        %1058 = vmatprep.subr.mxu0 0.0
        %1059 = vmatpush2.msra.mxu0 0.0
        %1060 = vmatprep.subr.mxu0 0.0
        %1061 = vmatpush2.msra.mxu0 0.0
        %1062 = vmatprep.subr.mxu0 0.0
        %1063 = vmatpush2.msra.mxu0 0.0
        %1064 = vmatprep.subr.mxu0 0.0
        %1065 = vmatpush2.msra.mxu0 0.0
        %1066 = vmatprep.subr.mxu0 0.0
        %1067 = vmatpush2.msra.mxu0 0.0
        %1068 = vmatprep.subr.mxu0 0.0
        %1069 = vmatpush2.msra.mxu0 0.0
        %1070 = vmatprep.subr.mxu0 0.0
        %1071 = vmatpush2.msra.mxu0 0.0
        %1072 = vmatprep.subr.mxu0 0.0
        %1073 = vmatpush2.msra.mxu0 0.0
        %1074 = vmatprep.subr.mxu0 0.0
        %1075 = vmatpush2.msra.mxu0 0.0
        %1076 = vmatprep.subr.mxu0 0.0
        %1077 = vmatpush2.msra.mxu0 0.0
        %1078 = vmatprep.mubr.f32.mxu0 0.0
        %1079 = vmatmul.mubr.f32.gmra.mxu0 %v854
        %v1080 = vpop.f32.mrf.mxu0
        %v1081 = vadd.f32 %v850, %v1080
        %v1082 = vpop.f32.mrf.mxu0
        %v1083 = vadd.f32 %v850, %v1082
        %1084 = vdwg.mxu0
        %1085 = vmatprep.subr.mxu0 0.0
        %1086 = vmatpush1.msra.mxu0 0.0
        %1087 = vmatprep.subr.mxu0 0.0
        %1088 = vmatpush1.msra.mxu0 0.0
        %1089 = vmatprep.subr.mxu0 0.0
        %1090 = vmatpush1.msra.mxu0 0.0
        %1091 = vmatprep.subr.mxu0 0.0
        %1092 = vmatpush1.msra.mxu0 0.0
        %1093 = vmatprep.subr.mxu0 0.0
        %1094 = vmatpush1.msra.mxu0 0.0
        %1095 = vmatprep.subr.mxu0 0.0
        %1096 = vmatpush1.msra.mxu0 0.0
        %1097 = vmatprep.subr.mxu0 0.0
        %1098 = vmatpush1.msra.mxu0 0.0
        %1099 = vmatprep.subr.mxu0 0.0
        %1100 = vmatpush1.msra.mxu0 0.0
        %1101 = vmatprep.subr.mxu0 0.0
        %1102 = vmatpush1.msra.mxu0 0.0
        %1103 = vmatprep.subr.mxu0 0.0
        %1104 = vmatpush1.msra.mxu0 0.0
        %1105 = vmatprep.subr.mxu0 0.0
        %1106 = vmatpush1.msra.mxu0 0.0
        %1107 = vmatprep.subr.mxu0 0.0
        %1108 = vmatpush1.msra.mxu0 0.0
        %1109 = vmatprep.subr.mxu0 0.0
        %1110 = vmatpush1.msra.mxu0 0.0
        %1111 = vmatprep.subr.mxu0 0.0
        %1112 = vmatpush1.msra.mxu0 0.0
        %1113 = vmatprep.subr.mxu0 %v870
        %1114 = vmatpush1.msra.mxu0 %v868
        %1115 = vmatprep.subr.mxu0 %v844
        %1116 = vmatpush1.msra.mxu0 %v843
        %1117 = vmatprep.subr.mxu0 0.0
        %1118 = vmatpush2.msra.mxu0 0.0
        %1119 = vmatprep.subr.mxu0 0.0
        %1120 = vmatpush2.msra.mxu0 0.0
        %1121 = vmatprep.subr.mxu0 0.0
        %1122 = vmatpush2.msra.mxu0 0.0
        %1123 = vmatprep.subr.mxu0 0.0
        %1124 = vmatpush2.msra.mxu0 0.0
        %1125 = vmatprep.subr.mxu0 0.0
        %1126 = vmatpush2.msra.mxu0 0.0
        %1127 = vmatprep.subr.mxu0 0.0
        %1128 = vmatpush2.msra.mxu0 0.0
        %1129 = vmatprep.subr.mxu0 0.0
        %1130 = vmatpush2.msra.mxu0 0.0
        %1131 = vmatprep.subr.mxu0 0.0
        %1132 = vmatpush2.msra.mxu0 0.0
        %1133 = vmatprep.subr.mxu0 0.0
        %1134 = vmatpush2.msra.mxu0 0.0
        %1135 = vmatprep.subr.mxu0 0.0
        %1136 = vmatpush2.msra.mxu0 0.0
        %1137 = vmatprep.subr.mxu0 0.0
        %1138 = vmatpush2.msra.mxu0 0.0
        %1139 = vmatprep.subr.mxu0 0.0
        %1140 = vmatpush2.msra.mxu0 0.0
        %1141 = vmatprep.subr.mxu0 0.0
        %1142 = vmatpush2.msra.mxu0 0.0
        %1143 = vmatprep.subr.mxu0 0.0
        %1144 = vmatpush2.msra.mxu0 0.0
        %1145 = vmatprep.subr.mxu0 0.0
        %1146 = vmatpush2.msra.mxu0 0.0
        %1147 = vmatprep.subr.mxu0 0.0
        %1148 = vmatpush2.msra.mxu0 0.0
        %1149 = vmatprep.mubr.f32.mxu0 0.0
        %1150 = vmatmul.mubr.f32.gmra.mxu0 %v854
        %v1151 = vpop.f32.mrf.mxu0
        %v1152 = vadd.f32 %v850, %v1151
        %v1153 = vpop.f32.mrf.mxu0
        %v1154 = vadd.f32 %v850, %v1153
        %1155 = vdwg.mxu0
        %v1156 = vmax.f32 %v939, 0.0
        %v1157 = vmax.f32 %v941, 0.0
        %v1158 = vmax.f32 %v1010, 0.0
        %v1159 = vmax.f32 %v1012, 0.0
        %v1160 = vmax.f32 %v1081, 0.0
        %v1161 = vmax.f32 %v1083, 0.0
        %v1162 = vmax.f32 %v1152, 0.0
        %v1163 = vmax.f32 %v1154, 0.0
        %v1164 = vld [vmem:[%s11] sm:$0xff]
        %v1166 = vlaneseq
        %v1167 = vshrl.u32 %v1166, 7
        %v1168 = vsub.s32 0, %v1167
        %v1169 = vrot.slane %v1164, %v1168
        %v1170 = vlaneseq
        %v1171 = vshrl.u32 %v1170, 7
        %v1172 = vsub.s32 1, %v1171
        %v1173 = vrot.slane %v1164, %v1172
        %v1174 = vlaneseq
        %v1175 = vshrl.u32 %v1174, 7
        %v1176 = vsub.s32 2, %v1175
        %v1177 = vrot.slane %v1164, %v1176
        %v1178 = vlaneseq
        %v1179 = vshrl.u32 %v1178, 7
        %v1180 = vsub.s32 3, %v1179
        %v1181 = vrot.slane %v1164, %v1180
        %v1182 = vlaneseq
        %v1183 = vshrl.u32 %v1182, 7
        %v1184 = vsub.s32 4, %v1183
        %v1185 = vrot.slane %v1164, %v1184
        %v1186 = vlaneseq
        %v1187 = vshrl.u32 %v1186, 7
        %v1188 = vsub.s32 5, %v1187
        %v1189 = vrot.slane %v1164, %v1188
        %v1190 = vlaneseq
        %v1191 = vshrl.u32 %v1190, 7
        %v1192 = vsub.s32 6, %v1191
        %v1193 = vrot.slane %v1164, %v1192
        %v1194 = vlaneseq
        %v1195 = vshrl.u32 %v1194, 7
        %v1196 = vsub.s32 7, %v1195
        %v1197 = vrot.slane %v1164, %v1196
        %v1206 = vmul.f32 %v1156, %v1169
        %v1207 = vmul.f32 %v1157, %v1173
        %v1208 = vmul.f32 %v1158, %v1177
        %v1209 = vmul.f32 %v1159, %v1181
        %v1210 = vmul.f32 %v1160, %v1185
        %v1211 = vmul.f32 %v1161, %v1189
        %v1212 = vmul.f32 %v1162, %v1193
        %v1213 = vmul.f32 %v1163, %v1197
        %1222 = vrot.lane.b32.xlu0 %v1206, 31
        %v1223 = vpop.permute.xlu0 %1222
        %1224 = vrot.lane.b32.xlu0 %v1207, 31
        %v1225 = vpop.permute.xlu0 %1224
        %1226 = vrot.lane.b32.xlu0 %v1208, 31
        %v1227 = vpop.permute.xlu0 %1226
        %1228 = vrot.lane.b32.xlu0 %v1209, 31
        %v1229 = vpop.permute.xlu0 %1228
        %1230 = vrot.lane.b32.xlu0 %v1210, 31
        %v1231 = vpop.permute.xlu0 %1230
        %1232 = vrot.lane.b32.xlu0 %v1211, 31
        %v1233 = vpop.permute.xlu0 %1232
        %1234 = vrot.lane.b32.xlu0 %v1212, 31
        %v1235 = vpop.permute.xlu0 %1234
        %1236 = vrot.lane.b32.xlu0 %v1213, 31
        %v1237 = vpop.permute.xlu0 %1236
        %vm1238 = vcmask 252928
        %v1239 = vsel %vm1238, %v1223, %v1225
        %v1240 = vsel %vm1238, %v1225, %v1227
        %v1241 = vsel %vm1238, %v1227, %v1229
        %v1242 = vsel %vm1238, %v1229, %v1231
        %v1243 = vsel %vm1238, %v1231, %v1233
        %v1244 = vsel %vm1238, %v1233, %v1235
        %v1245 = vsel %vm1238, %v1235, %v1237
        %v1254 = vsel %vm1238, 0.0, %v1223
        %vm1255 = vcmask 285696
        %v1256 = vsel %vm1255, %v1245, 0.0
        %1259 = vrot.lane.b32.xlu0 %v1254, 127
        %v1260 = vpop.permute.xlu0 %1259
        %1261 = vrot.lane.b32.xlu0 %v1239, 127
        %v1262 = vpop.permute.xlu0 %1261
        %1263 = vrot.lane.b32.xlu0 %v1240, 127
        %v1264 = vpop.permute.xlu0 %1263
        %1265 = vrot.lane.b32.xlu0 %v1241, 127
        %v1266 = vpop.permute.xlu0 %1265
        %1267 = vrot.lane.b32.xlu0 %v1242, 127
        %v1268 = vpop.permute.xlu0 %1267
        %1269 = vrot.lane.b32.xlu0 %v1243, 127
        %v1270 = vpop.permute.xlu0 %1269
        %1271 = vrot.lane.b32.xlu0 %v1244, 127
        %v1272 = vpop.permute.xlu0 %1271
        %1273 = vrot.lane.b32.xlu0 %v1256, 127
        %v1274 = vpop.permute.xlu0 %1273
        %v1275 = vsel %vm550, %v1260, %v1262
        %v1276 = vsel %vm550, %v1262, %v1264
        %v1277 = vsel %vm550, %v1264, %v1266
        %v1278 = vsel %vm550, %v1266, %v1268
        %v1279 = vsel %vm550, %v1268, %v1270
        %v1280 = vsel %vm550, %v1270, %v1272
        %v1281 = vsel %vm550, %v1272, %v1274
        %1290 = vrot.lane.b32.xlu0 %v1254, 126
        %v1291 = vpop.permute.xlu0 %1290
        %1292 = vrot.lane.b32.xlu0 %v1239, 126
        %v1293 = vpop.permute.xlu0 %1292
        %1294 = vrot.lane.b32.xlu0 %v1240, 126
        %v1295 = vpop.permute.xlu0 %1294
        %1296 = vrot.lane.b32.xlu0 %v1241, 126
        %v1297 = vpop.permute.xlu0 %1296
        %1298 = vrot.lane.b32.xlu0 %v1242, 126
        %v1299 = vpop.permute.xlu0 %1298
        %1300 = vrot.lane.b32.xlu0 %v1243, 126
        %v1301 = vpop.permute.xlu0 %1300
        %1302 = vrot.lane.b32.xlu0 %v1244, 126
        %v1303 = vpop.permute.xlu0 %1302
        %1304 = vrot.lane.b32.xlu0 %v1256, 126
        %v1305 = vpop.permute.xlu0 %1304
        %v1306 = vsel %vm582, %v1291, %v1293
        %v1307 = vsel %vm582, %v1293, %v1295
        %v1308 = vsel %vm582, %v1295, %v1297
        %v1309 = vsel %vm582, %v1297, %v1299
        %v1310 = vsel %vm582, %v1299, %v1301
        %v1311 = vsel %vm582, %v1301, %v1303
        %v1312 = vsel %vm582, %v1303, %v1305
        %1321 = vrot.lane.b32.xlu0 %v1254, 98
        %v1322 = vpop.permute.xlu0 %1321
        %1323 = vrot.lane.b32.xlu0 %v1239, 98
        %v1324 = vpop.permute.xlu0 %1323
        %1325 = vrot.lane.b32.xlu0 %v1240, 98
        %v1326 = vpop.permute.xlu0 %1325
        %1327 = vrot.lane.b32.xlu0 %v1241, 98
        %v1328 = vpop.permute.xlu0 %1327
        %1329 = vrot.lane.b32.xlu0 %v1242, 98
        %v1330 = vpop.permute.xlu0 %1329
        %1331 = vrot.lane.b32.xlu0 %v1243, 98
        %v1332 = vpop.permute.xlu0 %1331
        %1333 = vrot.lane.b32.xlu0 %v1244, 98
        %v1334 = vpop.permute.xlu0 %1333
        %1335 = vrot.lane.b32.xlu0 %v1256, 98
        %v1336 = vpop.permute.xlu0 %1335
        %v1337 = vsel %vm614, %v1322, %v1324
        %v1338 = vsel %vm614, %v1324, %v1326
        %v1339 = vsel %vm614, %v1326, %v1328
        %v1340 = vsel %vm614, %v1328, %v1330
        %v1341 = vsel %vm614, %v1330, %v1332
        %v1342 = vsel %vm614, %v1332, %v1334
        %v1343 = vsel %vm614, %v1334, %v1336
        %1352 = vrot.lane.b32.xlu0 %v1254, 97
        %v1353 = vpop.permute.xlu0 %1352
        %1354 = vrot.lane.b32.xlu0 %v1239, 97
        %v1355 = vpop.permute.xlu0 %1354
        %1356 = vrot.lane.b32.xlu0 %v1240, 97
        %v1357 = vpop.permute.xlu0 %1356
        %1358 = vrot.lane.b32.xlu0 %v1241, 97
        %v1359 = vpop.permute.xlu0 %1358
        %1360 = vrot.lane.b32.xlu0 %v1242, 97
        %v1361 = vpop.permute.xlu0 %1360
        %1362 = vrot.lane.b32.xlu0 %v1243, 97
        %v1363 = vpop.permute.xlu0 %1362
        %1364 = vrot.lane.b32.xlu0 %v1244, 97
        %v1365 = vpop.permute.xlu0 %1364
        %1366 = vrot.lane.b32.xlu0 %v1256, 97
        %v1367 = vpop.permute.xlu0 %1366
        %v1368 = vsel %vm646, %v1353, %v1355
        %v1369 = vsel %vm646, %v1355, %v1357
        %v1370 = vsel %vm646, %v1357, %v1359
        %v1371 = vsel %vm646, %v1359, %v1361
        %v1372 = vsel %vm646, %v1361, %v1363
        %v1373 = vsel %vm646, %v1363, %v1365
        %v1374 = vsel %vm646, %v1365, %v1367
        %1383 = vrot.lane.b32.xlu0 %v1254, 96
        %v1384 = vpop.permute.xlu0 %1383
        %1385 = vrot.lane.b32.xlu0 %v1239, 96
        %v1386 = vpop.permute.xlu0 %1385
        %1387 = vrot.lane.b32.xlu0 %v1240, 96
        %v1388 = vpop.permute.xlu0 %1387
        %1389 = vrot.lane.b32.xlu0 %v1241, 96
        %v1390 = vpop.permute.xlu0 %1389
        %1391 = vrot.lane.b32.xlu0 %v1242, 96
        %v1392 = vpop.permute.xlu0 %1391
        %1393 = vrot.lane.b32.xlu0 %v1243, 96
        %v1394 = vpop.permute.xlu0 %1393
        %1395 = vrot.lane.b32.xlu0 %v1244, 96
        %v1396 = vpop.permute.xlu0 %1395
        %1397 = vrot.lane.b32.xlu0 %v1256, 96
        %v1398 = vpop.permute.xlu0 %1397
        %v1399 = vsel %vm678, %v1384, %v1386
        %v1400 = vsel %vm678, %v1386, %v1388
        %v1401 = vsel %vm678, %v1388, %v1390
        %v1402 = vsel %vm678, %v1390, %v1392
        %v1403 = vsel %vm678, %v1392, %v1394
        %v1404 = vsel %vm678, %v1394, %v1396
        %v1405 = vsel %vm678, %v1396, %v1398
        %1414 = vrot.lane.b32.xlu0 %v1254, 68
        %v1415 = vpop.permute.xlu0 %1414
        %1416 = vrot.lane.b32.xlu0 %v1239, 68
        %v1417 = vpop.permute.xlu0 %1416
        %1418 = vrot.lane.b32.xlu0 %v1240, 68
        %v1419 = vpop.permute.xlu0 %1418
        %1420 = vrot.lane.b32.xlu0 %v1241, 68
        %v1421 = vpop.permute.xlu0 %1420
        %1422 = vrot.lane.b32.xlu0 %v1242, 68
        %v1423 = vpop.permute.xlu0 %1422
        %1424 = vrot.lane.b32.xlu0 %v1243, 68
        %v1425 = vpop.permute.xlu0 %1424
        %1426 = vrot.lane.b32.xlu0 %v1244, 68
        %v1427 = vpop.permute.xlu0 %1426
        %1428 = vrot.lane.b32.xlu0 %v1256, 68
        %v1429 = vpop.permute.xlu0 %1428
        %v1430 = vsel %vm710, %v1415, %v1417
        %v1431 = vsel %vm710, %v1417, %v1419
        %v1432 = vsel %vm710, %v1419, %v1421
        %v1433 = vsel %vm710, %v1421, %v1423
        %v1434 = vsel %vm710, %v1423, %v1425
        %v1435 = vsel %vm710, %v1425, %v1427
        %v1436 = vsel %vm710, %v1427, %v1429
        %1445 = vrot.lane.b32.xlu0 %v1254, 67
        %v1446 = vpop.permute.xlu0 %1445
        %1447 = vrot.lane.b32.xlu0 %v1239, 67
        %v1448 = vpop.permute.xlu0 %1447
        %1449 = vrot.lane.b32.xlu0 %v1240, 67
        %v1450 = vpop.permute.xlu0 %1449
        %1451 = vrot.lane.b32.xlu0 %v1241, 67
        %v1452 = vpop.permute.xlu0 %1451
        %1453 = vrot.lane.b32.xlu0 %v1242, 67
        %v1454 = vpop.permute.xlu0 %1453
        %1455 = vrot.lane.b32.xlu0 %v1243, 67
        %v1456 = vpop.permute.xlu0 %1455
        %1457 = vrot.lane.b32.xlu0 %v1244, 67
        %v1458 = vpop.permute.xlu0 %1457
        %1459 = vrot.lane.b32.xlu0 %v1256, 67
        %v1460 = vpop.permute.xlu0 %1459
        %v1461 = vsel %vm742, %v1446, %v1448
        %v1462 = vsel %vm742, %v1448, %v1450
        %v1463 = vsel %vm742, %v1450, %v1452
        %v1464 = vsel %vm742, %v1452, %v1454
        %v1465 = vsel %vm742, %v1454, %v1456
        %v1466 = vsel %vm742, %v1456, %v1458
        %v1467 = vsel %vm742, %v1458, %v1460
        %1476 = vrot.lane.b32.xlu0 %v1254, 66
        %v1477 = vpop.permute.xlu0 %1476
        %1478 = vrot.lane.b32.xlu0 %v1239, 66
        %v1479 = vpop.permute.xlu0 %1478
        %1480 = vrot.lane.b32.xlu0 %v1240, 66
        %v1481 = vpop.permute.xlu0 %1480
        %1482 = vrot.lane.b32.xlu0 %v1241, 66
        %v1483 = vpop.permute.xlu0 %1482
        %1484 = vrot.lane.b32.xlu0 %v1242, 66
        %v1485 = vpop.permute.xlu0 %1484
        %1486 = vrot.lane.b32.xlu0 %v1243, 66
        %v1487 = vpop.permute.xlu0 %1486
        %1488 = vrot.lane.b32.xlu0 %v1244, 66
        %v1489 = vpop.permute.xlu0 %1488
        %1490 = vrot.lane.b32.xlu0 %v1256, 66
        %v1491 = vpop.permute.xlu0 %1490
        %v1492 = vsel %vm774, %v1477, %v1479
        %v1493 = vsel %vm774, %v1479, %v1481
        %v1494 = vsel %vm774, %v1481, %v1483
        %v1495 = vsel %vm774, %v1483, %v1485
        %v1496 = vsel %vm774, %v1485, %v1487
        %v1497 = vsel %vm774, %v1487, %v1489
        %v1498 = vsel %vm774, %v1489, %v1491
        %v1507 = vld [vmem:[%s3] sm:$0xff]
        %v1508 = vld [vmem:[%s4] sm:$0xff]
        %1510 = vset.pattern.permute.xlu0 0
        %1511 = vperm.xlu0 %1510, %v1508
        %v1512 = vpop.permute.xlu0 %1511
        %vm1514 = vcmask 588800
        %v1516 = vsel %vm1514, %v1507, 0
        %1518 = vmatprep.subr.mxu0 0.0
        %1519 = vmatpush1.msra.mxu0 0.0
        %1520 = vmatprep.subr.mxu0 0.0
        %1521 = vmatpush1.msra.mxu0 0.0
        %1522 = vmatprep.subr.mxu0 0.0
        %1523 = vmatpush1.msra.mxu0 0.0
        %1524 = vmatprep.subr.mxu0 0.0
        %1525 = vmatpush1.msra.mxu0 0.0
        %1526 = vmatprep.subr.mxu0 0.0
        %1527 = vmatpush1.msra.mxu0 0.0
        %1528 = vmatprep.subr.mxu0 0.0
        %1529 = vmatpush1.msra.mxu0 0.0
        %1530 = vmatprep.subr.mxu0 0.0
        %1531 = vmatpush1.msra.mxu0 0.0
        %1532 = vmatprep.subr.mxu0 %v1493
        %1533 = vmatpush1.msra.mxu0 %v1492
        %1534 = vmatprep.subr.mxu0 %v1462
        %1535 = vmatpush1.msra.mxu0 %v1461
        %1536 = vmatprep.subr.mxu0 %v1431
        %1537 = vmatpush1.msra.mxu0 %v1430
        %1538 = vmatprep.subr.mxu0 %v1400
        %1539 = vmatpush1.msra.mxu0 %v1399
        %1540 = vmatprep.subr.mxu0 %v1369
        %1541 = vmatpush1.msra.mxu0 %v1368
        %1542 = vmatprep.subr.mxu0 %v1338
        %1543 = vmatpush1.msra.mxu0 %v1337
        %1544 = vmatprep.subr.mxu0 %v1307
        %1545 = vmatpush1.msra.mxu0 %v1306
        %1546 = vmatprep.subr.mxu0 %v1276
        %1547 = vmatpush1.msra.mxu0 %v1275
        %1548 = vmatprep.subr.mxu0 %v1239
        %1549 = vmatpush1.msra.mxu0 %v1254
        %1550 = vmatprep.subr.mxu0 0.0
        %1551 = vmatpush2.msra.mxu0 0.0
        %1552 = vmatprep.subr.mxu0 0.0
        %1553 = vmatpush2.msra.mxu0 0.0
        %1554 = vmatprep.subr.mxu0 0.0
        %1555 = vmatpush2.msra.mxu0 0.0
        %1556 = vmatprep.subr.mxu0 0.0
        %1557 = vmatpush2.msra.mxu0 0.0
        %1558 = vmatprep.subr.mxu0 0.0
        %1559 = vmatpush2.msra.mxu0 0.0
        %1560 = vmatprep.subr.mxu0 0.0
        %1561 = vmatpush2.msra.mxu0 0.0
        %1562 = vmatprep.subr.mxu0 0.0
        %1563 = vmatpush2.msra.mxu0 0.0
        %1564 = vmatprep.subr.mxu0 0.0
        %1565 = vmatpush2.msra.mxu0 0.0
        %1566 = vmatprep.subr.mxu0 0.0
        %1567 = vmatpush2.msra.mxu0 0.0
        %1568 = vmatprep.subr.mxu0 0.0
        %1569 = vmatpush2.msra.mxu0 0.0
        %1570 = vmatprep.subr.mxu0 0.0
        %1571 = vmatpush2.msra.mxu0 0.0
        %1572 = vmatprep.subr.mxu0 0.0
        %1573 = vmatpush2.msra.mxu0 0.0
        %1574 = vmatprep.subr.mxu0 0.0
        %1575 = vmatpush2.msra.mxu0 0.0
        %1576 = vmatprep.subr.mxu0 0.0
        %1577 = vmatpush2.msra.mxu0 0.0
        %1578 = vmatprep.subr.mxu0 0.0
        %1579 = vmatpush2.msra.mxu0 0.0
        %1580 = vmatprep.subr.mxu0 0.0
        %1581 = vmatpush2.msra.mxu0 0.0
        %1582 = vmatprep.mubr.f32.mxu0 0.0
        %1583 = vmatmul.mubr.f32.gmra.mxu0 %v1516
        %v1584 = vpop.f32.mrf.mxu0
        %v1585 = vadd.f32 %v1512, %v1584
        %v1586 = vpop.f32.mrf.mxu0
        %v1587 = vadd.f32 %v1512, %v1586
        %1588 = vdwg.mxu0
        %1589 = vmatprep.subr.mxu0 0.0
        %1590 = vmatpush1.msra.mxu0 0.0
        %1591 = vmatprep.subr.mxu0 0.0
        %1592 = vmatpush1.msra.mxu0 0.0
        %1593 = vmatprep.subr.mxu0 0.0
        %1594 = vmatpush1.msra.mxu0 0.0
        %1595 = vmatprep.subr.mxu0 0.0
        %1596 = vmatpush1.msra.mxu0 0.0
        %1597 = vmatprep.subr.mxu0 0.0
        %1598 = vmatpush1.msra.mxu0 0.0
        %1599 = vmatprep.subr.mxu0 0.0
        %1600 = vmatpush1.msra.mxu0 0.0
        %1601 = vmatprep.subr.mxu0 0.0
        %1602 = vmatpush1.msra.mxu0 0.0
        %1603 = vmatprep.subr.mxu0 %v1495
        %1604 = vmatpush1.msra.mxu0 %v1494
        %1605 = vmatprep.subr.mxu0 %v1464
        %1606 = vmatpush1.msra.mxu0 %v1463
        %1607 = vmatprep.subr.mxu0 %v1433
        %1608 = vmatpush1.msra.mxu0 %v1432
        %1609 = vmatprep.subr.mxu0 %v1402
        %1610 = vmatpush1.msra.mxu0 %v1401
        %1611 = vmatprep.subr.mxu0 %v1371
        %1612 = vmatpush1.msra.mxu0 %v1370
        %1613 = vmatprep.subr.mxu0 %v1340
        %1614 = vmatpush1.msra.mxu0 %v1339
        %1615 = vmatprep.subr.mxu0 %v1309
        %1616 = vmatpush1.msra.mxu0 %v1308
        %1617 = vmatprep.subr.mxu0 %v1278
        %1618 = vmatpush1.msra.mxu0 %v1277
        %1619 = vmatprep.subr.mxu0 %v1241
        %1620 = vmatpush1.msra.mxu0 %v1240
        %1621 = vmatprep.subr.mxu0 0.0
        %1622 = vmatpush2.msra.mxu0 0.0
        %1623 = vmatprep.subr.mxu0 0.0
        %1624 = vmatpush2.msra.mxu0 0.0
        %1625 = vmatprep.subr.mxu0 0.0
        %1626 = vmatpush2.msra.mxu0 0.0
        %1627 = vmatprep.subr.mxu0 0.0
        %1628 = vmatpush2.msra.mxu0 0.0
        %1629 = vmatprep.subr.mxu0 0.0
        %1630 = vmatpush2.msra.mxu0 0.0
        %1631 = vmatprep.subr.mxu0 0.0
        %1632 = vmatpush2.msra.mxu0 0.0
        %1633 = vmatprep.subr.mxu0 0.0
        %1634 = vmatpush2.msra.mxu0 0.0
        %1635 = vmatprep.subr.mxu0 0.0
        %1636 = vmatpush2.msra.mxu0 0.0
        %1637 = vmatprep.subr.mxu0 0.0
        %1638 = vmatpush2.msra.mxu0 0.0
        %1639 = vmatprep.subr.mxu0 0.0
        %1640 = vmatpush2.msra.mxu0 0.0
        %1641 = vmatprep.subr.mxu0 0.0
        %1642 = vmatpush2.msra.mxu0 0.0
        %1643 = vmatprep.subr.mxu0 0.0
        %1644 = vmatpush2.msra.mxu0 0.0
        %1645 = vmatprep.subr.mxu0 0.0
        %1646 = vmatpush2.msra.mxu0 0.0
        %1647 = vmatprep.subr.mxu0 0.0
        %1648 = vmatpush2.msra.mxu0 0.0
        %1649 = vmatprep.subr.mxu0 0.0
        %1650 = vmatpush2.msra.mxu0 0.0
        %1651 = vmatprep.subr.mxu0 0.0
        %1652 = vmatpush2.msra.mxu0 0.0
        %1653 = vmatprep.mubr.f32.mxu0 0.0
        %1654 = vmatmul.mubr.f32.gmra.mxu0 %v1516
        %v1655 = vpop.f32.mrf.mxu0
        %v1656 = vadd.f32 %v1512, %v1655
        %v1657 = vpop.f32.mrf.mxu0
        %v1658 = vadd.f32 %v1512, %v1657
        %1659 = vdwg.mxu0
        %1660 = vmatprep.subr.mxu0 0.0
        %1661 = vmatpush1.msra.mxu0 0.0
        %1662 = vmatprep.subr.mxu0 0.0
        %1663 = vmatpush1.msra.mxu0 0.0
        %1664 = vmatprep.subr.mxu0 0.0
        %1665 = vmatpush1.msra.mxu0 0.0
        %1666 = vmatprep.subr.mxu0 0.0
        %1667 = vmatpush1.msra.mxu0 0.0
        %1668 = vmatprep.subr.mxu0 0.0
        %1669 = vmatpush1.msra.mxu0 0.0
        %1670 = vmatprep.subr.mxu0 0.0
        %1671 = vmatpush1.msra.mxu0 0.0
        %1672 = vmatprep.subr.mxu0 0.0
        %1673 = vmatpush1.msra.mxu0 0.0
        %1674 = vmatprep.subr.mxu0 %v1497
        %1675 = vmatpush1.msra.mxu0 %v1496
        %1676 = vmatprep.subr.mxu0 %v1466
        %1677 = vmatpush1.msra.mxu0 %v1465
        %1678 = vmatprep.subr.mxu0 %v1435
        %1679 = vmatpush1.msra.mxu0 %v1434
        %1680 = vmatprep.subr.mxu0 %v1404
        %1681 = vmatpush1.msra.mxu0 %v1403
        %1682 = vmatprep.subr.mxu0 %v1373
        %1683 = vmatpush1.msra.mxu0 %v1372
        %1684 = vmatprep.subr.mxu0 %v1342
        %1685 = vmatpush1.msra.mxu0 %v1341
        %1686 = vmatprep.subr.mxu0 %v1311
        %1687 = vmatpush1.msra.mxu0 %v1310
        %1688 = vmatprep.subr.mxu0 %v1280
        %1689 = vmatpush1.msra.mxu0 %v1279
        %1690 = vmatprep.subr.mxu0 %v1243
        %1691 = vmatpush1.msra.mxu0 %v1242
        %1692 = vmatprep.subr.mxu0 0.0
        %1693 = vmatpush2.msra.mxu0 0.0
        %1694 = vmatprep.subr.mxu0 0.0
        %1695 = vmatpush2.msra.mxu0 0.0
        %1696 = vmatprep.subr.mxu0 0.0
        %1697 = vmatpush2.msra.mxu0 0.0
        %1698 = vmatprep.subr.mxu0 0.0
        %1699 = vmatpush2.msra.mxu0 0.0
        %1700 = vmatprep.subr.mxu0 0.0
        %1701 = vmatpush2.msra.mxu0 0.0
        %1702 = vmatprep.subr.mxu0 0.0
        %1703 = vmatpush2.msra.mxu0 0.0
        %1704 = vmatprep.subr.mxu0 0.0
        %1705 = vmatpush2.msra.mxu0 0.0
        %1706 = vmatprep.subr.mxu0 0.0
        %1707 = vmatpush2.msra.mxu0 0.0
        %1708 = vmatprep.subr.mxu0 0.0
        %1709 = vmatpush2.msra.mxu0 0.0
        %1710 = vmatprep.subr.mxu0 0.0
        %1711 = vmatpush2.msra.mxu0 0.0
        %1712 = vmatprep.subr.mxu0 0.0
        %1713 = vmatpush2.msra.mxu0 0.0
        %1714 = vmatprep.subr.mxu0 0.0
        %1715 = vmatpush2.msra.mxu0 0.0
        %1716 = vmatprep.subr.mxu0 0.0
        %1717 = vmatpush2.msra.mxu0 0.0
        %1718 = vmatprep.subr.mxu0 0.0
        %1719 = vmatpush2.msra.mxu0 0.0
        %1720 = vmatprep.subr.mxu0 0.0
        %1721 = vmatpush2.msra.mxu0 0.0
        %1722 = vmatprep.subr.mxu0 0.0
        %1723 = vmatpush2.msra.mxu0 0.0
        %1724 = vmatprep.mubr.f32.mxu0 0.0
        %1725 = vmatmul.mubr.f32.gmra.mxu0 %v1516
        %v1726 = vpop.f32.mrf.mxu0
        %v1727 = vadd.f32 %v1512, %v1726
        %v1728 = vpop.f32.mrf.mxu0
        %v1729 = vadd.f32 %v1512, %v1728
        %1730 = vdwg.mxu0
        %1731 = vmatprep.subr.mxu0 0.0
        %1732 = vmatpush1.msra.mxu0 0.0
        %1733 = vmatprep.subr.mxu0 0.0
        %1734 = vmatpush1.msra.mxu0 0.0
        %1735 = vmatprep.subr.mxu0 0.0
        %1736 = vmatpush1.msra.mxu0 0.0
        %1737 = vmatprep.subr.mxu0 0.0
        %1738 = vmatpush1.msra.mxu0 0.0
        %1739 = vmatprep.subr.mxu0 0.0
        %1740 = vmatpush1.msra.mxu0 0.0
        %1741 = vmatprep.subr.mxu0 0.0
        %1742 = vmatpush1.msra.mxu0 0.0
        %1743 = vmatprep.subr.mxu0 0.0
        %1744 = vmatpush1.msra.mxu0 0.0
        %1745 = vmatprep.subr.mxu0 %v1491
        %1746 = vmatpush1.msra.mxu0 %v1498
        %1747 = vmatprep.subr.mxu0 %v1460
        %1748 = vmatpush1.msra.mxu0 %v1467
        %1749 = vmatprep.subr.mxu0 %v1429
        %1750 = vmatpush1.msra.mxu0 %v1436
        %1751 = vmatprep.subr.mxu0 %v1398
        %1752 = vmatpush1.msra.mxu0 %v1405
        %1753 = vmatprep.subr.mxu0 %v1367
        %1754 = vmatpush1.msra.mxu0 %v1374
        %1755 = vmatprep.subr.mxu0 %v1336
        %1756 = vmatpush1.msra.mxu0 %v1343
        %1757 = vmatprep.subr.mxu0 %v1305
        %1758 = vmatpush1.msra.mxu0 %v1312
        %1759 = vmatprep.subr.mxu0 %v1274
        %1760 = vmatpush1.msra.mxu0 %v1281
        %1761 = vmatprep.subr.mxu0 %v1256
        %1762 = vmatpush1.msra.mxu0 %v1244
        %1763 = vmatprep.subr.mxu0 0.0
        %1764 = vmatpush2.msra.mxu0 0.0
        %1765 = vmatprep.subr.mxu0 0.0
        %1766 = vmatpush2.msra.mxu0 0.0
        %1767 = vmatprep.subr.mxu0 0.0
        %1768 = vmatpush2.msra.mxu0 0.0
        %1769 = vmatprep.subr.mxu0 0.0
        %1770 = vmatpush2.msra.mxu0 0.0
        %1771 = vmatprep.subr.mxu0 0.0
        %1772 = vmatpush2.msra.mxu0 0.0
        %1773 = vmatprep.subr.mxu0 0.0
        %1774 = vmatpush2.msra.mxu0 0.0
        %1775 = vmatprep.subr.mxu0 0.0
        %1776 = vmatpush2.msra.mxu0 0.0
        %1777 = vmatprep.subr.mxu0 0.0
        %1778 = vmatpush2.msra.mxu0 0.0
        %1779 = vmatprep.subr.mxu0 0.0
        %1780 = vmatpush2.msra.mxu0 0.0
        %1781 = vmatprep.subr.mxu0 0.0
        %1782 = vmatpush2.msra.mxu0 0.0
        %1783 = vmatprep.subr.mxu0 0.0
        %1784 = vmatpush2.msra.mxu0 0.0
        %1785 = vmatprep.subr.mxu0 0.0
        %1786 = vmatpush2.msra.mxu0 0.0
        %1787 = vmatprep.subr.mxu0 0.0
        %1788 = vmatpush2.msra.mxu0 0.0
        %1789 = vmatprep.subr.mxu0 0.0
        %1790 = vmatpush2.msra.mxu0 0.0
        %1791 = vmatprep.subr.mxu0 0.0
        %1792 = vmatpush2.msra.mxu0 0.0
        %1793 = vmatprep.subr.mxu0 0.0
        %1794 = vmatpush2.msra.mxu0 0.0
        %1795 = vmatprep.mubr.f32.mxu0 0.0
        %1796 = vmatmul.mubr.f32.gmra.mxu0 %v1516
        %v1797 = vpop.f32.mrf.mxu0
        %v1798 = vadd.f32 %v1512, %v1797
        %v1799 = vpop.f32.mrf.mxu0
        %v1800 = vadd.f32 %v1512, %v1799
        %1801 = vdwg.mxu0
        %v1802 = vmax.f32 %v1585, 0.0
        %v1803 = vmax.f32 %v1587, 0.0
        %v1804 = vmax.f32 %v1656, 0.0
        %v1805 = vmax.f32 %v1658, 0.0
        %v1806 = vmax.f32 %v1727, 0.0
        %v1807 = vmax.f32 %v1729, 0.0
        %v1808 = vmax.f32 %v1798, 0.0
        %v1809 = vmax.f32 %v1800, 0.0
        %vm1810 = vcmask 31744
        %v1811 = vsel %vm1810, %v1809, 0.0
        %1820 = vrot.lane.b32.xlu0 %v1802, 127
        %v1821 = vpop.permute.xlu0 %1820
        %1822 = vrot.lane.b32.xlu0 %v1803, 127
        %v1823 = vpop.permute.xlu0 %1822
        %1824 = vrot.lane.b32.xlu0 %v1804, 127
        %v1825 = vpop.permute.xlu0 %1824
        %1826 = vrot.lane.b32.xlu0 %v1805, 127
        %v1827 = vpop.permute.xlu0 %1826
        %1828 = vrot.lane.b32.xlu0 %v1806, 127
        %v1829 = vpop.permute.xlu0 %1828
        %1830 = vrot.lane.b32.xlu0 %v1807, 127
        %v1831 = vpop.permute.xlu0 %1830
        %1832 = vrot.lane.b32.xlu0 %v1808, 127
        %v1833 = vpop.permute.xlu0 %1832
        %1834 = vrot.lane.b32.xlu0 %v1811, 127
        %v1835 = vpop.permute.xlu0 %1834
        %v1836 = vsel %vm550, %v1821, %v1823
        %v1837 = vsel %vm550, %v1823, %v1825
        %v1838 = vsel %vm550, %v1825, %v1827
        %v1839 = vsel %vm550, %v1827, %v1829
        %v1840 = vsel %vm550, %v1829, %v1831
        %v1841 = vsel %vm550, %v1831, %v1833
        %v1842 = vsel %vm550, %v1833, %v1835
        %v1851 = vmax.f32 %v1802, %v1836
        %v1852 = vmax.f32 %v1803, %v1837
        %v1853 = vmax.f32 %v1804, %v1838
        %v1854 = vmax.f32 %v1805, %v1839
        %v1855 = vmax.f32 %v1806, %v1840
        %v1856 = vmax.f32 %v1807, %v1841
        %v1857 = vmax.f32 %v1808, %v1842
        %v1858 = vmax.f32 %v1811, %v1835
        %1867 = vrot.lane.b32.xlu0 %v1851, 98
        %v1868 = vpop.permute.xlu0 %1867
        %1869 = vrot.lane.b32.xlu0 %v1852, 98
        %v1870 = vpop.permute.xlu0 %1869
        %1871 = vrot.lane.b32.xlu0 %v1853, 98
        %v1872 = vpop.permute.xlu0 %1871
        %1873 = vrot.lane.b32.xlu0 %v1854, 98
        %v1874 = vpop.permute.xlu0 %1873
        %1875 = vrot.lane.b32.xlu0 %v1855, 98
        %v1876 = vpop.permute.xlu0 %1875
        %1877 = vrot.lane.b32.xlu0 %v1856, 98
        %v1878 = vpop.permute.xlu0 %1877
        %1879 = vrot.lane.b32.xlu0 %v1857, 98
        %v1880 = vpop.permute.xlu0 %1879
        %1881 = vrot.lane.b32.xlu0 %v1858, 98
        %v1882 = vpop.permute.xlu0 %1881
        %v1883 = vsel %vm614, %v1868, %v1870
        %v1884 = vsel %vm614, %v1870, %v1872
        %v1885 = vsel %vm614, %v1872, %v1874
        %v1886 = vsel %vm614, %v1874, %v1876
        %v1887 = vsel %vm614, %v1876, %v1878
        %v1888 = vsel %vm614, %v1878, %v1880
        %v1889 = vsel %vm614, %v1880, %v1882
        %v1898 = vmax.f32 %v1851, %v1883
        %v1899 = vmax.f32 %v1852, %v1884
        %v1900 = vmax.f32 %v1853, %v1885
        %v1901 = vmax.f32 %v1854, %v1886
        %v1902 = vmax.f32 %v1855, %v1887
        %v1903 = vmax.f32 %v1856, %v1888
        %v1904 = vmax.f32 %v1857, %v1889
        %v1905 = vmax.f32 %v1858, %v1882
        %v1906 = vld [vmem:[#allocation5] sm:$0xff]
        %v1907 = vld [vmem:[#allocation5 + $0x8] sm:$0xff]
        %v1908 = vld [vmem:[#allocation5 + $0x10] sm:$0xff]
        %v1909 = vld [vmem:[#allocation5 + $0x18] sm:$0xff]
        %v1910 = vld [vmem:[#allocation5 + $0x20] sm:$0xff]
        %v1911 = vld [vmem:[#allocation5 + $0x28] sm:$0xff]
        %v1912 = vld [vmem:[#allocation5 + $0x30] sm:$0xff]
        %v1913 = vld [vmem:[#allocation5 + $0x38] sm:$0xff]
        %v1914 = vld [vmem:[#allocation5 + $0x40] sm:$0xff]
        %v1915 = vld [vmem:[#allocation5 + $0x48] sm:$0xff]
        %v1916 = vld [vmem:[#allocation5 + $0x50] sm:$0xff]
        %v1917 = vld [vmem:[#allocation5 + $0x58] sm:$0xff]
        %v1918 = vld [vmem:[#allocation5 + $0x60] sm:$0xff]
        %v1919 = vld [vmem:[#allocation5 + $0x68] sm:$0xff]
        %v1920 = vld [vmem:[#allocation5 + $0x70] sm:$0xff]
        %v1921 = vld [vmem:[#allocation5 + $0x78] sm:$0xff]
        %v1922 = vld [vmem:[#allocation5 + $0x80] sm:$0xff]
        %v1923 = vld [vmem:[#allocation5 + $0x88] sm:$0xff]
        %v1924 = vld [vmem:[#allocation5 + $0x90] sm:$0xff]
        %v1925 = vld [vmem:[#allocation5 + $0x98] sm:$0xff]
        %v1926 = vld [vmem:[#allocation5 + $0xa0] sm:$0xff]
        %v1927 = vld [vmem:[#allocation5 + $0xa8] sm:$0xff]
        %v1928 = vld [vmem:[#allocation5 + $0xb0] sm:$0xff]
        %v1929 = vld [vmem:[#allocation5 + $0xb8] sm:$0xff]
        %v1930 = vld [vmem:[#allocation5 + $0xc0] sm:$0xff]
        %v1931 = vld [vmem:[#allocation5 + $0xc8] sm:$0xff]
        %v1932 = vld [vmem:[#allocation5 + $0xd0] sm:$0xff]
        %v1933 = vld [vmem:[#allocation5 + $0xd8] sm:$0xff]
        %v1934 = vld [vmem:[#allocation5 + $0xe0] sm:$0xff]
        %v1935 = vld [vmem:[#allocation5 + $0xe8] sm:$0xff]
        %v1936 = vld [vmem:[#allocation5 + $0xf0] sm:$0xff]
        %v1937 = vld [vmem:[#allocation5 + $0xf8] sm:$0xff]
        %v1938 = vld [vmem:[#allocation5 + $0x100] sm:$0xff]
        %v1939 = vld [vmem:[#allocation5 + $0x108] sm:$0xff]
        %v1940 = vld [vmem:[#allocation5 + $0x110] sm:$0xff]
        %v1941 = vld [vmem:[#allocation5 + $0x118] sm:$0xff]
        %v1942 = vld [vmem:[#allocation5 + $0x120] sm:$0xff]
        %v1943 = vld [vmem:[#allocation5 + $0x128] sm:$0xff]
        %v1944 = vld [vmem:[#allocation5 + $0x130] sm:$0xff]
        %v1945 = vld [vmem:[#allocation5 + $0x138] sm:$0xff]
        %v1946 = vld [vmem:[#allocation5 + $0x140] sm:$0xff]
        %v1947 = vld [vmem:[#allocation5 + $0x148] sm:$0xff]
        %v1948 = vld [vmem:[#allocation5 + $0x150] sm:$0xff]
        %v1949 = vld [vmem:[#allocation5 + $0x158] sm:$0xff]
        %v1950 = vld [vmem:[#allocation5 + $0x160] sm:$0xff]
        %v1951 = vld [vmem:[#allocation5 + $0x168] sm:$0xff]
        %v1952 = vld [vmem:[#allocation5 + $0x170] sm:$0xff]
        %v1953 = vld [vmem:[#allocation5 + $0x178] sm:$0xff]
        %v1954 = vld [vmem:[#allocation5 + $0x180] sm:$0xff]
        %v1955 = vld [vmem:[#allocation5 + $0x188] sm:$0xff]
        %v1956 = vld [vmem:[#allocation5 + $0x190] sm:$0xff]
        %v1957 = vld [vmem:[#allocation5 + $0x198] sm:$0xff]
        %v1958 = vld [vmem:[#allocation5 + $0x1a0] sm:$0xff]
        %v1959 = vld [vmem:[#allocation5 + $0x1a8] sm:$0xff]
        %v1960 = vld [vmem:[#allocation5 + $0x1b0] sm:$0xff]
        %v1961 = vld [vmem:[#allocation5 + $0x1b8] sm:$0xff]
        %v1962 = vld [vmem:[#allocation5 + $0x1c0] sm:$0xff]
        %v1963 = vld [vmem:[#allocation5 + $0x1c8] sm:$0xff]
        %v1964 = vld [vmem:[#allocation5 + $0x1d0] sm:$0xff]
        %v1965 = vld [vmem:[#allocation5 + $0x1d8] sm:$0xff]
        %v1966 = vld [vmem:[#allocation5 + $0x1e0] sm:$0xff]
        %v1967 = vld [vmem:[#allocation5 + $0x1e8] sm:$0xff]
        %v1968 = vld [vmem:[#allocation5 + $0x1f0] sm:$0xff]
        %v1969 = vld [vmem:[#allocation5 + $0x1f8] sm:$0xff]
        %v1970 = vld [vmem:[#allocation5 + $0x200] sm:$0xff]
        %v1971 = vld [vmem:[#allocation5 + $0x208] sm:$0xff]
        %v1972 = vld [vmem:[#allocation5 + $0x210] sm:$0xff]
        %v1973 = vld [vmem:[#allocation5 + $0x218] sm:$0xff]
        %v1974 = vld [vmem:[#allocation5 + $0x220] sm:$0xff]
        %v1975 = vld [vmem:[#allocation5 + $0x228] sm:$0xff]
        %v1976 = vld [vmem:[#allocation5 + $0x230] sm:$0xff]
        %v1977 = vld [vmem:[#allocation5 + $0x238] sm:$0xff]
        %v1978 = vld [vmem:[#allocation5 + $0x240] sm:$0xff]
        %v1979 = vld [vmem:[#allocation5 + $0x248] sm:$0xff]
        %v1980 = vld [vmem:[#allocation5 + $0x250] sm:$0xff]
        %v1981 = vld [vmem:[#allocation5 + $0x258] sm:$0xff]
        %v1982 = vld [vmem:[#allocation5 + $0x260] sm:$0xff]
        %v1983 = vld [vmem:[#allocation5 + $0x268] sm:$0xff]
        %v1984 = vld [vmem:[#allocation5 + $0x270] sm:$0xff]
        %v1985 = vld [vmem:[#allocation5 + $0x278] sm:$0xff]
        %v1986 = vld [vmem:[#allocation5 + $0x280] sm:$0xff]
        %v1987 = vld [vmem:[#allocation5 + $0x288] sm:$0xff]
        %v1988 = vld [vmem:[#allocation5 + $0x290] sm:$0xff]
        %v1989 = vld [vmem:[#allocation5 + $0x298] sm:$0xff]
        %v1990 = vld [vmem:[#allocation5 + $0x2a0] sm:$0xff]
        %v1991 = vld [vmem:[#allocation5 + $0x2a8] sm:$0xff]
        %v1992 = vld [vmem:[#allocation5 + $0x2b0] sm:$0xff]
        %v1993 = vld [vmem:[#allocation5 + $0x2b8] sm:$0xff]
        %v1994 = vld [vmem:[#allocation5 + $0x2c0] sm:$0xff]
        %v1995 = vld [vmem:[#allocation5 + $0x2c8] sm:$0xff]
        %v1996 = vld [vmem:[#allocation5 + $0x2d0] sm:$0xff]
        %v1997 = vld [vmem:[#allocation5 + $0x2d8] sm:$0xff]
        %v1998 = vld [vmem:[#allocation5 + $0x2e0] sm:$0xff]
        %v1999 = vld [vmem:[#allocation5 + $0x2e8] sm:$0xff]
        %v2000 = vld [vmem:[#allocation5 + $0x2f0] sm:$0xff]
        %v2001 = vld [vmem:[#allocation5 + $0x2f8] sm:$0xff]
        %v2002 = vld [vmem:[#allocation5 + $0x300] sm:$0xff]
        %v2003 = vld [vmem:[#allocation5 + $0x308] sm:$0xff]
        %v2004 = vld [vmem:[#allocation5 + $0x310] sm:$0xff]
        %v2005 = vld [vmem:[#allocation5 + $0x318] sm:$0xff]
        %v2006 = vld [vmem:[#allocation5 + $0x320] sm:$0xff]
        %v2007 = vld [vmem:[#allocation5 + $0x328] sm:$0xff]
        %v2008 = vld [vmem:[#allocation5 + $0x330] sm:$0xff]
        %v2009 = vld [vmem:[#allocation5 + $0x338] sm:$0xff]
        %v2010 = vld [vmem:[#allocation5 + $0x340] sm:$0xff]
        %v2011 = vld [vmem:[#allocation5 + $0x348] sm:$0xff]
        %v2012 = vld [vmem:[#allocation5 + $0x350] sm:$0xff]
        %v2013 = vld [vmem:[#allocation5 + $0x358] sm:$0xff]
        %v2014 = vld [vmem:[#allocation5 + $0x360] sm:$0xff]
        %v2015 = vld [vmem:[#allocation5 + $0x368] sm:$0xff]
        %v2016 = vld [vmem:[#allocation5 + $0x370] sm:$0xff]
        %v2017 = vld [vmem:[#allocation5 + $0x378] sm:$0xff]
        %v2018 = vld [vmem:[#allocation5 + $0x380] sm:$0xff]
        %v2019 = vld [vmem:[#allocation5 + $0x388] sm:$0xff]
        %v2020 = vld [vmem:[#allocation5 + $0x390] sm:$0xff]
        %v2021 = vld [vmem:[#allocation5 + $0x398] sm:$0xff]
        %v2022 = vld [vmem:[#allocation5 + $0x3a0] sm:$0xff]
        %v2023 = vld [vmem:[#allocation5 + $0x3a8] sm:$0xff]
        %v2024 = vld [vmem:[#allocation5 + $0x3b0] sm:$0xff]
        %v2025 = vld [vmem:[#allocation5 + $0x3b8] sm:$0xff]
        %v2026 = vld [vmem:[#allocation5 + $0x3c0] sm:$0xff]
        %v2027 = vld [vmem:[#allocation5 + $0x3c8] sm:$0xff]
        %v2028 = vld [vmem:[#allocation5 + $0x3d0] sm:$0xff]
        %v2029 = vld [vmem:[#allocation5 + $0x3d8] sm:$0xff]
        %v2030 = vld [vmem:[#allocation5 + $0x3e0] sm:$0xff]
        %v2031 = vld [vmem:[#allocation5 + $0x3e8] sm:$0xff]
        %v2032 = vld [vmem:[#allocation5 + $0x3f0] sm:$0xff]
        %v2033 = vld [vmem:[#allocation5 + $0x3f8] sm:$0xff]
        %v2034 = vld [vmem:[#allocation5 + $0x400] sm:$0xff]
        %v2035 = vld [vmem:[#allocation5 + $0x408] sm:$0xff]
        %v2036 = vld [vmem:[#allocation5 + $0x410] sm:$0xff]
        %v2037 = vld [vmem:[#allocation5 + $0x418] sm:$0xff]
        %v2038 = vld [vmem:[#allocation5 + $0x420] sm:$0xff]
        %v2039 = vld [vmem:[#allocation5 + $0x428] sm:$0xff]
        %v2040 = vld [vmem:[#allocation5 + $0x430] sm:$0xff]
        %v2041 = vld [vmem:[#allocation5 + $0x438] sm:$0xff]
        %v2042 = vld [vmem:[#allocation5 + $0x440] sm:$0xff]
        %v2043 = vld [vmem:[#allocation5 + $0x448] sm:$0xff]
        %v2044 = vld [vmem:[#allocation5 + $0x450] sm:$0xff]
        %v2045 = vld [vmem:[#allocation5 + $0x458] sm:$0xff]
        %v2046 = vld [vmem:[#allocation5 + $0x460] sm:$0xff]
        %v2047 = vld [vmem:[#allocation5 + $0x468] sm:$0xff]
        %v2048 = vld [vmem:[#allocation5 + $0x470] sm:$0xff]
        %v2049 = vld [vmem:[#allocation5 + $0x478] sm:$0xff]
        %v2050 = vld [vmem:[#allocation5 + $0x480] sm:$0xff]
        %v2051 = vld [vmem:[#allocation5 + $0x488] sm:$0xff]
        %v2052 = vld [vmem:[#allocation5 + $0x490] sm:$0xff]
        %v2053 = vld [vmem:[#allocation5 + $0x498] sm:$0xff]
        %v2054 = vld [vmem:[#allocation5 + $0x4a0] sm:$0xff]
        %v2055 = vld [vmem:[#allocation5 + $0x4a8] sm:$0xff]
        %v2056 = vld [vmem:[#allocation5 + $0x4b0] sm:$0xff]
        %v2057 = vld [vmem:[#allocation5 + $0x4b8] sm:$0xff]
        %v2058 = vld [vmem:[#allocation5 + $0x4c0] sm:$0xff]
        %v2059 = vld [vmem:[#allocation5 + $0x4c8] sm:$0xff]
        %v2060 = vld [vmem:[#allocation5 + $0x4d0] sm:$0xff]
        %v2061 = vld [vmem:[#allocation5 + $0x4d8] sm:$0xff]
        %v2062 = vld [vmem:[#allocation5 + $0x4e0] sm:$0xff]
        %v2063 = vld [vmem:[#allocation5 + $0x4e8] sm:$0xff]
        %v2064 = vld [vmem:[#allocation5 + $0x4f0] sm:$0xff]
        %v2065 = vld [vmem:[#allocation5 + $0x4f8] sm:$0xff]
        %v2066 = vld [vmem:[#allocation5 + $0x500] sm:$0xff]
        %v2067 = vld [vmem:[#allocation5 + $0x508] sm:$0xff]
        %v2068 = vld [vmem:[#allocation5 + $0x510] sm:$0xff]
        %v2069 = vld [vmem:[#allocation5 + $0x518] sm:$0xff]
        %v2070 = vld [vmem:[#allocation5 + $0x520] sm:$0xff]
        %v2071 = vld [vmem:[#allocation5 + $0x528] sm:$0xff]
        %v2072 = vld [vmem:[#allocation5 + $0x530] sm:$0xff]
        %v2073 = vld [vmem:[#allocation5 + $0x538] sm:$0xff]
        %v2074 = vld [vmem:[#allocation5 + $0x540] sm:$0xff]
        %v2075 = vld [vmem:[#allocation5 + $0x548] sm:$0xff]
        %v2076 = vld [vmem:[#allocation5 + $0x550] sm:$0xff]
        %v2077 = vld [vmem:[#allocation5 + $0x558] sm:$0xff]
        %v2078 = vld [vmem:[#allocation5 + $0x560] sm:$0xff]
        %v2079 = vld [vmem:[#allocation5 + $0x568] sm:$0xff]
        %v2080 = vld [vmem:[#allocation5 + $0x570] sm:$0xff]
        %v2081 = vld [vmem:[#allocation5 + $0x578] sm:$0xff]
        %v2082 = vld [vmem:[#allocation5 + $0x580] sm:$0xff]
        %v2083 = vld [vmem:[#allocation5 + $0x588] sm:$0xff]
        %v2084 = vld [vmem:[#allocation5 + $0x590] sm:$0xff]
        %v2085 = vld [vmem:[#allocation5 + $0x598] sm:$0xff]
        %v2086 = vld [vmem:[#allocation5 + $0x5a0] sm:$0xff]
        %v2087 = vld [vmem:[#allocation5 + $0x5a8] sm:$0xff]
        %v2088 = vld [vmem:[#allocation5 + $0x5b0] sm:$0xff]
        %v2089 = vld [vmem:[#allocation5 + $0x5b8] sm:$0xff]
        %v2090 = vld [vmem:[#allocation5 + $0x5c0] sm:$0xff]
        %v2091 = vld [vmem:[#allocation5 + $0x5c8] sm:$0xff]
        %v2092 = vld [vmem:[#allocation5 + $0x5d0] sm:$0xff]
        %v2093 = vld [vmem:[#allocation5 + $0x5d8] sm:$0xff]
        %v2094 = vld [vmem:[#allocation5 + $0x5e0] sm:$0xff]
        %v2095 = vld [vmem:[#allocation5 + $0x5e8] sm:$0xff]
        %v2096 = vld [vmem:[#allocation5 + $0x5f0] sm:$0xff]
        %v2097 = vld [vmem:[#allocation5 + $0x5f8] sm:$0xff]
        %v2098 = vld [vmem:[#allocation5 + $0x600] sm:$0xff]
        %v2099 = vld [vmem:[#allocation5 + $0x608] sm:$0xff]
        %v2100 = vld [vmem:[#allocation5 + $0x610] sm:$0xff]
        %v2101 = vld [vmem:[#allocation5 + $0x618] sm:$0xff]
        %v2102 = vld [vmem:[#allocation5 + $0x620] sm:$0xff]
        %v2103 = vld [vmem:[#allocation5 + $0x628] sm:$0xff]
        %v2104 = vld [vmem:[#allocation5 + $0x630] sm:$0xff]
        %v2105 = vld [vmem:[#allocation5 + $0x638] sm:$0xff]
        %v2106 = vld [vmem:[#allocation5 + $0x640] sm:$0xff]
        %v2107 = vld [vmem:[#allocation5 + $0x648] sm:$0xff]
        %v2108 = vld [vmem:[#allocation5 + $0x650] sm:$0xff]
        %v2109 = vld [vmem:[#allocation5 + $0x658] sm:$0xff]
        %v2110 = vld [vmem:[#allocation5 + $0x660] sm:$0xff]
        %v2111 = vld [vmem:[#allocation5 + $0x668] sm:$0xff]
        %v2112 = vld [vmem:[#allocation5 + $0x670] sm:$0xff]
        %v2113 = vld [vmem:[#allocation5 + $0x678] sm:$0xff]
        %v2114 = vld [vmem:[#allocation5 + $0x680] sm:$0xff]
        %v2115 = vld [vmem:[#allocation5 + $0x688] sm:$0xff]
        %v2116 = vld [vmem:[#allocation5 + $0x690] sm:$0xff]
        %v2117 = vld [vmem:[#allocation5 + $0x698] sm:$0xff]
        %v2118 = vld [vmem:[#allocation5 + $0x6a0] sm:$0xff]
        %v2119 = vld [vmem:[#allocation5 + $0x6a8] sm:$0xff]
        %v2120 = vld [vmem:[#allocation5 + $0x6b0] sm:$0xff]
        %v2121 = vld [vmem:[#allocation5 + $0x6b8] sm:$0xff]
        %v2122 = vld [vmem:[#allocation5 + $0x6c0] sm:$0xff]
        %v2123 = vld [vmem:[#allocation5 + $0x6c8] sm:$0xff]
        %v2124 = vld [vmem:[#allocation5 + $0x6d0] sm:$0xff]
        %v2125 = vld [vmem:[#allocation5 + $0x6d8] sm:$0xff]
        %v2126 = vld [vmem:[#allocation5 + $0x6e0] sm:$0xff]
        %v2127 = vld [vmem:[#allocation5 + $0x6e8] sm:$0xff]
        %v2128 = vld [vmem:[#allocation5 + $0x6f0] sm:$0xff]
        %v2129 = vld [vmem:[#allocation5 + $0x6f8] sm:$0xff]
        %v2130 = vld [vmem:[#allocation5 + $0x700] sm:$0xf]
        %v2131 = vld [vmem:[#allocation5 + $0x708] sm:$0xf]
        %v2133 = vsel %vm1810, %v1905, 0
        %v2136 = vsel %vm809, %v2130, 0
        %v2139 = vsel %vm809, %v2131, 0
        %2141 = vmatprep.subr.mxu0 %v1937
        %2142 = vmatpush1.msra.mxu0 %v1936
        %2143 = vmatprep.subr.mxu0 %v1935
        %2144 = vmatpush1.msra.mxu0 %v1934
        %2145 = vmatprep.subr.mxu0 %v1933
        %2146 = vmatpush1.msra.mxu0 %v1932
        %2147 = vmatprep.subr.mxu0 %v1931
        %2148 = vmatpush1.msra.mxu0 %v1930
        %2149 = vmatprep.subr.mxu0 %v1929
        %2150 = vmatpush1.msra.mxu0 %v1928
        %2151 = vmatprep.subr.mxu0 %v1927
        %2152 = vmatpush1.msra.mxu0 %v1926
        %2153 = vmatprep.subr.mxu0 %v1925
        %2154 = vmatpush1.msra.mxu0 %v1924
        %2155 = vmatprep.subr.mxu0 %v1923
        %2156 = vmatpush1.msra.mxu0 %v1922
        %2157 = vmatprep.subr.mxu0 %v1921
        %2158 = vmatpush1.msra.mxu0 %v1920
        %2159 = vmatprep.subr.mxu0 %v1919
        %2160 = vmatpush1.msra.mxu0 %v1918
        %2161 = vmatprep.subr.mxu0 %v1917
        %2162 = vmatpush1.msra.mxu0 %v1916
        %2163 = vmatprep.subr.mxu0 %v1915
        %2164 = vmatpush1.msra.mxu0 %v1914
        %2165 = vmatprep.subr.mxu0 %v1913
        %2166 = vmatpush1.msra.mxu0 %v1912
        %2167 = vmatprep.subr.mxu0 %v1911
        %2168 = vmatpush1.msra.mxu0 %v1910
        %2169 = vmatprep.subr.mxu0 %v1909
        %2170 = vmatpush1.msra.mxu0 %v1908
        %2171 = vmatprep.subr.mxu0 %v1907
        %2172 = vmatpush1.msra.mxu0 %v1906
        %2173 = vmatprep.subr.mxu0 %v1969
        %2174 = vmatpush2.msra.mxu0 %v1968
        %2175 = vmatprep.subr.mxu0 %v1967
        %2176 = vmatpush2.msra.mxu0 %v1966
        %2177 = vmatprep.subr.mxu0 %v1965
        %2178 = vmatpush2.msra.mxu0 %v1964
        %2179 = vmatprep.subr.mxu0 %v1963
        %2180 = vmatpush2.msra.mxu0 %v1962
        %2181 = vmatprep.subr.mxu0 %v1961
        %2182 = vmatpush2.msra.mxu0 %v1960
        %2183 = vmatprep.subr.mxu0 %v1959
        %2184 = vmatpush2.msra.mxu0 %v1958
        %2185 = vmatprep.subr.mxu0 %v1957
        %2186 = vmatpush2.msra.mxu0 %v1956
        %2187 = vmatprep.subr.mxu0 %v1955
        %2188 = vmatpush2.msra.mxu0 %v1954
        %2189 = vmatprep.subr.mxu0 %v1953
        %2190 = vmatpush2.msra.mxu0 %v1952
        %2191 = vmatprep.subr.mxu0 %v1951
        %2192 = vmatpush2.msra.mxu0 %v1950
        %2193 = vmatprep.subr.mxu0 %v1949
        %2194 = vmatpush2.msra.mxu0 %v1948
        %2195 = vmatprep.subr.mxu0 %v1947
        %2196 = vmatpush2.msra.mxu0 %v1946
        %2197 = vmatprep.subr.mxu0 %v1945
        %2198 = vmatpush2.msra.mxu0 %v1944
        %2199 = vmatprep.subr.mxu0 %v1943
        %2200 = vmatpush2.msra.mxu0 %v1942
        %2201 = vmatprep.subr.mxu0 %v1941
        %2202 = vmatpush2.msra.mxu0 %v1940
        %2203 = vmatprep.subr.mxu0 %v1939
        %2204 = vmatpush2.msra.mxu0 %v1938
        %2205 = vmatprep.mubr.f32.mxu0 %v1899
        %2206 = vmatmul.mubr.f32.gmra.mxu0 %v1898
        %v2207 = vpop.f32.mrf.mxu0
        %v2208 = vadd.f32 0.0, %v2207
        %v2209 = vpop.f32.mrf.mxu0
        %v2210 = vadd.f32 0.0, %v2209
        %2211 = vdwg.mxu0
        %2212 = vmatprep.subr.mxu0 %v2001
        %2213 = vmatpush1.msra.mxu0 %v2000
        %2214 = vmatprep.subr.mxu0 %v1999
        %2215 = vmatpush1.msra.mxu0 %v1998
        %2216 = vmatprep.subr.mxu0 %v1997
        %2217 = vmatpush1.msra.mxu0 %v1996
        %2218 = vmatprep.subr.mxu0 %v1995
        %2219 = vmatpush1.msra.mxu0 %v1994
        %2220 = vmatprep.subr.mxu0 %v1993
        %2221 = vmatpush1.msra.mxu0 %v1992
        %2222 = vmatprep.subr.mxu0 %v1991
        %2223 = vmatpush1.msra.mxu0 %v1990
        %2224 = vmatprep.subr.mxu0 %v1989
        %2225 = vmatpush1.msra.mxu0 %v1988
        %2226 = vmatprep.subr.mxu0 %v1987
        %2227 = vmatpush1.msra.mxu0 %v1986
        %2228 = vmatprep.subr.mxu0 %v1985
        %2229 = vmatpush1.msra.mxu0 %v1984
        %2230 = vmatprep.subr.mxu0 %v1983
        %2231 = vmatpush1.msra.mxu0 %v1982
        %2232 = vmatprep.subr.mxu0 %v1981
        %2233 = vmatpush1.msra.mxu0 %v1980
        %2234 = vmatprep.subr.mxu0 %v1979
        %2235 = vmatpush1.msra.mxu0 %v1978
        %2236 = vmatprep.subr.mxu0 %v1977
        %2237 = vmatpush1.msra.mxu0 %v1976
        %2238 = vmatprep.subr.mxu0 %v1975
        %2239 = vmatpush1.msra.mxu0 %v1974
        %2240 = vmatprep.subr.mxu0 %v1973
        %2241 = vmatpush1.msra.mxu0 %v1972
        %2242 = vmatprep.subr.mxu0 %v1971
        %2243 = vmatpush1.msra.mxu0 %v1970
        %2244 = vmatprep.subr.mxu0 %v2033
        %2245 = vmatpush2.msra.mxu0 %v2032
        %2246 = vmatprep.subr.mxu0 %v2031
        %2247 = vmatpush2.msra.mxu0 %v2030
        %2248 = vmatprep.subr.mxu0 %v2029
        %2249 = vmatpush2.msra.mxu0 %v2028
        %2250 = vmatprep.subr.mxu0 %v2027
        %2251 = vmatpush2.msra.mxu0 %v2026
        %2252 = vmatprep.subr.mxu0 %v2025
        %2253 = vmatpush2.msra.mxu0 %v2024
        %2254 = vmatprep.subr.mxu0 %v2023
        %2255 = vmatpush2.msra.mxu0 %v2022
        %2256 = vmatprep.subr.mxu0 %v2021
        %2257 = vmatpush2.msra.mxu0 %v2020
        %2258 = vmatprep.subr.mxu0 %v2019
        %2259 = vmatpush2.msra.mxu0 %v2018
        %2260 = vmatprep.subr.mxu0 %v2017
        %2261 = vmatpush2.msra.mxu0 %v2016
        %2262 = vmatprep.subr.mxu0 %v2015
        %2263 = vmatpush2.msra.mxu0 %v2014
        %2264 = vmatprep.subr.mxu0 %v2013
        %2265 = vmatpush2.msra.mxu0 %v2012
        %2266 = vmatprep.subr.mxu0 %v2011
        %2267 = vmatpush2.msra.mxu0 %v2010
        %2268 = vmatprep.subr.mxu0 %v2009
        %2269 = vmatpush2.msra.mxu0 %v2008
        %2270 = vmatprep.subr.mxu0 %v2007
        %2271 = vmatpush2.msra.mxu0 %v2006
        %2272 = vmatprep.subr.mxu0 %v2005
        %2273 = vmatpush2.msra.mxu0 %v2004
        %2274 = vmatprep.subr.mxu0 %v2003
        %2275 = vmatpush2.msra.mxu0 %v2002
        %2276 = vmatprep.mubr.f32.mxu0 %v1901
        %2277 = vmatmul.mubr.f32.gmra.mxu0 %v1900
        %v2278 = vpop.f32.mrf.mxu0
        %v2279 = vadd.f32 %v2208, %v2278
        %v2280 = vpop.f32.mrf.mxu0
        %v2281 = vadd.f32 %v2210, %v2280
        %2282 = vdwg.mxu0
        %2283 = vmatprep.subr.mxu0 %v2065
        %2284 = vmatpush1.msra.mxu0 %v2064
        %2285 = vmatprep.subr.mxu0 %v2063
        %2286 = vmatpush1.msra.mxu0 %v2062
        %2287 = vmatprep.subr.mxu0 %v2061
        %2288 = vmatpush1.msra.mxu0 %v2060
        %2289 = vmatprep.subr.mxu0 %v2059
        %2290 = vmatpush1.msra.mxu0 %v2058
        %2291 = vmatprep.subr.mxu0 %v2057
        %2292 = vmatpush1.msra.mxu0 %v2056
        %2293 = vmatprep.subr.mxu0 %v2055
        %2294 = vmatpush1.msra.mxu0 %v2054
        %2295 = vmatprep.subr.mxu0 %v2053
        %2296 = vmatpush1.msra.mxu0 %v2052
        %2297 = vmatprep.subr.mxu0 %v2051
        %2298 = vmatpush1.msra.mxu0 %v2050
        %2299 = vmatprep.subr.mxu0 %v2049
        %2300 = vmatpush1.msra.mxu0 %v2048
        %2301 = vmatprep.subr.mxu0 %v2047
        %2302 = vmatpush1.msra.mxu0 %v2046
        %2303 = vmatprep.subr.mxu0 %v2045
        %2304 = vmatpush1.msra.mxu0 %v2044
        %2305 = vmatprep.subr.mxu0 %v2043
        %2306 = vmatpush1.msra.mxu0 %v2042
        %2307 = vmatprep.subr.mxu0 %v2041
        %2308 = vmatpush1.msra.mxu0 %v2040
        %2309 = vmatprep.subr.mxu0 %v2039
        %2310 = vmatpush1.msra.mxu0 %v2038
        %2311 = vmatprep.subr.mxu0 %v2037
        %2312 = vmatpush1.msra.mxu0 %v2036
        %2313 = vmatprep.subr.mxu0 %v2035
        %2314 = vmatpush1.msra.mxu0 %v2034
        %2315 = vmatprep.subr.mxu0 %v2097
        %2316 = vmatpush2.msra.mxu0 %v2096
        %2317 = vmatprep.subr.mxu0 %v2095
        %2318 = vmatpush2.msra.mxu0 %v2094
        %2319 = vmatprep.subr.mxu0 %v2093
        %2320 = vmatpush2.msra.mxu0 %v2092
        %2321 = vmatprep.subr.mxu0 %v2091
        %2322 = vmatpush2.msra.mxu0 %v2090
        %2323 = vmatprep.subr.mxu0 %v2089
        %2324 = vmatpush2.msra.mxu0 %v2088
        %2325 = vmatprep.subr.mxu0 %v2087
        %2326 = vmatpush2.msra.mxu0 %v2086
        %2327 = vmatprep.subr.mxu0 %v2085
        %2328 = vmatpush2.msra.mxu0 %v2084
        %2329 = vmatprep.subr.mxu0 %v2083
        %2330 = vmatpush2.msra.mxu0 %v2082
        %2331 = vmatprep.subr.mxu0 %v2081
        %2332 = vmatpush2.msra.mxu0 %v2080
        %2333 = vmatprep.subr.mxu0 %v2079
        %2334 = vmatpush2.msra.mxu0 %v2078
        %2335 = vmatprep.subr.mxu0 %v2077
        %2336 = vmatpush2.msra.mxu0 %v2076
        %2337 = vmatprep.subr.mxu0 %v2075
        %2338 = vmatpush2.msra.mxu0 %v2074
        %2339 = vmatprep.subr.mxu0 %v2073
        %2340 = vmatpush2.msra.mxu0 %v2072
        %2341 = vmatprep.subr.mxu0 %v2071
        %2342 = vmatpush2.msra.mxu0 %v2070
        %2343 = vmatprep.subr.mxu0 %v2069
        %2344 = vmatpush2.msra.mxu0 %v2068
        %2345 = vmatprep.subr.mxu0 %v2067
        %2346 = vmatpush2.msra.mxu0 %v2066
        %2347 = vmatprep.mubr.f32.mxu0 %v1903
        %2348 = vmatmul.mubr.f32.gmra.mxu0 %v1902
        %v2349 = vpop.f32.mrf.mxu0
        %v2350 = vadd.f32 %v2279, %v2349
        %v2351 = vpop.f32.mrf.mxu0
        %v2352 = vadd.f32 %v2281, %v2351
        %2353 = vdwg.mxu0
        %2354 = vmatprep.subr.mxu0 %v2129
        %2355 = vmatpush1.msra.mxu0 %v2128
        %2356 = vmatprep.subr.mxu0 %v2127
        %2357 = vmatpush1.msra.mxu0 %v2126
        %2358 = vmatprep.subr.mxu0 %v2125
        %2359 = vmatpush1.msra.mxu0 %v2124
        %2360 = vmatprep.subr.mxu0 %v2123
        %2361 = vmatpush1.msra.mxu0 %v2122
        %2362 = vmatprep.subr.mxu0 %v2121
        %2363 = vmatpush1.msra.mxu0 %v2120
        %2364 = vmatprep.subr.mxu0 %v2119
        %2365 = vmatpush1.msra.mxu0 %v2118
        %2366 = vmatprep.subr.mxu0 %v2117
        %2367 = vmatpush1.msra.mxu0 %v2116
        %2368 = vmatprep.subr.mxu0 %v2115
        %2369 = vmatpush1.msra.mxu0 %v2114
        %2370 = vmatprep.subr.mxu0 %v2113
        %2371 = vmatpush1.msra.mxu0 %v2112
        %2372 = vmatprep.subr.mxu0 %v2111
        %2373 = vmatpush1.msra.mxu0 %v2110
        %2374 = vmatprep.subr.mxu0 %v2109
        %2375 = vmatpush1.msra.mxu0 %v2108
        %2376 = vmatprep.subr.mxu0 %v2107
        %2377 = vmatpush1.msra.mxu0 %v2106
        %2378 = vmatprep.subr.mxu0 %v2105
        %2379 = vmatpush1.msra.mxu0 %v2104
        %2380 = vmatprep.subr.mxu0 %v2103
        %2381 = vmatpush1.msra.mxu0 %v2102
        %2382 = vmatprep.subr.mxu0 %v2101
        %2383 = vmatpush1.msra.mxu0 %v2100
        %2384 = vmatprep.subr.mxu0 %v2099
        %2385 = vmatpush1.msra.mxu0 %v2098
        %2386 = vmatprep.subr.mxu0 0.0
        %2387 = vmatpush2.msra.mxu0 0.0
        %2388 = vmatprep.subr.mxu0 0.0
        %2389 = vmatpush2.msra.mxu0 0.0
        %2390 = vmatprep.subr.mxu0 0.0
        %2391 = vmatpush2.msra.mxu0 0.0
        %2392 = vmatprep.subr.mxu0 0.0
        %2393 = vmatpush2.msra.mxu0 0.0
        %2394 = vmatprep.subr.mxu0 0.0
        %2395 = vmatpush2.msra.mxu0 0.0
        %2396 = vmatprep.subr.mxu0 0.0
        %2397 = vmatpush2.msra.mxu0 0.0
        %2398 = vmatprep.subr.mxu0 0.0
        %2399 = vmatpush2.msra.mxu0 0.0
        %2400 = vmatprep.subr.mxu0 0.0
        %2401 = vmatpush2.msra.mxu0 0.0
        %2402 = vmatprep.subr.mxu0 0.0
        %2403 = vmatpush2.msra.mxu0 0.0
        %2404 = vmatprep.subr.mxu0 0.0
        %2405 = vmatpush2.msra.mxu0 0.0
        %2406 = vmatprep.subr.mxu0 0.0
        %2407 = vmatpush2.msra.mxu0 0.0
        %2408 = vmatprep.subr.mxu0 0.0
        %2409 = vmatpush2.msra.mxu0 0.0
        %2410 = vmatprep.subr.mxu0 0.0
        %2411 = vmatpush2.msra.mxu0 0.0
        %2412 = vmatprep.subr.mxu0 0.0
        %2413 = vmatpush2.msra.mxu0 0.0
        %2414 = vmatprep.subr.mxu0 0.0
        %2415 = vmatpush2.msra.mxu0 0.0
        %2416 = vmatprep.subr.mxu0 %v2139
        %2417 = vmatpush2.msra.mxu0 %v2136
        %2418 = vmatprep.mubr.f32.mxu0 %v2133
        %2419 = vmatmul.mubr.f32.gmra.mxu0 %v1904
        %v2420 = vpop.f32.mrf.mxu0
        %v2421 = vadd.f32 %v2350, %v2420
        %v2422 = vpop.f32.mrf.mxu0
        %v2423 = vadd.f32 %v2352, %v2422
        %2424 = vdwg.mxu0
        %2428 = vrot.lane.b32.xlu0 %v2421, 127
        %v2429 = vpop.permute.xlu0 %2428
        %2430 = vrot.lane.b32.xlu0 %v2423, 127
        %v2431 = vpop.permute.xlu0 %2430
        %2432 = vrot.lane.b32.xlu0 0.0, 127
        %v2433 = vpop.permute.xlu0 %2432
        %v2434 = vsel %vm550, %v2429, %v2431
        %v2435 = vsel %vm550, %v2431, %v2433
        %2438 = vrot.lane.b32.xlu0 %v2421, 126
        %v2439 = vpop.permute.xlu0 %2438
        %2440 = vrot.lane.b32.xlu0 %v2423, 126
        %v2441 = vpop.permute.xlu0 %2440
        %2442 = vrot.lane.b32.xlu0 0.0, 126
        %v2443 = vpop.permute.xlu0 %2442
        %v2444 = vsel %vm582, %v2439, %v2441
        %v2445 = vsel %vm582, %v2441, %v2443
        %2448 = vrot.lane.b32.xlu0 %v2421, 112
        %v2449 = vpop.permute.xlu0 %2448
        %2450 = vrot.lane.b32.xlu0 %v2423, 112
        %v2451 = vpop.permute.xlu0 %2450
        %2452 = vrot.lane.b32.xlu0 0.0, 112
        %v2453 = vpop.permute.xlu0 %2452
        %vm2454 = vcmask 916480
        %v2455 = vsel %vm2454, %v2449, %v2451
        %v2456 = vsel %vm2454, %v2451, %v2453
        %2459 = vrot.lane.b32.xlu0 %v2421, 111
        %v2460 = vpop.permute.xlu0 %2459
        %2461 = vrot.lane.b32.xlu0 %v2423, 111
        %v2462 = vpop.permute.xlu0 %2461
        %2463 = vrot.lane.b32.xlu0 0.0, 111
        %v2464 = vpop.permute.xlu0 %2463
        %vm2465 = vcmask 908288
        %v2466 = vsel %vm2465, %v2460, %v2462
        %v2467 = vsel %vm2465, %v2462, %v2464
        %2470 = vrot.lane.b32.xlu0 %v2421, 110
        %v2471 = vpop.permute.xlu0 %2470
        %2472 = vrot.lane.b32.xlu0 %v2423, 110
        %v2473 = vpop.permute.xlu0 %2472
        %2474 = vrot.lane.b32.xlu0 0.0, 110
        %v2475 = vpop.permute.xlu0 %2474
        %vm2476 = vcmask 900096
        %v2477 = vsel %vm2476, %v2471, %v2473
        %v2478 = vsel %vm2476, %v2473, %v2475
        %2481 = vrot.lane.b32.xlu0 %v2421, 96
        %v2482 = vpop.permute.xlu0 %2481
        %2483 = vrot.lane.b32.xlu0 %v2423, 96
        %v2484 = vpop.permute.xlu0 %2483
        %2485 = vrot.lane.b32.xlu0 0.0, 96
        %v2486 = vpop.permute.xlu0 %2485
        %v2487 = vsel %vm678, %v2482, %v2484
        %v2488 = vsel %vm678, %v2484, %v2486
        %2491 = vrot.lane.b32.xlu0 %v2421, 95
        %v2492 = vpop.permute.xlu0 %2491
        %2493 = vrot.lane.b32.xlu0 %v2423, 95
        %v2494 = vpop.permute.xlu0 %2493
        %2495 = vrot.lane.b32.xlu0 0.0, 95
        %v2496 = vpop.permute.xlu0 %2495
        %vm2497 = vcmask 777216
        %v2498 = vsel %vm2497, %v2492, %v2494
        %v2499 = vsel %vm2497, %v2494, %v2496
        %2502 = vrot.lane.b32.xlu0 %v2421, 94
        %v2503 = vpop.permute.xlu0 %2502
        %2504 = vrot.lane.b32.xlu0 %v2423, 94
        %v2505 = vpop.permute.xlu0 %2504
        %2506 = vrot.lane.b32.xlu0 0.0, 94
        %v2507 = vpop.permute.xlu0 %2506
        %vm2508 = vcmask 769024
        %v2509 = vsel %vm2508, %v2503, %v2505
        %v2510 = vsel %vm2508, %v2505, %v2507
        %v2513 = vld [vmem:[%s5] sm:$0xff]
        %v2514 = vld [vmem:[%s6] sm:$0xff]
        %2516 = vset.pattern.permute.xlu0 0
        %2517 = vperm.xlu0 %2516, %v2514
        %v2518 = vpop.permute.xlu0 %2517
        %v2521 = vsel %vm1514, %v2513, 0
        %2523 = vmatprep.subr.mxu0 0.0
        %2524 = vmatpush1.msra.mxu0 0.0
        %2525 = vmatprep.subr.mxu0 0.0
        %2526 = vmatpush1.msra.mxu0 0.0
        %2527 = vmatprep.subr.mxu0 0.0
        %2528 = vmatpush1.msra.mxu0 0.0
        %2529 = vmatprep.subr.mxu0 0.0
        %2530 = vmatpush1.msra.mxu0 0.0
        %2531 = vmatprep.subr.mxu0 0.0
        %2532 = vmatpush1.msra.mxu0 0.0
        %2533 = vmatprep.subr.mxu0 0.0
        %2534 = vmatpush1.msra.mxu0 0.0
        %2535 = vmatprep.subr.mxu0 0.0
        %2536 = vmatpush1.msra.mxu0 0.0
        %2537 = vmatprep.subr.mxu0 %v2510
        %2538 = vmatpush1.msra.mxu0 %v2509
        %2539 = vmatprep.subr.mxu0 %v2499
        %2540 = vmatpush1.msra.mxu0 %v2498
        %2541 = vmatprep.subr.mxu0 %v2488
        %2542 = vmatpush1.msra.mxu0 %v2487
        %2543 = vmatprep.subr.mxu0 %v2478
        %2544 = vmatpush1.msra.mxu0 %v2477
        %2545 = vmatprep.subr.mxu0 %v2467
        %2546 = vmatpush1.msra.mxu0 %v2466
        %2547 = vmatprep.subr.mxu0 %v2456
        %2548 = vmatpush1.msra.mxu0 %v2455
        %2549 = vmatprep.subr.mxu0 %v2445
        %2550 = vmatpush1.msra.mxu0 %v2444
        %2551 = vmatprep.subr.mxu0 %v2435
        %2552 = vmatpush1.msra.mxu0 %v2434
        %2553 = vmatprep.subr.mxu0 %v2423
        %2554 = vmatpush1.msra.mxu0 %v2421
        %2555 = vmatprep.subr.mxu0 0.0
        %2556 = vmatpush2.msra.mxu0 0.0
        %2557 = vmatprep.subr.mxu0 0.0
        %2558 = vmatpush2.msra.mxu0 0.0
        %2559 = vmatprep.subr.mxu0 0.0
        %2560 = vmatpush2.msra.mxu0 0.0
        %2561 = vmatprep.subr.mxu0 0.0
        %2562 = vmatpush2.msra.mxu0 0.0
        %2563 = vmatprep.subr.mxu0 0.0
        %2564 = vmatpush2.msra.mxu0 0.0
        %2565 = vmatprep.subr.mxu0 0.0
        %2566 = vmatpush2.msra.mxu0 0.0
        %2567 = vmatprep.subr.mxu0 0.0
        %2568 = vmatpush2.msra.mxu0 0.0
        %2569 = vmatprep.subr.mxu0 0.0
        %2570 = vmatpush2.msra.mxu0 0.0
        %2571 = vmatprep.subr.mxu0 0.0
        %2572 = vmatpush2.msra.mxu0 0.0
        %2573 = vmatprep.subr.mxu0 0.0
        %2574 = vmatpush2.msra.mxu0 0.0
        %2575 = vmatprep.subr.mxu0 0.0
        %2576 = vmatpush2.msra.mxu0 0.0
        %2577 = vmatprep.subr.mxu0 0.0
        %2578 = vmatpush2.msra.mxu0 0.0
        %2579 = vmatprep.subr.mxu0 0.0
        %2580 = vmatpush2.msra.mxu0 0.0
        %2581 = vmatprep.subr.mxu0 0.0
        %2582 = vmatpush2.msra.mxu0 0.0
        %2583 = vmatprep.subr.mxu0 0.0
        %2584 = vmatpush2.msra.mxu0 0.0
        %2585 = vmatprep.subr.mxu0 0.0
        %2586 = vmatpush2.msra.mxu0 0.0
        %2587 = vmatprep.mubr.f32.mxu0 0.0
        %2588 = vmatmul.mubr.f32.gmra.mxu0 %v2521
        %v2589 = vpop.f32.mrf.mxu0
        %v2590 = vadd.f32 %v2518, %v2589
        %v2591 = vpop.f32.mrf.mxu0
        %v2592 = vadd.f32 %v2518, %v2591
        %2593 = vdwg.mxu0
        %v2594 = vmax.f32 %v2590, 0.0
        %v2595 = vmax.f32 %v2592, 0.0
        %v2596 = vld [vmem:[%s12] sm:$0x3]
        %v2598 = vlaneseq
        %v2599 = vshrl.u32 %v2598, 7
        %v2600 = vsub.s32 0, %v2599
        %v2601 = vrot.slane %v2596, %v2600
        %v2602 = vlaneseq
        %v2603 = vshrl.u32 %v2602, 7
        %v2604 = vsub.s32 1, %v2603
        %v2605 = vrot.slane %v2596, %v2604
        %v2608 = vmul.f32 %v2594, %v2601
        %v2609 = vmul.f32 %v2595, %v2605
        %2612 = vrot.lane.b32.xlu0 %v2608, 17
        %v2613 = vpop.permute.xlu0 %2612
        %2614 = vrot.lane.b32.xlu0 %v2609, 17
        %v2615 = vpop.permute.xlu0 %2614
        %vm2616 = vcmask 138240
        %v2617 = vsel %vm2616, %v2613, %v2615
        %v2621 = vsel %vm2616, 0.0, %v2613
        %v2622 = vsel %vm2616, %v2615, 0.0
        %2625 = vrot.lane.b32.xlu0 %v2621, 127
        %v2626 = vpop.permute.xlu0 %2625
        %2627 = vrot.lane.b32.xlu0 %v2617, 127
        %v2628 = vpop.permute.xlu0 %2627
        %2629 = vrot.lane.b32.xlu0 %v2622, 127
        %v2630 = vpop.permute.xlu0 %2629
        %v2631 = vsel %vm550, %v2626, %v2628
        %v2632 = vsel %vm550, %v2628, %v2630
        %2635 = vrot.lane.b32.xlu0 %v2621, 126
        %v2636 = vpop.permute.xlu0 %2635
        %2637 = vrot.lane.b32.xlu0 %v2617, 126
        %v2638 = vpop.permute.xlu0 %2637
        %2639 = vrot.lane.b32.xlu0 %v2622, 126
        %v2640 = vpop.permute.xlu0 %2639
        %v2641 = vsel %vm582, %v2636, %v2638
        %v2642 = vsel %vm582, %v2638, %v2640
        %2645 = vrot.lane.b32.xlu0 %v2621, 112
        %v2646 = vpop.permute.xlu0 %2645
        %2647 = vrot.lane.b32.xlu0 %v2617, 112
        %v2648 = vpop.permute.xlu0 %2647
        %2649 = vrot.lane.b32.xlu0 %v2622, 112
        %v2650 = vpop.permute.xlu0 %2649
        %v2651 = vsel %vm2454, %v2646, %v2648
        %v2652 = vsel %vm2454, %v2648, %v2650
        %2655 = vrot.lane.b32.xlu0 %v2621, 111
        %v2656 = vpop.permute.xlu0 %2655
        %2657 = vrot.lane.b32.xlu0 %v2617, 111
        %v2658 = vpop.permute.xlu0 %2657
        %2659 = vrot.lane.b32.xlu0 %v2622, 111
        %v2660 = vpop.permute.xlu0 %2659
        %v2661 = vsel %vm2465, %v2656, %v2658
        %v2662 = vsel %vm2465, %v2658, %v2660
        %2665 = vrot.lane.b32.xlu0 %v2621, 110
        %v2666 = vpop.permute.xlu0 %2665
        %2667 = vrot.lane.b32.xlu0 %v2617, 110
        %v2668 = vpop.permute.xlu0 %2667
        %2669 = vrot.lane.b32.xlu0 %v2622, 110
        %v2670 = vpop.permute.xlu0 %2669
        %v2671 = vsel %vm2476, %v2666, %v2668
        %v2672 = vsel %vm2476, %v2668, %v2670
        %2675 = vrot.lane.b32.xlu0 %v2621, 96
        %v2676 = vpop.permute.xlu0 %2675
        %2677 = vrot.lane.b32.xlu0 %v2617, 96
        %v2678 = vpop.permute.xlu0 %2677
        %2679 = vrot.lane.b32.xlu0 %v2622, 96
        %v2680 = vpop.permute.xlu0 %2679
        %v2681 = vsel %vm678, %v2676, %v2678
        %v2682 = vsel %vm678, %v2678, %v2680
        %2685 = vrot.lane.b32.xlu0 %v2621, 95
        %v2686 = vpop.permute.xlu0 %2685
        %2687 = vrot.lane.b32.xlu0 %v2617, 95
        %v2688 = vpop.permute.xlu0 %2687
        %2689 = vrot.lane.b32.xlu0 %v2622, 95
        %v2690 = vpop.permute.xlu0 %2689
        %v2691 = vsel %vm2497, %v2686, %v2688
        %v2692 = vsel %vm2497, %v2688, %v2690
        %2695 = vrot.lane.b32.xlu0 %v2621, 94
        %v2696 = vpop.permute.xlu0 %2695
        %2697 = vrot.lane.b32.xlu0 %v2617, 94
        %v2698 = vpop.permute.xlu0 %2697
        %2699 = vrot.lane.b32.xlu0 %v2622, 94
        %v2700 = vpop.permute.xlu0 %2699
        %v2701 = vsel %vm2508, %v2696, %v2698
        %v2702 = vsel %vm2508, %v2698, %v2700
        %v2705 = vld [vmem:[%s7] sm:$0xff]
        %v2706 = vld [vmem:[%s8] sm:$0xff]
        %2708 = vset.pattern.permute.xlu0 0
        %2709 = vperm.xlu0 %2708, %v2706
        %v2710 = vpop.permute.xlu0 %2709
        %v2713 = vsel %vm1514, %v2705, 0
        %2715 = vmatprep.subr.mxu0 0.0
        %2716 = vmatpush1.msra.mxu0 0.0
        %2717 = vmatprep.subr.mxu0 0.0
        %2718 = vmatpush1.msra.mxu0 0.0
        %2719 = vmatprep.subr.mxu0 0.0
        %2720 = vmatpush1.msra.mxu0 0.0
        %2721 = vmatprep.subr.mxu0 0.0
        %2722 = vmatpush1.msra.mxu0 0.0
        %2723 = vmatprep.subr.mxu0 0.0
        %2724 = vmatpush1.msra.mxu0 0.0
        %2725 = vmatprep.subr.mxu0 0.0
        %2726 = vmatpush1.msra.mxu0 0.0
        %2727 = vmatprep.subr.mxu0 0.0
        %2728 = vmatpush1.msra.mxu0 0.0
        %2729 = vmatprep.subr.mxu0 %v2702
        %2730 = vmatpush1.msra.mxu0 %v2701
        %2731 = vmatprep.subr.mxu0 %v2692
        %2732 = vmatpush1.msra.mxu0 %v2691
        %2733 = vmatprep.subr.mxu0 %v2682
        %2734 = vmatpush1.msra.mxu0 %v2681
        %2735 = vmatprep.subr.mxu0 %v2672
        %2736 = vmatpush1.msra.mxu0 %v2671
        %2737 = vmatprep.subr.mxu0 %v2662
        %2738 = vmatpush1.msra.mxu0 %v2661
        %2739 = vmatprep.subr.mxu0 %v2652
        %2740 = vmatpush1.msra.mxu0 %v2651
        %2741 = vmatprep.subr.mxu0 %v2642
        %2742 = vmatpush1.msra.mxu0 %v2641
        %2743 = vmatprep.subr.mxu0 %v2632
        %2744 = vmatpush1.msra.mxu0 %v2631
        %2745 = vmatprep.subr.mxu0 %v2617
        %2746 = vmatpush1.msra.mxu0 %v2621
        %2747 = vmatprep.subr.mxu0 0.0
        %2748 = vmatpush2.msra.mxu0 0.0
        %2749 = vmatprep.subr.mxu0 0.0
        %2750 = vmatpush2.msra.mxu0 0.0
        %2751 = vmatprep.subr.mxu0 0.0
        %2752 = vmatpush2.msra.mxu0 0.0
        %2753 = vmatprep.subr.mxu0 0.0
        %2754 = vmatpush2.msra.mxu0 0.0
        %2755 = vmatprep.subr.mxu0 0.0
        %2756 = vmatpush2.msra.mxu0 0.0
        %2757 = vmatprep.subr.mxu0 0.0
        %2758 = vmatpush2.msra.mxu0 0.0
        %2759 = vmatprep.subr.mxu0 0.0
        %2760 = vmatpush2.msra.mxu0 0.0
        %2761 = vmatprep.subr.mxu0 0.0
        %2762 = vmatpush2.msra.mxu0 0.0
        %2763 = vmatprep.subr.mxu0 0.0
        %2764 = vmatpush2.msra.mxu0 0.0
        %2765 = vmatprep.subr.mxu0 0.0
        %2766 = vmatpush2.msra.mxu0 0.0
        %2767 = vmatprep.subr.mxu0 0.0
        %2768 = vmatpush2.msra.mxu0 0.0
        %2769 = vmatprep.subr.mxu0 0.0
        %2770 = vmatpush2.msra.mxu0 0.0
        %2771 = vmatprep.subr.mxu0 0.0
        %2772 = vmatpush2.msra.mxu0 0.0
        %2773 = vmatprep.subr.mxu0 0.0
        %2774 = vmatpush2.msra.mxu0 0.0
        %2775 = vmatprep.subr.mxu0 0.0
        %2776 = vmatpush2.msra.mxu0 0.0
        %2777 = vmatprep.subr.mxu0 0.0
        %2778 = vmatpush2.msra.mxu0 0.0
        %2779 = vmatprep.mubr.f32.mxu0 0.0
        %2780 = vmatmul.mubr.f32.gmra.mxu0 %v2713
        %v2781 = vpop.f32.mrf.mxu0
        %v2782 = vadd.f32 %v2710, %v2781
        %v2783 = vpop.f32.mrf.mxu0
        %v2784 = vadd.f32 %v2710, %v2783
        %2785 = vdwg.mxu0
        %v2786 = vmax.f32 %v2782, 0.0
        %v2787 = vmax.f32 %v2784, 0.0
        %2790 = vrot.lane.b32.xlu0 %v2786, 127
        %v2791 = vpop.permute.xlu0 %2790
        %2792 = vrot.lane.b32.xlu0 %v2787, 127
        %v2793 = vpop.permute.xlu0 %2792
        %v2794 = vsel %vm550, %v2791, %v2793
        %v2795 = vsel %vm550, %v2793, %v2433
        %v2799 = vmax.f32 %v2786, %v2794
        %v2800 = vmax.f32 %v2787, %v2795
        %v2801 = vmax.f32 %v2433, 0.0
        %2805 = vrot.lane.b32.xlu0 %v2799, 112
        %v2806 = vpop.permute.xlu0 %2805
        %2807 = vrot.lane.b32.xlu0 %v2800, 112
        %v2808 = vpop.permute.xlu0 %2807
        %2809 = vrot.lane.b32.xlu0 %v2801, 112
        %v2810 = vpop.permute.xlu0 %2809
        %v2811 = vsel %vm2454, %v2806, %v2808
        %v2812 = vsel %vm2454, %v2808, %v2810
        %v2815 = vmax.f32 %v2799, %v2811
        %v2816 = vmax.f32 %v2800, %v2812
        %v2817 = vld [vmem:[%s10] sm:$0x1]
        %v2818 = vld [vmem:[#allocation2] sm:$0xff]
        %v2819 = vld [vmem:[#allocation2 + $0x8] sm:$0xff]
        %v2820 = vld [vmem:[#allocation2 + $0x10] sm:$0xff]
        %v2821 = vld [vmem:[#allocation2 + $0x18] sm:$0xff]
        %v2822 = vld [vmem:[#allocation2 + $0x20] sm:$0xff]
        %v2823 = vld [vmem:[#allocation2 + $0x28] sm:$0xff]
        %v2824 = vld [vmem:[#allocation2 + $0x30] sm:$0xff]
        %v2825 = vld [vmem:[#allocation2 + $0x38] sm:$0xff]
        %v2826 = vld [vmem:[#allocation2 + $0x40] sm:$0xff]
        %v2827 = vld [vmem:[#allocation2 + $0x48] sm:$0xff]
        %v2828 = vld [vmem:[#allocation2 + $0x50] sm:$0xff]
        %v2829 = vld [vmem:[#allocation2 + $0x58] sm:$0xff]
        %v2830 = vld [vmem:[#allocation2 + $0x60] sm:$0xff]
        %v2831 = vld [vmem:[#allocation2 + $0x68] sm:$0xff]
        %v2832 = vld [vmem:[#allocation2 + $0x70] sm:$0xff]
        %v2833 = vld [vmem:[#allocation2 + $0x78] sm:$0xff]
        %v2834 = vld [vmem:[#allocation2 + $0x80] sm:$0xff]
        %v2835 = vld [vmem:[#allocation2 + $0x88] sm:$0xff]
        %v2836 = vld [vmem:[#allocation2 + $0x90] sm:$0xff]
        %v2837 = vld [vmem:[#allocation2 + $0x98] sm:$0xff]
        %v2838 = vld [vmem:[#allocation2 + $0xa0] sm:$0xff]
        %v2839 = vld [vmem:[#allocation2 + $0xa8] sm:$0xff]
        %v2840 = vld [vmem:[#allocation2 + $0xb0] sm:$0xff]
        %v2841 = vld [vmem:[#allocation2 + $0xb8] sm:$0xff]
        %v2842 = vld [vmem:[#allocation2 + $0xc0] sm:$0xff]
        %v2843 = vld [vmem:[#allocation2 + $0xc8] sm:$0xff]
        %v2844 = vld [vmem:[#allocation2 + $0xd0] sm:$0xff]
        %v2845 = vld [vmem:[#allocation2 + $0xd8] sm:$0xff]
        %v2846 = vld [vmem:[#allocation2 + $0xe0] sm:$0xff]
        %v2847 = vld [vmem:[#allocation2 + $0xe8] sm:$0xff]
        %v2848 = vld [vmem:[#allocation2 + $0xf0] sm:$0xff]
        %v2849 = vld [vmem:[#allocation2 + $0xf8] sm:$0xff]
        %2850 = vmatprep.subr.mxu0 0.0
        %2851 = vmatpush1.msra.mxu0 %v2833
        %2852 = vmatprep.subr.mxu0 0.0
        %2853 = vmatpush1.msra.mxu0 %v2832
        %2854 = vmatprep.subr.mxu0 0.0
        %2855 = vmatpush1.msra.mxu0 %v2831
        %2856 = vmatprep.subr.mxu0 0.0
        %2857 = vmatpush1.msra.mxu0 %v2830
        %2858 = vmatprep.subr.mxu0 0.0
        %2859 = vmatpush1.msra.mxu0 %v2829
        %2860 = vmatprep.subr.mxu0 0.0
        %2861 = vmatpush1.msra.mxu0 %v2828
        %2862 = vmatprep.subr.mxu0 0.0
        %2863 = vmatpush1.msra.mxu0 %v2827
        %2864 = vmatprep.subr.mxu0 0.0
        %2865 = vmatpush1.msra.mxu0 %v2826
        %2866 = vmatprep.subr.mxu0 0.0
        %2867 = vmatpush1.msra.mxu0 %v2825
        %2868 = vmatprep.subr.mxu0 0.0
        %2869 = vmatpush1.msra.mxu0 %v2824
        %2870 = vmatprep.subr.mxu0 0.0
        %2871 = vmatpush1.msra.mxu0 %v2823
        %2872 = vmatprep.subr.mxu0 0.0
        %2873 = vmatpush1.msra.mxu0 %v2822
        %2874 = vmatprep.subr.mxu0 0.0
        %2875 = vmatpush1.msra.mxu0 %v2821
        %2876 = vmatprep.subr.mxu0 0.0
        %2877 = vmatpush1.msra.mxu0 %v2820
        %2878 = vmatprep.subr.mxu0 0.0
        %2879 = vmatpush1.msra.mxu0 %v2819
        %2880 = vmatprep.subr.mxu0 0.0
        %2881 = vmatpush1.msra.mxu0 %v2818
        %2882 = vmatprep.subr.mxu0 0.0
        %2883 = vmatpush2.msra.mxu0 %v2849
        %2884 = vmatprep.subr.mxu0 0.0
        %2885 = vmatpush2.msra.mxu0 %v2848
        %2886 = vmatprep.subr.mxu0 0.0
        %2887 = vmatpush2.msra.mxu0 %v2847
        %2888 = vmatprep.subr.mxu0 0.0
        %2889 = vmatpush2.msra.mxu0 %v2846
        %2890 = vmatprep.subr.mxu0 0.0
        %2891 = vmatpush2.msra.mxu0 %v2845
        %2892 = vmatprep.subr.mxu0 0.0
        %2893 = vmatpush2.msra.mxu0 %v2844
        %2894 = vmatprep.subr.mxu0 0.0
        %2895 = vmatpush2.msra.mxu0 %v2843
        %2896 = vmatprep.subr.mxu0 0.0
        %2897 = vmatpush2.msra.mxu0 %v2842
        %2898 = vmatprep.subr.mxu0 0.0
        %2899 = vmatpush2.msra.mxu0 %v2841
        %2900 = vmatprep.subr.mxu0 0.0
        %2901 = vmatpush2.msra.mxu0 %v2840
        %2902 = vmatprep.subr.mxu0 0.0
        %2903 = vmatpush2.msra.mxu0 %v2839
        %2904 = vmatprep.subr.mxu0 0.0
        %2905 = vmatpush2.msra.mxu0 %v2838
        %2906 = vmatprep.subr.mxu0 0.0
        %2907 = vmatpush2.msra.mxu0 %v2837
        %2908 = vmatprep.subr.mxu0 0.0
        %2909 = vmatpush2.msra.mxu0 %v2836
        %2910 = vmatprep.subr.mxu0 0.0
        %2911 = vmatpush2.msra.mxu0 %v2835
        %2912 = vmatprep.subr.mxu0 0.0
        %2913 = vmatpush2.msra.mxu0 %v2834
        %2914 = vmatprep.mubr.f32.mxu0 %v2816
        %2915 = vmatmul.mubr.f32.gmra.mxu0 %v2815
        %v2916 = vpop.f32.mrf.mxu0
        %v2917 = vadd.f32 0.0, %v2916
        %v2918 = vpop.f32.mrf.mxu0
        %2919 = vdwg.mxu0
        %v2920 = vadd.f32 %v2817, %v2917
        %s2921 = scalar_lea.vmem [#allocation2], 256
        %v2922 = vld [vmem:[%s2921] sm:$0xff]
        %v2923 = vld [vmem:[%s2921 + $0x8] sm:$0xff]
        %v2924 = vld [vmem:[%s2921 + $0x10] sm:$0xff]
        %v2925 = vld [vmem:[%s2921 + $0x18] sm:$0xff]
        %v2926 = vld [vmem:[%s2921 + $0x20] sm:$0xff]
        %v2927 = vld [vmem:[%s2921 + $0x28] sm:$0xff]
        %v2928 = vld [vmem:[%s2921 + $0x30] sm:$0xff]
        %v2929 = vld [vmem:[%s2921 + $0x38] sm:$0xff]
        %v2930 = vld [vmem:[%s2921 + $0x40] sm:$0xff]
        %v2931 = vld [vmem:[%s2921 + $0x48] sm:$0xff]
        %v2932 = vld [vmem:[%s2921 + $0x50] sm:$0xff]
        %v2933 = vld [vmem:[%s2921 + $0x58] sm:$0xff]
        %v2934 = vld [vmem:[%s2921 + $0x60] sm:$0xff]
        %v2935 = vld [vmem:[%s2921 + $0x68] sm:$0xff]
        %v2936 = vld [vmem:[%s2921 + $0x70] sm:$0xff]
        %v2937 = vld [vmem:[%s2921 + $0x78] sm:$0xff]
        %v2938 = vld [vmem:[%s2921 + $0x80] sm:$0xff]
        %v2939 = vld [vmem:[%s2921 + $0x88] sm:$0xff]
        %v2940 = vld [vmem:[%s2921 + $0x90] sm:$0xff]
        %v2941 = vld [vmem:[%s2921 + $0x98] sm:$0xff]
        %v2942 = vld [vmem:[%s2921 + $0xa0] sm:$0xff]
        %v2943 = vld [vmem:[%s2921 + $0xa8] sm:$0xff]
        %v2944 = vld [vmem:[%s2921 + $0xb0] sm:$0xff]
        %v2945 = vld [vmem:[%s2921 + $0xb8] sm:$0xff]
        %v2946 = vld [vmem:[%s2921 + $0xc0] sm:$0xff]
        %v2947 = vld [vmem:[%s2921 + $0xc8] sm:$0xff]
        %v2948 = vld [vmem:[%s2921 + $0xd0] sm:$0xff]
        %v2949 = vld [vmem:[%s2921 + $0xd8] sm:$0xff]
        %v2950 = vld [vmem:[%s2921 + $0xe0] sm:$0xff]
        %v2951 = vld [vmem:[%s2921 + $0xe8] sm:$0xff]
        %v2952 = vld [vmem:[%s2921 + $0xf0] sm:$0xff]
        %v2953 = vld [vmem:[%s2921 + $0xf8] sm:$0xff]
        %v2956 = vrot.slane %v2815, 1
        %v2957 = vrot.slane %v2816, 1
        %2960 = vmatprep.subr.mxu0 0.0
        %2961 = vmatpush1.msra.mxu0 %v2937
        %2962 = vmatprep.subr.mxu0 0.0
        %2963 = vmatpush1.msra.mxu0 %v2936
        %2964 = vmatprep.subr.mxu0 0.0
        %2965 = vmatpush1.msra.mxu0 %v2935
        %2966 = vmatprep.subr.mxu0 0.0
        %2967 = vmatpush1.msra.mxu0 %v2934
        %2968 = vmatprep.subr.mxu0 0.0
        %2969 = vmatpush1.msra.mxu0 %v2933
        %2970 = vmatprep.subr.mxu0 0.0
        %2971 = vmatpush1.msra.mxu0 %v2932
        %2972 = vmatprep.subr.mxu0 0.0
        %2973 = vmatpush1.msra.mxu0 %v2931
        %2974 = vmatprep.subr.mxu0 0.0
        %2975 = vmatpush1.msra.mxu0 %v2930
        %2976 = vmatprep.subr.mxu0 0.0
        %2977 = vmatpush1.msra.mxu0 %v2929
        %2978 = vmatprep.subr.mxu0 0.0
        %2979 = vmatpush1.msra.mxu0 %v2928
        %2980 = vmatprep.subr.mxu0 0.0
        %2981 = vmatpush1.msra.mxu0 %v2927
        %2982 = vmatprep.subr.mxu0 0.0
        %2983 = vmatpush1.msra.mxu0 %v2926
        %2984 = vmatprep.subr.mxu0 0.0
        %2985 = vmatpush1.msra.mxu0 %v2925
        %2986 = vmatprep.subr.mxu0 0.0
        %2987 = vmatpush1.msra.mxu0 %v2924
        %2988 = vmatprep.subr.mxu0 0.0
        %2989 = vmatpush1.msra.mxu0 %v2923
        %2990 = vmatprep.subr.mxu0 0.0
        %2991 = vmatpush1.msra.mxu0 %v2922
        %2992 = vmatprep.subr.mxu0 0.0
        %2993 = vmatpush2.msra.mxu0 %v2953
        %2994 = vmatprep.subr.mxu0 0.0
        %2995 = vmatpush2.msra.mxu0 %v2952
        %2996 = vmatprep.subr.mxu0 0.0
        %2997 = vmatpush2.msra.mxu0 %v2951
        %2998 = vmatprep.subr.mxu0 0.0
        %2999 = vmatpush2.msra.mxu0 %v2950
        %3000 = vmatprep.subr.mxu0 0.0
        %3001 = vmatpush2.msra.mxu0 %v2949
        %3002 = vmatprep.subr.mxu0 0.0
        %3003 = vmatpush2.msra.mxu0 %v2948
        %3004 = vmatprep.subr.mxu0 0.0
        %3005 = vmatpush2.msra.mxu0 %v2947
        %3006 = vmatprep.subr.mxu0 0.0
        %3007 = vmatpush2.msra.mxu0 %v2946
        %3008 = vmatprep.subr.mxu0 0.0
        %3009 = vmatpush2.msra.mxu0 %v2945
        %3010 = vmatprep.subr.mxu0 0.0
        %3011 = vmatpush2.msra.mxu0 %v2944
        %3012 = vmatprep.subr.mxu0 0.0
        %3013 = vmatpush2.msra.mxu0 %v2943
        %3014 = vmatprep.subr.mxu0 0.0
        %3015 = vmatpush2.msra.mxu0 %v2942
        %3016 = vmatprep.subr.mxu0 0.0
        %3017 = vmatpush2.msra.mxu0 %v2941
        %3018 = vmatprep.subr.mxu0 0.0
        %3019 = vmatpush2.msra.mxu0 %v2940
        %3020 = vmatprep.subr.mxu0 0.0
        %3021 = vmatpush2.msra.mxu0 %v2939
        %3022 = vmatprep.subr.mxu0 0.0
        %3023 = vmatpush2.msra.mxu0 %v2938
        %3024 = vmatprep.mubr.f32.mxu0 %v2957
        %3025 = vmatmul.mubr.f32.gmra.mxu0 %v2956
        %v3026 = vpop.f32.mrf.mxu0
        %v3027 = vadd.f32 0.0, %v3026
        %v3028 = vpop.f32.mrf.mxu0
        %3029 = vdwg.mxu0
        %v3030 = vadd.f32 %v2920, %v3027
        %s3031 = scalar_lea.vmem [#allocation2], 512
        %v3032 = vld [vmem:[%s3031] sm:$0xff]
        %v3033 = vld [vmem:[%s3031 + $0x8] sm:$0xff]
        %v3034 = vld [vmem:[%s3031 + $0x10] sm:$0xff]
        %v3035 = vld [vmem:[%s3031 + $0x18] sm:$0xff]
        %v3036 = vld [vmem:[%s3031 + $0x20] sm:$0xff]
        %v3037 = vld [vmem:[%s3031 + $0x28] sm:$0xff]
        %v3038 = vld [vmem:[%s3031 + $0x30] sm:$0xff]
        %v3039 = vld [vmem:[%s3031 + $0x38] sm:$0xff]
        %v3040 = vld [vmem:[%s3031 + $0x40] sm:$0xff]
        %v3041 = vld [vmem:[%s3031 + $0x48] sm:$0xff]
        %v3042 = vld [vmem:[%s3031 + $0x50] sm:$0xff]
        %v3043 = vld [vmem:[%s3031 + $0x58] sm:$0xff]
        %v3044 = vld [vmem:[%s3031 + $0x60] sm:$0xff]
        %v3045 = vld [vmem:[%s3031 + $0x68] sm:$0xff]
        %v3046 = vld [vmem:[%s3031 + $0x70] sm:$0xff]
        %v3047 = vld [vmem:[%s3031 + $0x78] sm:$0xff]
        %v3048 = vld [vmem:[%s3031 + $0x80] sm:$0xff]
        %v3049 = vld [vmem:[%s3031 + $0x88] sm:$0xff]
        %v3050 = vld [vmem:[%s3031 + $0x90] sm:$0xff]
        %v3051 = vld [vmem:[%s3031 + $0x98] sm:$0xff]
        %v3052 = vld [vmem:[%s3031 + $0xa0] sm:$0xff]
        %v3053 = vld [vmem:[%s3031 + $0xa8] sm:$0xff]
        %v3054 = vld [vmem:[%s3031 + $0xb0] sm:$0xff]
        %v3055 = vld [vmem:[%s3031 + $0xb8] sm:$0xff]
        %v3056 = vld [vmem:[%s3031 + $0xc0] sm:$0xff]
        %v3057 = vld [vmem:[%s3031 + $0xc8] sm:$0xff]
        %v3058 = vld [vmem:[%s3031 + $0xd0] sm:$0xff]
        %v3059 = vld [vmem:[%s3031 + $0xd8] sm:$0xff]
        %v3060 = vld [vmem:[%s3031 + $0xe0] sm:$0xff]
        %v3061 = vld [vmem:[%s3031 + $0xe8] sm:$0xff]
        %v3062 = vld [vmem:[%s3031 + $0xf0] sm:$0xff]
        %v3063 = vld [vmem:[%s3031 + $0xf8] sm:$0xff]
        %v3064 = vrot.slane %v2815, 2
        %v3065 = vrot.slane %v2816, 2
        %3068 = vmatprep.subr.mxu0 0.0
        %3069 = vmatpush1.msra.mxu0 %v3047
        %3070 = vmatprep.subr.mxu0 0.0
        %3071 = vmatpush1.msra.mxu0 %v3046
        %3072 = vmatprep.subr.mxu0 0.0
        %3073 = vmatpush1.msra.mxu0 %v3045
        %3074 = vmatprep.subr.mxu0 0.0
        %3075 = vmatpush1.msra.mxu0 %v3044
        %3076 = vmatprep.subr.mxu0 0.0
        %3077 = vmatpush1.msra.mxu0 %v3043
        %3078 = vmatprep.subr.mxu0 0.0
        %3079 = vmatpush1.msra.mxu0 %v3042
        %3080 = vmatprep.subr.mxu0 0.0
        %3081 = vmatpush1.msra.mxu0 %v3041
        %3082 = vmatprep.subr.mxu0 0.0
        %3083 = vmatpush1.msra.mxu0 %v3040
        %3084 = vmatprep.subr.mxu0 0.0
        %3085 = vmatpush1.msra.mxu0 %v3039
        %3086 = vmatprep.subr.mxu0 0.0
        %3087 = vmatpush1.msra.mxu0 %v3038
        %3088 = vmatprep.subr.mxu0 0.0
        %3089 = vmatpush1.msra.mxu0 %v3037
        %3090 = vmatprep.subr.mxu0 0.0
        %3091 = vmatpush1.msra.mxu0 %v3036
        %3092 = vmatprep.subr.mxu0 0.0
        %3093 = vmatpush1.msra.mxu0 %v3035
        %3094 = vmatprep.subr.mxu0 0.0
        %3095 = vmatpush1.msra.mxu0 %v3034
        %3096 = vmatprep.subr.mxu0 0.0
        %3097 = vmatpush1.msra.mxu0 %v3033
        %3098 = vmatprep.subr.mxu0 0.0
        %3099 = vmatpush1.msra.mxu0 %v3032
        %3100 = vmatprep.subr.mxu0 0.0
        %3101 = vmatpush2.msra.mxu0 %v3063
        %3102 = vmatprep.subr.mxu0 0.0
        %3103 = vmatpush2.msra.mxu0 %v3062
        %3104 = vmatprep.subr.mxu0 0.0
        %3105 = vmatpush2.msra.mxu0 %v3061
        %3106 = vmatprep.subr.mxu0 0.0
        %3107 = vmatpush2.msra.mxu0 %v3060
        %3108 = vmatprep.subr.mxu0 0.0
        %3109 = vmatpush2.msra.mxu0 %v3059
        %3110 = vmatprep.subr.mxu0 0.0
        %3111 = vmatpush2.msra.mxu0 %v3058
        %3112 = vmatprep.subr.mxu0 0.0
        %3113 = vmatpush2.msra.mxu0 %v3057
        %3114 = vmatprep.subr.mxu0 0.0
        %3115 = vmatpush2.msra.mxu0 %v3056
        %3116 = vmatprep.subr.mxu0 0.0
        %3117 = vmatpush2.msra.mxu0 %v3055
        %3118 = vmatprep.subr.mxu0 0.0
        %3119 = vmatpush2.msra.mxu0 %v3054
        %3120 = vmatprep.subr.mxu0 0.0
        %3121 = vmatpush2.msra.mxu0 %v3053
        %3122 = vmatprep.subr.mxu0 0.0
        %3123 = vmatpush2.msra.mxu0 %v3052
        %3124 = vmatprep.subr.mxu0 0.0
        %3125 = vmatpush2.msra.mxu0 %v3051
        %3126 = vmatprep.subr.mxu0 0.0
        %3127 = vmatpush2.msra.mxu0 %v3050
        %3128 = vmatprep.subr.mxu0 0.0
        %3129 = vmatpush2.msra.mxu0 %v3049
        %3130 = vmatprep.subr.mxu0 0.0
        %3131 = vmatpush2.msra.mxu0 %v3048
        %3132 = vmatprep.mubr.f32.mxu0 %v3065
        %3133 = vmatmul.mubr.f32.gmra.mxu0 %v3064
        %v3134 = vpop.f32.mrf.mxu0
        %v3135 = vadd.f32 0.0, %v3134
        %v3136 = vpop.f32.mrf.mxu0
        %3137 = vdwg.mxu0
        %v3138 = vadd.f32 %v3030, %v3135
        %s3139 = scalar_lea.vmem [#allocation2], 768
        %v3140 = vld [vmem:[%s3139] sm:$0xff]
        %v3141 = vld [vmem:[%s3139 + $0x8] sm:$0xff]
        %v3142 = vld [vmem:[%s3139 + $0x10] sm:$0xff]
        %v3143 = vld [vmem:[%s3139 + $0x18] sm:$0xff]
        %v3144 = vld [vmem:[%s3139 + $0x20] sm:$0xff]
        %v3145 = vld [vmem:[%s3139 + $0x28] sm:$0xff]
        %v3146 = vld [vmem:[%s3139 + $0x30] sm:$0xff]
        %v3147 = vld [vmem:[%s3139 + $0x38] sm:$0xff]
        %v3148 = vld [vmem:[%s3139 + $0x40] sm:$0xff]
        %v3149 = vld [vmem:[%s3139 + $0x48] sm:$0xff]
        %v3150 = vld [vmem:[%s3139 + $0x50] sm:$0xff]
        %v3151 = vld [vmem:[%s3139 + $0x58] sm:$0xff]
        %v3152 = vld [vmem:[%s3139 + $0x60] sm:$0xff]
        %v3153 = vld [vmem:[%s3139 + $0x68] sm:$0xff]
        %v3154 = vld [vmem:[%s3139 + $0x70] sm:$0xff]
        %v3155 = vld [vmem:[%s3139 + $0x78] sm:$0xff]
        %v3156 = vld [vmem:[%s3139 + $0x80] sm:$0xff]
        %v3157 = vld [vmem:[%s3139 + $0x88] sm:$0xff]
        %v3158 = vld [vmem:[%s3139 + $0x90] sm:$0xff]
        %v3159 = vld [vmem:[%s3139 + $0x98] sm:$0xff]
        %v3160 = vld [vmem:[%s3139 + $0xa0] sm:$0xff]
        %v3161 = vld [vmem:[%s3139 + $0xa8] sm:$0xff]
        %v3162 = vld [vmem:[%s3139 + $0xb0] sm:$0xff]
        %v3163 = vld [vmem:[%s3139 + $0xb8] sm:$0xff]
        %v3164 = vld [vmem:[%s3139 + $0xc0] sm:$0xff]
        %v3165 = vld [vmem:[%s3139 + $0xc8] sm:$0xff]
        %v3166 = vld [vmem:[%s3139 + $0xd0] sm:$0xff]
        %v3167 = vld [vmem:[%s3139 + $0xd8] sm:$0xff]
        %v3168 = vld [vmem:[%s3139 + $0xe0] sm:$0xff]
        %v3169 = vld [vmem:[%s3139 + $0xe8] sm:$0xff]
        %v3170 = vld [vmem:[%s3139 + $0xf0] sm:$0xff]
        %v3171 = vld [vmem:[%s3139 + $0xf8] sm:$0xff]
        %v3172 = vrot.slane %v2815, 3
        %v3173 = vrot.slane %v2816, 3
        %3176 = vmatprep.subr.mxu0 0.0
        %3177 = vmatpush1.msra.mxu0 %v3155
        %3178 = vmatprep.subr.mxu0 0.0
        %3179 = vmatpush1.msra.mxu0 %v3154
        %3180 = vmatprep.subr.mxu0 0.0
        %3181 = vmatpush1.msra.mxu0 %v3153
        %3182 = vmatprep.subr.mxu0 0.0
        %3183 = vmatpush1.msra.mxu0 %v3152
        %3184 = vmatprep.subr.mxu0 0.0
        %3185 = vmatpush1.msra.mxu0 %v3151
        %3186 = vmatprep.subr.mxu0 0.0
        %3187 = vmatpush1.msra.mxu0 %v3150
        %3188 = vmatprep.subr.mxu0 0.0
        %3189 = vmatpush1.msra.mxu0 %v3149
        %3190 = vmatprep.subr.mxu0 0.0
        %3191 = vmatpush1.msra.mxu0 %v3148
        %3192 = vmatprep.subr.mxu0 0.0
        %3193 = vmatpush1.msra.mxu0 %v3147
        %3194 = vmatprep.subr.mxu0 0.0
        %3195 = vmatpush1.msra.mxu0 %v3146
        %3196 = vmatprep.subr.mxu0 0.0
        %3197 = vmatpush1.msra.mxu0 %v3145
        %3198 = vmatprep.subr.mxu0 0.0
        %3199 = vmatpush1.msra.mxu0 %v3144
        %3200 = vmatprep.subr.mxu0 0.0
        %3201 = vmatpush1.msra.mxu0 %v3143
        %3202 = vmatprep.subr.mxu0 0.0
        %3203 = vmatpush1.msra.mxu0 %v3142
        %3204 = vmatprep.subr.mxu0 0.0
        %3205 = vmatpush1.msra.mxu0 %v3141
        %3206 = vmatprep.subr.mxu0 0.0
        %3207 = vmatpush1.msra.mxu0 %v3140
        %3208 = vmatprep.subr.mxu0 0.0
        %3209 = vmatpush2.msra.mxu0 %v3171
        %3210 = vmatprep.subr.mxu0 0.0
        %3211 = vmatpush2.msra.mxu0 %v3170
        %3212 = vmatprep.subr.mxu0 0.0
        %3213 = vmatpush2.msra.mxu0 %v3169
        %3214 = vmatprep.subr.mxu0 0.0
        %3215 = vmatpush2.msra.mxu0 %v3168
        %3216 = vmatprep.subr.mxu0 0.0
        %3217 = vmatpush2.msra.mxu0 %v3167
        %3218 = vmatprep.subr.mxu0 0.0
        %3219 = vmatpush2.msra.mxu0 %v3166
        %3220 = vmatprep.subr.mxu0 0.0
        %3221 = vmatpush2.msra.mxu0 %v3165
        %3222 = vmatprep.subr.mxu0 0.0
        %3223 = vmatpush2.msra.mxu0 %v3164
        %3224 = vmatprep.subr.mxu0 0.0
        %3225 = vmatpush2.msra.mxu0 %v3163
        %3226 = vmatprep.subr.mxu0 0.0
        %3227 = vmatpush2.msra.mxu0 %v3162
        %3228 = vmatprep.subr.mxu0 0.0
        %3229 = vmatpush2.msra.mxu0 %v3161
        %3230 = vmatprep.subr.mxu0 0.0
        %3231 = vmatpush2.msra.mxu0 %v3160
        %3232 = vmatprep.subr.mxu0 0.0
        %3233 = vmatpush2.msra.mxu0 %v3159
        %3234 = vmatprep.subr.mxu0 0.0
        %3235 = vmatpush2.msra.mxu0 %v3158
        %3236 = vmatprep.subr.mxu0 0.0
        %3237 = vmatpush2.msra.mxu0 %v3157
        %3238 = vmatprep.subr.mxu0 0.0
        %3239 = vmatpush2.msra.mxu0 %v3156
        %3240 = vmatprep.mubr.f32.mxu0 %v3173
        %3241 = vmatmul.mubr.f32.gmra.mxu0 %v3172
        %v3242 = vpop.f32.mrf.mxu0
        %v3243 = vadd.f32 0.0, %v3242
        %v3244 = vpop.f32.mrf.mxu0
        %3245 = vdwg.mxu0
        %v3246 = vadd.f32 %v3138, %v3243
        %s3247 = scalar_lea.vmem [#allocation2], 1024
        %v3248 = vld [vmem:[%s3247] sm:$0xff]
        %v3249 = vld [vmem:[%s3247 + $0x8] sm:$0xff]
        %v3250 = vld [vmem:[%s3247 + $0x10] sm:$0xff]
        %v3251 = vld [vmem:[%s3247 + $0x18] sm:$0xff]
        %v3252 = vld [vmem:[%s3247 + $0x20] sm:$0xff]
        %v3253 = vld [vmem:[%s3247 + $0x28] sm:$0xff]
        %v3254 = vld [vmem:[%s3247 + $0x30] sm:$0xff]
        %v3255 = vld [vmem:[%s3247 + $0x38] sm:$0xff]
        %v3256 = vld [vmem:[%s3247 + $0x40] sm:$0xff]
        %v3257 = vld [vmem:[%s3247 + $0x48] sm:$0xff]
        %v3258 = vld [vmem:[%s3247 + $0x50] sm:$0xff]
        %v3259 = vld [vmem:[%s3247 + $0x58] sm:$0xff]
        %v3260 = vld [vmem:[%s3247 + $0x60] sm:$0xff]
        %v3261 = vld [vmem:[%s3247 + $0x68] sm:$0xff]
        %v3262 = vld [vmem:[%s3247 + $0x70] sm:$0xff]
        %v3263 = vld [vmem:[%s3247 + $0x78] sm:$0xff]
        %v3264 = vld [vmem:[%s3247 + $0x80] sm:$0xff]
        %v3265 = vld [vmem:[%s3247 + $0x88] sm:$0xff]
        %v3266 = vld [vmem:[%s3247 + $0x90] sm:$0xff]
        %v3267 = vld [vmem:[%s3247 + $0x98] sm:$0xff]
        %v3268 = vld [vmem:[%s3247 + $0xa0] sm:$0xff]
        %v3269 = vld [vmem:[%s3247 + $0xa8] sm:$0xff]
        %v3270 = vld [vmem:[%s3247 + $0xb0] sm:$0xff]
        %v3271 = vld [vmem:[%s3247 + $0xb8] sm:$0xff]
        %v3272 = vld [vmem:[%s3247 + $0xc0] sm:$0xff]
        %v3273 = vld [vmem:[%s3247 + $0xc8] sm:$0xff]
        %v3274 = vld [vmem:[%s3247 + $0xd0] sm:$0xff]
        %v3275 = vld [vmem:[%s3247 + $0xd8] sm:$0xff]
        %v3276 = vld [vmem:[%s3247 + $0xe0] sm:$0xff]
        %v3277 = vld [vmem:[%s3247 + $0xe8] sm:$0xff]
        %v3278 = vld [vmem:[%s3247 + $0xf0] sm:$0xff]
        %v3279 = vld [vmem:[%s3247 + $0xf8] sm:$0xff]
        %v3280 = vrot.slane %v2815, 4
        %v3281 = vrot.slane %v2816, 4
        %3284 = vmatprep.subr.mxu0 0.0
        %3285 = vmatpush1.msra.mxu0 %v3263
        %3286 = vmatprep.subr.mxu0 0.0
        %3287 = vmatpush1.msra.mxu0 %v3262
        %3288 = vmatprep.subr.mxu0 0.0
        %3289 = vmatpush1.msra.mxu0 %v3261
        %3290 = vmatprep.subr.mxu0 0.0
        %3291 = vmatpush1.msra.mxu0 %v3260
        %3292 = vmatprep.subr.mxu0 0.0
        %3293 = vmatpush1.msra.mxu0 %v3259
        %3294 = vmatprep.subr.mxu0 0.0
        %3295 = vmatpush1.msra.mxu0 %v3258
        %3296 = vmatprep.subr.mxu0 0.0
        %3297 = vmatpush1.msra.mxu0 %v3257
        %3298 = vmatprep.subr.mxu0 0.0
        %3299 = vmatpush1.msra.mxu0 %v3256
        %3300 = vmatprep.subr.mxu0 0.0
        %3301 = vmatpush1.msra.mxu0 %v3255
        %3302 = vmatprep.subr.mxu0 0.0
        %3303 = vmatpush1.msra.mxu0 %v3254
        %3304 = vmatprep.subr.mxu0 0.0
        %3305 = vmatpush1.msra.mxu0 %v3253
        %3306 = vmatprep.subr.mxu0 0.0
        %3307 = vmatpush1.msra.mxu0 %v3252
        %3308 = vmatprep.subr.mxu0 0.0
        %3309 = vmatpush1.msra.mxu0 %v3251
        %3310 = vmatprep.subr.mxu0 0.0
        %3311 = vmatpush1.msra.mxu0 %v3250
        %3312 = vmatprep.subr.mxu0 0.0
        %3313 = vmatpush1.msra.mxu0 %v3249
        %3314 = vmatprep.subr.mxu0 0.0
        %3315 = vmatpush1.msra.mxu0 %v3248
        %3316 = vmatprep.subr.mxu0 0.0
        %3317 = vmatpush2.msra.mxu0 %v3279
        %3318 = vmatprep.subr.mxu0 0.0
        %3319 = vmatpush2.msra.mxu0 %v3278
        %3320 = vmatprep.subr.mxu0 0.0
        %3321 = vmatpush2.msra.mxu0 %v3277
        %3322 = vmatprep.subr.mxu0 0.0
        %3323 = vmatpush2.msra.mxu0 %v3276
        %3324 = vmatprep.subr.mxu0 0.0
        %3325 = vmatpush2.msra.mxu0 %v3275
        %3326 = vmatprep.subr.mxu0 0.0
        %3327 = vmatpush2.msra.mxu0 %v3274
        %3328 = vmatprep.subr.mxu0 0.0
        %3329 = vmatpush2.msra.mxu0 %v3273
        %3330 = vmatprep.subr.mxu0 0.0
        %3331 = vmatpush2.msra.mxu0 %v3272
        %3332 = vmatprep.subr.mxu0 0.0
        %3333 = vmatpush2.msra.mxu0 %v3271
        %3334 = vmatprep.subr.mxu0 0.0
        %3335 = vmatpush2.msra.mxu0 %v3270
        %3336 = vmatprep.subr.mxu0 0.0
        %3337 = vmatpush2.msra.mxu0 %v3269
        %3338 = vmatprep.subr.mxu0 0.0
        %3339 = vmatpush2.msra.mxu0 %v3268
        %3340 = vmatprep.subr.mxu0 0.0
        %3341 = vmatpush2.msra.mxu0 %v3267
        %3342 = vmatprep.subr.mxu0 0.0
        %3343 = vmatpush2.msra.mxu0 %v3266
        %3344 = vmatprep.subr.mxu0 0.0
        %3345 = vmatpush2.msra.mxu0 %v3265
        %3346 = vmatprep.subr.mxu0 0.0
        %3347 = vmatpush2.msra.mxu0 %v3264
        %3348 = vmatprep.mubr.f32.mxu0 %v3281
        %3349 = vmatmul.mubr.f32.gmra.mxu0 %v3280
        %v3350 = vpop.f32.mrf.mxu0
        %v3351 = vadd.f32 0.0, %v3350
        %v3352 = vpop.f32.mrf.mxu0
        %3353 = vdwg.mxu0
        %v3354 = vadd.f32 %v3246, %v3351
        %s3355 = scalar_lea.vmem [#allocation2], 1280
        %v3356 = vld [vmem:[%s3355] sm:$0xff]
        %v3357 = vld [vmem:[%s3355 + $0x8] sm:$0xff]
        %v3358 = vld [vmem:[%s3355 + $0x10] sm:$0xff]
        %v3359 = vld [vmem:[%s3355 + $0x18] sm:$0xff]
        %v3360 = vld [vmem:[%s3355 + $0x20] sm:$0xff]
        %v3361 = vld [vmem:[%s3355 + $0x28] sm:$0xff]
        %v3362 = vld [vmem:[%s3355 + $0x30] sm:$0xff]
        %v3363 = vld [vmem:[%s3355 + $0x38] sm:$0xff]
        %v3364 = vld [vmem:[%s3355 + $0x40] sm:$0xff]
        %v3365 = vld [vmem:[%s3355 + $0x48] sm:$0xff]
        %v3366 = vld [vmem:[%s3355 + $0x50] sm:$0xff]
        %v3367 = vld [vmem:[%s3355 + $0x58] sm:$0xff]
        %v3368 = vld [vmem:[%s3355 + $0x60] sm:$0xff]
        %v3369 = vld [vmem:[%s3355 + $0x68] sm:$0xff]
        %v3370 = vld [vmem:[%s3355 + $0x70] sm:$0xff]
        %v3371 = vld [vmem:[%s3355 + $0x78] sm:$0xff]
        %v3372 = vld [vmem:[%s3355 + $0x80] sm:$0xff]
        %v3373 = vld [vmem:[%s3355 + $0x88] sm:$0xff]
        %v3374 = vld [vmem:[%s3355 + $0x90] sm:$0xff]
        %v3375 = vld [vmem:[%s3355 + $0x98] sm:$0xff]
        %v3376 = vld [vmem:[%s3355 + $0xa0] sm:$0xff]
        %v3377 = vld [vmem:[%s3355 + $0xa8] sm:$0xff]
        %v3378 = vld [vmem:[%s3355 + $0xb0] sm:$0xff]
        %v3379 = vld [vmem:[%s3355 + $0xb8] sm:$0xff]
        %v3380 = vld [vmem:[%s3355 + $0xc0] sm:$0xff]
        %v3381 = vld [vmem:[%s3355 + $0xc8] sm:$0xff]
        %v3382 = vld [vmem:[%s3355 + $0xd0] sm:$0xff]
        %v3383 = vld [vmem:[%s3355 + $0xd8] sm:$0xff]
        %v3384 = vld [vmem:[%s3355 + $0xe0] sm:$0xff]
        %v3385 = vld [vmem:[%s3355 + $0xe8] sm:$0xff]
        %v3386 = vld [vmem:[%s3355 + $0xf0] sm:$0xff]
        %v3387 = vld [vmem:[%s3355 + $0xf8] sm:$0xff]
        %v3388 = vrot.slane %v2815, 5
        %v3389 = vrot.slane %v2816, 5
        %3392 = vmatprep.subr.mxu0 0.0
        %3393 = vmatpush1.msra.mxu0 %v3371
        %3394 = vmatprep.subr.mxu0 0.0
        %3395 = vmatpush1.msra.mxu0 %v3370
        %3396 = vmatprep.subr.mxu0 0.0
        %3397 = vmatpush1.msra.mxu0 %v3369
        %3398 = vmatprep.subr.mxu0 0.0
        %3399 = vmatpush1.msra.mxu0 %v3368
        %3400 = vmatprep.subr.mxu0 0.0
        %3401 = vmatpush1.msra.mxu0 %v3367
        %3402 = vmatprep.subr.mxu0 0.0
        %3403 = vmatpush1.msra.mxu0 %v3366
        %3404 = vmatprep.subr.mxu0 0.0
        %3405 = vmatpush1.msra.mxu0 %v3365
        %3406 = vmatprep.subr.mxu0 0.0
        %3407 = vmatpush1.msra.mxu0 %v3364
        %3408 = vmatprep.subr.mxu0 0.0
        %3409 = vmatpush1.msra.mxu0 %v3363
        %3410 = vmatprep.subr.mxu0 0.0
        %3411 = vmatpush1.msra.mxu0 %v3362
        %3412 = vmatprep.subr.mxu0 0.0
        %3413 = vmatpush1.msra.mxu0 %v3361
        %3414 = vmatprep.subr.mxu0 0.0
        %3415 = vmatpush1.msra.mxu0 %v3360
        %3416 = vmatprep.subr.mxu0 0.0
        %3417 = vmatpush1.msra.mxu0 %v3359
        %3418 = vmatprep.subr.mxu0 0.0
        %3419 = vmatpush1.msra.mxu0 %v3358
        %3420 = vmatprep.subr.mxu0 0.0
        %3421 = vmatpush1.msra.mxu0 %v3357
        %3422 = vmatprep.subr.mxu0 0.0
        %3423 = vmatpush1.msra.mxu0 %v3356
        %3424 = vmatprep.subr.mxu0 0.0
        %3425 = vmatpush2.msra.mxu0 %v3387
        %3426 = vmatprep.subr.mxu0 0.0
        %3427 = vmatpush2.msra.mxu0 %v3386
        %3428 = vmatprep.subr.mxu0 0.0
        %3429 = vmatpush2.msra.mxu0 %v3385
        %3430 = vmatprep.subr.mxu0 0.0
        %3431 = vmatpush2.msra.mxu0 %v3384
        %3432 = vmatprep.subr.mxu0 0.0
        %3433 = vmatpush2.msra.mxu0 %v3383
        %3434 = vmatprep.subr.mxu0 0.0
        %3435 = vmatpush2.msra.mxu0 %v3382
        %3436 = vmatprep.subr.mxu0 0.0
        %3437 = vmatpush2.msra.mxu0 %v3381
        %3438 = vmatprep.subr.mxu0 0.0
        %3439 = vmatpush2.msra.mxu0 %v3380
        %3440 = vmatprep.subr.mxu0 0.0
        %3441 = vmatpush2.msra.mxu0 %v3379
        %3442 = vmatprep.subr.mxu0 0.0
        %3443 = vmatpush2.msra.mxu0 %v3378
        %3444 = vmatprep.subr.mxu0 0.0
        %3445 = vmatpush2.msra.mxu0 %v3377
        %3446 = vmatprep.subr.mxu0 0.0
        %3447 = vmatpush2.msra.mxu0 %v3376
        %3448 = vmatprep.subr.mxu0 0.0
        %3449 = vmatpush2.msra.mxu0 %v3375
        %3450 = vmatprep.subr.mxu0 0.0
        %3451 = vmatpush2.msra.mxu0 %v3374
        %3452 = vmatprep.subr.mxu0 0.0
        %3453 = vmatpush2.msra.mxu0 %v3373
        %3454 = vmatprep.subr.mxu0 0.0
        %3455 = vmatpush2.msra.mxu0 %v3372
        %3456 = vmatprep.mubr.f32.mxu0 %v3389
        %3457 = vmatmul.mubr.f32.gmra.mxu0 %v3388
        %v3458 = vpop.f32.mrf.mxu0
        %v3459 = vadd.f32 0.0, %v3458
        %v3460 = vpop.f32.mrf.mxu0
        %3461 = vdwg.mxu0
        %v3462 = vadd.f32 %v3354, %v3459
        %s3463 = scalar_lea.vmem [#allocation2], 1536
        %v3464 = vld [vmem:[%s3463] sm:$0xff]
        %v3465 = vld [vmem:[%s3463 + $0x8] sm:$0xff]
        %v3466 = vld [vmem:[%s3463 + $0x10] sm:$0xff]
        %v3467 = vld [vmem:[%s3463 + $0x18] sm:$0xff]
        %v3468 = vld [vmem:[%s3463 + $0x20] sm:$0xff]
        %v3469 = vld [vmem:[%s3463 + $0x28] sm:$0xff]
        %v3470 = vld [vmem:[%s3463 + $0x30] sm:$0xff]
        %v3471 = vld [vmem:[%s3463 + $0x38] sm:$0xff]
        %v3472 = vld [vmem:[%s3463 + $0x40] sm:$0xff]
        %v3473 = vld [vmem:[%s3463 + $0x48] sm:$0xff]
        %v3474 = vld [vmem:[%s3463 + $0x50] sm:$0xff]
        %v3475 = vld [vmem:[%s3463 + $0x58] sm:$0xff]
        %v3476 = vld [vmem:[%s3463 + $0x60] sm:$0xff]
        %v3477 = vld [vmem:[%s3463 + $0x68] sm:$0xff]
        %v3478 = vld [vmem:[%s3463 + $0x70] sm:$0xff]
        %v3479 = vld [vmem:[%s3463 + $0x78] sm:$0xff]
        %v3480 = vld [vmem:[%s3463 + $0x80] sm:$0xff]
        %v3481 = vld [vmem:[%s3463 + $0x88] sm:$0xff]
        %v3482 = vld [vmem:[%s3463 + $0x90] sm:$0xff]
        %v3483 = vld [vmem:[%s3463 + $0x98] sm:$0xff]
        %v3484 = vld [vmem:[%s3463 + $0xa0] sm:$0xff]
        %v3485 = vld [vmem:[%s3463 + $0xa8] sm:$0xff]
        %v3486 = vld [vmem:[%s3463 + $0xb0] sm:$0xff]
        %v3487 = vld [vmem:[%s3463 + $0xb8] sm:$0xff]
        %v3488 = vld [vmem:[%s3463 + $0xc0] sm:$0xff]
        %v3489 = vld [vmem:[%s3463 + $0xc8] sm:$0xff]
        %v3490 = vld [vmem:[%s3463 + $0xd0] sm:$0xff]
        %v3491 = vld [vmem:[%s3463 + $0xd8] sm:$0xff]
        %v3492 = vld [vmem:[%s3463 + $0xe0] sm:$0xff]
        %v3493 = vld [vmem:[%s3463 + $0xe8] sm:$0xff]
        %v3494 = vld [vmem:[%s3463 + $0xf0] sm:$0xff]
        %v3495 = vld [vmem:[%s3463 + $0xf8] sm:$0xff]
        %v3496 = vrot.slane %v2815, 6
        %v3497 = vrot.slane %v2816, 6
        %3500 = vmatprep.subr.mxu0 0.0
        %3501 = vmatpush1.msra.mxu0 %v3479
        %3502 = vmatprep.subr.mxu0 0.0
        %3503 = vmatpush1.msra.mxu0 %v3478
        %3504 = vmatprep.subr.mxu0 0.0
        %3505 = vmatpush1.msra.mxu0 %v3477
        %3506 = vmatprep.subr.mxu0 0.0
        %3507 = vmatpush1.msra.mxu0 %v3476
        %3508 = vmatprep.subr.mxu0 0.0
        %3509 = vmatpush1.msra.mxu0 %v3475
        %3510 = vmatprep.subr.mxu0 0.0
        %3511 = vmatpush1.msra.mxu0 %v3474
        %3512 = vmatprep.subr.mxu0 0.0
        %3513 = vmatpush1.msra.mxu0 %v3473
        %3514 = vmatprep.subr.mxu0 0.0
        %3515 = vmatpush1.msra.mxu0 %v3472
        %3516 = vmatprep.subr.mxu0 0.0
        %3517 = vmatpush1.msra.mxu0 %v3471
        %3518 = vmatprep.subr.mxu0 0.0
        %3519 = vmatpush1.msra.mxu0 %v3470
        %3520 = vmatprep.subr.mxu0 0.0
        %3521 = vmatpush1.msra.mxu0 %v3469
        %3522 = vmatprep.subr.mxu0 0.0
        %3523 = vmatpush1.msra.mxu0 %v3468
        %3524 = vmatprep.subr.mxu0 0.0
        %3525 = vmatpush1.msra.mxu0 %v3467
        %3526 = vmatprep.subr.mxu0 0.0
        %3527 = vmatpush1.msra.mxu0 %v3466
        %3528 = vmatprep.subr.mxu0 0.0
        %3529 = vmatpush1.msra.mxu0 %v3465
        %3530 = vmatprep.subr.mxu0 0.0
        %3531 = vmatpush1.msra.mxu0 %v3464
        %3532 = vmatprep.subr.mxu0 0.0
        %3533 = vmatpush2.msra.mxu0 %v3495
        %3534 = vmatprep.subr.mxu0 0.0
        %3535 = vmatpush2.msra.mxu0 %v3494
        %3536 = vmatprep.subr.mxu0 0.0
        %3537 = vmatpush2.msra.mxu0 %v3493
        %3538 = vmatprep.subr.mxu0 0.0
        %3539 = vmatpush2.msra.mxu0 %v3492
        %3540 = vmatprep.subr.mxu0 0.0
        %3541 = vmatpush2.msra.mxu0 %v3491
        %3542 = vmatprep.subr.mxu0 0.0
        %3543 = vmatpush2.msra.mxu0 %v3490
        %3544 = vmatprep.subr.mxu0 0.0
        %3545 = vmatpush2.msra.mxu0 %v3489
        %3546 = vmatprep.subr.mxu0 0.0
        %3547 = vmatpush2.msra.mxu0 %v3488
        %3548 = vmatprep.subr.mxu0 0.0
        %3549 = vmatpush2.msra.mxu0 %v3487
        %3550 = vmatprep.subr.mxu0 0.0
        %3551 = vmatpush2.msra.mxu0 %v3486
        %3552 = vmatprep.subr.mxu0 0.0
        %3553 = vmatpush2.msra.mxu0 %v3485
        %3554 = vmatprep.subr.mxu0 0.0
        %3555 = vmatpush2.msra.mxu0 %v3484
        %3556 = vmatprep.subr.mxu0 0.0
        %3557 = vmatpush2.msra.mxu0 %v3483
        %3558 = vmatprep.subr.mxu0 0.0
        %3559 = vmatpush2.msra.mxu0 %v3482
        %3560 = vmatprep.subr.mxu0 0.0
        %3561 = vmatpush2.msra.mxu0 %v3481
        %3562 = vmatprep.subr.mxu0 0.0
        %3563 = vmatpush2.msra.mxu0 %v3480
        %3564 = vmatprep.mubr.f32.mxu0 %v3497
        %3565 = vmatmul.mubr.f32.gmra.mxu0 %v3496
        %v3566 = vpop.f32.mrf.mxu0
        %v3567 = vadd.f32 0.0, %v3566
        %v3568 = vpop.f32.mrf.mxu0
        %3569 = vdwg.mxu0
        %v3570 = vadd.f32 %v3462, %v3567
        %s3571 = scalar_lea.vmem [#allocation2], 1792
        %v3572 = vld [vmem:[%s3571] sm:$0xff]
        %v3573 = vld [vmem:[%s3571 + $0x8] sm:$0xff]
        %v3574 = vld [vmem:[%s3571 + $0x10] sm:$0xff]
        %v3575 = vld [vmem:[%s3571 + $0x18] sm:$0xff]
        %v3576 = vld [vmem:[%s3571 + $0x20] sm:$0xff]
        %v3577 = vld [vmem:[%s3571 + $0x28] sm:$0xff]
        %v3578 = vld [vmem:[%s3571 + $0x30] sm:$0xff]
        %v3579 = vld [vmem:[%s3571 + $0x38] sm:$0xff]
        %v3580 = vld [vmem:[%s3571 + $0x40] sm:$0xff]
        %v3581 = vld [vmem:[%s3571 + $0x48] sm:$0xff]
        %v3582 = vld [vmem:[%s3571 + $0x50] sm:$0xff]
        %v3583 = vld [vmem:[%s3571 + $0x58] sm:$0xff]
        %v3584 = vld [vmem:[%s3571 + $0x60] sm:$0xff]
        %v3585 = vld [vmem:[%s3571 + $0x68] sm:$0xff]
        %v3586 = vld [vmem:[%s3571 + $0x70] sm:$0xff]
        %v3587 = vld [vmem:[%s3571 + $0x78] sm:$0xff]
        %v3588 = vld [vmem:[%s3571 + $0x80] sm:$0xff]
        %v3589 = vld [vmem:[%s3571 + $0x88] sm:$0xff]
        %v3590 = vld [vmem:[%s3571 + $0x90] sm:$0xff]
        %v3591 = vld [vmem:[%s3571 + $0x98] sm:$0xff]
        %v3592 = vld [vmem:[%s3571 + $0xa0] sm:$0xff]
        %v3593 = vld [vmem:[%s3571 + $0xa8] sm:$0xff]
        %v3594 = vld [vmem:[%s3571 + $0xb0] sm:$0xff]
        %v3595 = vld [vmem:[%s3571 + $0xb8] sm:$0xff]
        %v3596 = vld [vmem:[%s3571 + $0xc0] sm:$0xff]
        %v3597 = vld [vmem:[%s3571 + $0xc8] sm:$0xff]
        %v3598 = vld [vmem:[%s3571 + $0xd0] sm:$0xff]
        %v3599 = vld [vmem:[%s3571 + $0xd8] sm:$0xff]
        %v3600 = vld [vmem:[%s3571 + $0xe0] sm:$0xff]
        %v3601 = vld [vmem:[%s3571 + $0xe8] sm:$0xff]
        %v3602 = vld [vmem:[%s3571 + $0xf0] sm:$0xff]
        %v3603 = vld [vmem:[%s3571 + $0xf8] sm:$0xff]
        %v3604 = vrot.slane %v2815, 7
        %v3605 = vrot.slane %v2816, 7
        %3608 = vmatprep.subr.mxu0 0.0
        %3609 = vmatpush1.msra.mxu0 %v3587
        %3610 = vmatprep.subr.mxu0 0.0
        %3611 = vmatpush1.msra.mxu0 %v3586
        %3612 = vmatprep.subr.mxu0 0.0
        %3613 = vmatpush1.msra.mxu0 %v3585
        %3614 = vmatprep.subr.mxu0 0.0
        %3615 = vmatpush1.msra.mxu0 %v3584
        %3616 = vmatprep.subr.mxu0 0.0
        %3617 = vmatpush1.msra.mxu0 %v3583
        %3618 = vmatprep.subr.mxu0 0.0
        %3619 = vmatpush1.msra.mxu0 %v3582
        %3620 = vmatprep.subr.mxu0 0.0
        %3621 = vmatpush1.msra.mxu0 %v3581
        %3622 = vmatprep.subr.mxu0 0.0
        %3623 = vmatpush1.msra.mxu0 %v3580
        %3624 = vmatprep.subr.mxu0 0.0
        %3625 = vmatpush1.msra.mxu0 %v3579
        %3626 = vmatprep.subr.mxu0 0.0
        %3627 = vmatpush1.msra.mxu0 %v3578
        %3628 = vmatprep.subr.mxu0 0.0
        %3629 = vmatpush1.msra.mxu0 %v3577
        %3630 = vmatprep.subr.mxu0 0.0
        %3631 = vmatpush1.msra.mxu0 %v3576
        %3632 = vmatprep.subr.mxu0 0.0
        %3633 = vmatpush1.msra.mxu0 %v3575
        %3634 = vmatprep.subr.mxu0 0.0
        %3635 = vmatpush1.msra.mxu0 %v3574
        %3636 = vmatprep.subr.mxu0 0.0
        %3637 = vmatpush1.msra.mxu0 %v3573
        %3638 = vmatprep.subr.mxu0 0.0
        %3639 = vmatpush1.msra.mxu0 %v3572
        %3640 = vmatprep.subr.mxu0 0.0
        %3641 = vmatpush2.msra.mxu0 %v3603
        %3642 = vmatprep.subr.mxu0 0.0
        %3643 = vmatpush2.msra.mxu0 %v3602
        %3644 = vmatprep.subr.mxu0 0.0
        %3645 = vmatpush2.msra.mxu0 %v3601
        %3646 = vmatprep.subr.mxu0 0.0
        %3647 = vmatpush2.msra.mxu0 %v3600
        %3648 = vmatprep.subr.mxu0 0.0
        %3649 = vmatpush2.msra.mxu0 %v3599
        %3650 = vmatprep.subr.mxu0 0.0
        %3651 = vmatpush2.msra.mxu0 %v3598
        %3652 = vmatprep.subr.mxu0 0.0
        %3653 = vmatpush2.msra.mxu0 %v3597
        %3654 = vmatprep.subr.mxu0 0.0
        %3655 = vmatpush2.msra.mxu0 %v3596
        %3656 = vmatprep.subr.mxu0 0.0
        %3657 = vmatpush2.msra.mxu0 %v3595
        %3658 = vmatprep.subr.mxu0 0.0
        %3659 = vmatpush2.msra.mxu0 %v3594
        %3660 = vmatprep.subr.mxu0 0.0
        %3661 = vmatpush2.msra.mxu0 %v3593
        %3662 = vmatprep.subr.mxu0 0.0
        %3663 = vmatpush2.msra.mxu0 %v3592
        %3664 = vmatprep.subr.mxu0 0.0
        %3665 = vmatpush2.msra.mxu0 %v3591
        %3666 = vmatprep.subr.mxu0 0.0
        %3667 = vmatpush2.msra.mxu0 %v3590
        %3668 = vmatprep.subr.mxu0 0.0
        %3669 = vmatpush2.msra.mxu0 %v3589
        %3670 = vmatprep.subr.mxu0 0.0
        %3671 = vmatpush2.msra.mxu0 %v3588
        %3672 = vmatprep.mubr.f32.mxu0 %v3605
        %3673 = vmatmul.mubr.f32.gmra.mxu0 %v3604
        %v3674 = vpop.f32.mrf.mxu0
        %v3675 = vadd.f32 0.0, %v3674
        %v3676 = vpop.f32.mrf.mxu0
        %3677 = vdwg.mxu0
        %v3678 = vadd.f32 %v3570, %v3675
        %vm3679 = vcmask 73728
        %3680 = vst.msk [vmem:[%s487] sm:$0x1] %vm3679, %v3678
        %s3681 = sand.u32 %s337, 1
        %s3682 = scalar_lea.sflag [#allocation4], %s3681
        %s3683 = sand.u32 %s337, 1
        %s3684 = scalar_lea.vmem [#allocation7], %s3683
        // Predicated region
        $region85: #{_lambda_.1} parent=75 // pred_check
          %p3685 = pneg %p347
        $region86: #{_lambda_.1} parent=75 // pred_check_branch
          %3687 = sbr.rel (%p3685) target = $region88
        $region87: #{_lambda_.1} parent=75 // pred_region
          %s3689 = ssub.s32 16, 16
          %3690 = vsyncadd %s3682, %s3689
          %s3691 = smul.addr %s30, 16
          %s3692 = scalar_lea.hbm %s14, %s3691
          %s3694 = sshll.u32 %s3684, 4
          %s3695 = int_to_ptr.vmem [resolvable:$true] %s3694
          %3697 = dma.vmem_to_hbm [thread:$0]  %s3695, 16, %s3692, %s3682
        $region88: #{_lambda_.1} parent=75 // pred_fallthru
          _
      $region76: #{_lambda_.1} parent=5 // pred_fallthru
        _
      %p3698 = scmp.le.s32.totalorder 2, %s25
      // Predicated region
      $region89: #{_lambda_.1} parent=5 // pred_check
        %p3699 = pneg %p3698
      $region90: #{_lambda_.1} parent=5 // pred_check_branch
        %3701 = sbr.rel (%p3699) target = $region92
      $region91: #{_lambda_.1} parent=5 // pred_region
        %s3702 = ssub.s32 %s25, 2
        // Predicated region
        $region93: #{_lambda_.1} parent=91 // pred_check
          %p3703 = pneg %p353
        $region94: #{_lambda_.1} parent=91 // pred_check_branch
          %3705 = sbr.rel (%p3703) target = $region96
        $region95: #{_lambda_.1} parent=91 // pred_region
          %s3706 = sand.u32 %s338, 1
          %s3707 = scalar_lea.sflag [#allocation4], %s3706
          %s3708 = sand.u32 %s338, 1
          %s3709 = scalar_lea.vmem [#allocation7], %s3708
          %3710 = dma.done %s3707, 16
        $region96: #{_lambda_.1} parent=91 // pred_fallthru
          _
      $region92: #{_lambda_.1} parent=5 // pred_fallthru
        _
    $region6: #{_lambda_.1} parent=1 // loop_footer
      %s29 = sadd.s32 1, %s25
    $region7: #{_lambda_.1} parent=1 // loop_footer_branch
      %24 = sbr.rel target = $region3
    $region8: #{_lambda_.1} parent=1 // loop_exit
      _
    %3711 = vsyncpa [#allocation3], 1
    %s3712 = scalar_lea.sflag [#allocation3], 1
    %3713 = vsyncpa %s3712, 1
    %3714 = vsyncpa [#allocation6], 1
    %3715 = vsyncpa [#allocation4], 1
    %s3716 = scalar_lea.sflag [#allocation4], 1
    %3717 = vsyncpa %s3716, 1

</llo_original>
